<compile_context>
chip_gen: v7x
topology: tpu7x:2x2x1
jax: 0.10.0
libtpu: 0.0.40
codegen_flags: <defaults>
</compile_context>

<pallas_src>
import functools

import jax
import jax.numpy as jnp
from jax.experimental import pallas as pl
from jax.experimental.pallas import tpu as pltpu

_BN_EPS = 1e-5
_G = 8     # zeroed head rows of every pool-staging buffer
_OFF = 8   # zeroed head rows of every conv-input ("pad") buffer (>= conv pad)


def _round_up(x, m):
    return -(-x // m) * m


# ----------------------------------------------------------------------------
# Static shape bookkeeping
# ----------------------------------------------------------------------------
def _branch_dims(cfg, L_in):
    """Per-block (K, stride, pad, L_in, L_conv, L_pool, C_in, C_out) + flatten dim F."""
    blocks_cfg = [
        (cfg['kernel_size'], cfg['stride'], cfg['kernel_size'] // 2,
         cfg['input_channels'], 32),
        (8, 1, 4, 32, 64),
        (8, 1, 4, 64, cfg['final_out_channels']),
    ]
    dims = []
    L = L_in
    for (K, stride, pad, C_in, C_out) in blocks_cfg:
        L_pad = L + 2 * pad
        L_conv = (L_pad - K) // stride + 1
        L_pool = L_conv // 2 + 1            # MaxPool1d(kernel=2, stride=2, padding=1)
        dims.append((K, stride, pad, L, L_conv, L_pool, C_in, C_out))
        L = L_pool
    F = dims[-1][5] * dims[-1][7]           # L_pool3 * C_out3
    return tuple(dims), F


def _row_stride(dims):
    """Common per-batch row stride R (= block-3 pooled rows).  Blocks 3/2/1 use
    R/2R/4R pooled rows and 2R/4R/8R conv rows, so every pooled block feeds the
    next conv's pad buffer with one aligned dense store and the zero tails act
    as conv padding (needs Rq >= L_pool + next_pad)."""
    d1, d2, d3 = dims
    Lc1, Lp1, Lp2, Lp3 = d1[4], d1[5], d2[5], d3[5]
    R = max(Lp3,
            -(-(Lp2 + d3[2]) // 2),
            -(-(Lp1 + d2[2]) // 4),
            -(-Lc1 // 8), 1)
    return _round_up(R, 8)


# ----------------------------------------------------------------------------
# Fused kernel: 3x(Conv1d + folded BN + ReLU + MaxPool) + projector
# ----------------------------------------------------------------------------
def _tfc_kernel(patch1_ref, m1_ref, m2_ref, m3_ref,
                w1_ref, b1_ref, w2_ref, b2_ref, w3_ref, b3_ref,
                pw1_ref, pc1_ref, pw2_ref, pb2_ref,
                p3_ref, z_ref,
                patch2_ref, patch3_ref, pad2_ref, pad3_ref,
                st1_ref, st2_ref, st3_ref,
                *, Bt, dims, R, C3p):
    d1, d2, d3 = dims
    Co1 = d1[7]
    K2, pd2, Ci2, Co2 = d2[0], d2[2], d2[6], d2[7]
    K3, pd3, Lp3, Ci3 = d3[0], d3[2], d3[5], d3[6]
    Rq3, Rq2, Rq1 = R, 2 * R, 4 * R
    Rc3, Rc2, Rc1 = 2 * R, 4 * R, 8 * R
    H1 = pc1_ref.shape[-1]

    def conv_pool(patch_ref, w_ref, b_ref, m_ref, stage_ref, Rc, Rq, Co):
        """Conv1d(bias=False) + folded-BN bias + ReLU as one MXU matmul on the
        im2col patch, then MaxPool1d(2,2,padding=1) via two stride-2 sublane
        reads off a staging buffer.  The 0/1 row mask zeroes row-rounding
        garbage so pooled rows >= L_pool are exactly zero (reused as the next
        conv's zero padding).  Zero pool padding == PyTorch's -inf padding here
        because pooling happens strictly after ReLU (values >= 0)."""
        y = jnp.dot(patch_ref[...], w_ref[...],
                    preferred_element_type=jnp.float32)
        y = jnp.maximum(y + b_ref[...], 0.0) * m_ref[...]
        stage_ref[pl.ds(0, _G), :] = jnp.zeros((_G, Co), jnp.float32)
        stage_ref[pl.ds(_G, Bt * Rc), :] = y               # aligned dense store
        lo = stage_ref[pl.ds(_G - 1, Bt * Rq, 2), :]       # pool member 2*i-1
        hi = stage_ref[pl.ds(_G, Bt * Rq, 2), :]           # pool member 2*i
        return jnp.maximum(lo, hi)                         # (Bt*Rq, Co)

    def to_pad(pooled, pad_ref, Rq, Ci):
        """Single aligned dense store of the pooled block: its zero tails are
        the trailing conv padding AND the next batch element's leading padding;
        the zeroed head rows pad batch element 0."""
        pad_ref[pl.ds(0, _OFF), :] = jnp.zeros((_OFF, Ci), jnp.float32)
        pad_ref[pl.ds(_OFF, Bt * Rq), :] = pooled

    def im2col(pad_ref, patch_ref, K, Ci, pad, Rcn):
        """K whole-buffer shifted copies (full-height, row-aligned stores)
        instead of B*K per-(batch, tap) masked stores."""
        for k in range(K):
            patch_ref[pl.ds(0, Bt * Rcn), pl.ds(k * Ci, Ci)] = (
                pad_ref[pl.ds(_OFF - pad + k, Bt * Rcn), :]
                .astype(patch_ref.dtype))

    # ---- conv block 1 (im2col patch pre-built by the wrapper) ---------------
    pooled1 = conv_pool(patch1_ref, w1_ref, b1_ref, m1_ref, st1_ref,
                        Rc1, Rq1, Co1)
    # ---- conv block 2 --------------------------------------------------------
    to_pad(pooled1, pad2_ref, Rq1, Ci2)
    im2col(pad2_ref, patch2_ref, K2, Ci2, pd2, Rc2)
    pooled2 = conv_pool(patch2_ref, w2_ref, b2_ref, m2_ref, st2_ref,
                        Rc2, Rq2, Co2)
    # ---- conv block 3 --------------------------------------------------------
    to_pad(pooled2, pad3_ref, Rq2, Ci3)
    im2col(pad3_ref, patch3_ref, K3, Ci3, pd3, Rc3)
    pooled3 = conv_pool(patch3_ref, w3_ref, b3_ref, m3_ref, st3_ref,
                        Rc3, Rq3, C3p)

    # Pooled block-3 activations in natural (position, channel) layout, lane
    # dim padded to 128.  PyTorch's channel-major flatten for h is pure layout
    # plumbing and is done by XLA in the wrapper.
    p3_ref[...] = pooled3

    # ---- projector: Linear(+folded BN) -> ReLU -> Linear ---------------------
    # pw1 is host-regrouped per position l, so the contraction runs directly
    # on the natural layout (no permutation matmul, no one-hot scatter loop).
    t = jnp.zeros((Bt, H1), jnp.float32)
    for l in range(Lp3):
        rows = p3_ref[pl.ds(l, Bt, Rq3), :].astype(jnp.bfloat16)
        t = t + jnp.dot(rows, pw1_ref[l], preferred_element_type=jnp.float32)
    t = jnp.maximum(t + pc1_ref[...], 0.0)
    z_ref[...] = (jnp.dot(t.astype(jnp.bfloat16), pw2_ref[...],
                          preferred_element_type=jnp.float32) + pb2_ref[...])


# ----------------------------------------------------------------------------
# Forward-pass wrapper (single pallas_call for both branches)
# ----------------------------------------------------------------------------
def make_tfc_forward(cfg, batch_tile=None, vmem_budget_bytes=24 << 20):
    @jax.jit
    def fwd(params, x_in_t, x_in_f):
        B, C0, L_in = x_in_t.shape
        dims, F = _branch_dims(cfg, L_in)
        d1, d2, d3 = dims
        K1, s1, pd1 = d1[0], d1[1], d1[2]
        Lc1, Co1 = d1[4], d1[7]
        Lc2, Ci2, Co2 = d2[4], d2[6], d2[7]
        Lc3, Lp3, Ci3, C3 = d3[4], d3[5], d3[6], d3[7]
        if F != cfg['CNNoutput_channel'] * cfg['final_out_channels']:
            raise ValueError("cfg['CNNoutput_channel'] inconsistent with input length")
        if params['pw1'].shape[1] != F:
            raise ValueError("projector input dim mismatch")
        H1 = params['pw1'].shape[-1]
        H2 = params['pw2'].shape[-1]
        assert d2[2] <= _OFF and d3[2] <= _OFF

        C3p = _round_up(C3, 128) if C3 <= 128 else _round_up(C3, 8)
        R = _row_stride(dims)
        Rq3, Rq2, Rq1 = R, 2 * R, 4 * R
        Rc3, Rc2, Rc1 = 2 * R, 4 * R, 8 * R
        K1C0 = K1 * C0

        # ---- VMEM estimate per grid step and batch-tile selection -----------
        def vmem_need(bt):
            scratch = (2 * bt * (Rc2 * 8 * Ci2 + Rc3 * 8 * Ci3)              # bf16 patches
                       + 4 * ((2 * _OFF + bt * Rq1) * Ci2
                              + (2 * _OFF + bt * Rq2) * Ci3)                 # f32 pad bufs
                       + 4 * ((_G + bt * Rc1) * Co1 + (_G + bt * Rc2) * Co2
                              + (_G + bt * Rc3) * C3p))                      # f32 staging
            io = (2 * bt * Rc1 * K1C0                                        # patch1 block
                  + 4 * bt * (Rc1 + Rc2 + Rc3)                               # row masks
                  + 4 * bt * (Rq3 * C3p + H2))                               # outputs
            wts = (2 * (K1C0 * Co1 + 8 * Ci2 * Co2 + 8 * Ci3 * C3p
                        + Lp3 * C3p * H1 + H1 * H2)
                   + 4 * (Co1 + Co2 + C3p + H1 + H2))
            return scratch + 2 * (io + wts)                                  # double buffers

        if batch_tile is not None:
            if B % batch_tile or (batch_tile != B and batch_tile % 8):
                raise ValueError("batch_tile must divide B and be a multiple of 8 (or == B)")
            Bt = batch_tile
        else:
            cands = [d for d in range(1, B + 1)
                     if B % d == 0 and (d == B or d % 8 == 0)]
            fit = [d for d in cands if vmem_need(d) <= vmem_budget_bytes]
            Bt = max(fit) if fit else min(cands)
        nbt = B // Bt
        vmem_limit = int(min(128 << 20,
                             max(32 << 20, 1.25 * vmem_need(Bt) + (2 << 20))))

        bf = jnp.bfloat16

        # ---- host-side weight prep (BN already folded; cast to bf16) --------
        w1 = params['w1'].astype(bf)
        w2 = params['w2'].astype(bf)
        w3 = jnp.pad(params['w3'], ((0, 0), (0, 0), (0, C3p - C3))).astype(bf)
        b1, b2 = params['b1'], params['b2']
        b3 = jnp.pad(params['b3'], ((0, 0), (0, 0), (0, C3p - C3)))
        # Fold PyTorch's channel-major flatten into pw1: regroup rows c*Lp3+l
        # into a per-position stack (2, Lp3, C3p, H1).
        pw1s = jnp.pad(
            jnp.transpose(params['pw1'].reshape(2, C3, Lp3, H1), (0, 2, 1, 3)),
            ((0, 0), (0, 0), (0, C3p - C3), (0, 0))).astype(bf)
        pc1, pb2 = params['pc1'], params['pb2']
        pw2 = params['pw2'].astype(bf)

        # ---- block-1 im2col built by XLA (layout plumbing / gather only) ----
        def build_patch1(x_ncw):
            x = jnp.transpose(x_ncw, (0, 2, 1)).astype(jnp.float32)   # (B, L, C0)
            xp = jnp.pad(x, ((0, 0), (pd1, pd1), (0, 0)))
            cols = jnp.concatenate(
                [xp[:, k:k + s1 * (Lc1 - 1) + 1:s1, :] for k in range(K1)], axis=-1)
            cols = jnp.pad(cols, ((0, 0), (0, Rc1 - Lc1), (0, 0)))
            return cols.reshape(B * Rc1, K1C0)
        patch1 = jnp.stack([build_patch1(x_in_t), build_patch1(x_in_f)]).astype(bf)

        # Row-validity masks (batch-tile invariant): zero rounding-garbage conv
        # rows so pooled tails are exact zeros (reused as conv padding).
        def row_mask(Rc, Lc):
            return (jnp.arange(Bt * Rc) % Rc < Lc).astype(jnp.float32)[:, None]
        m1, m2, m3 = row_mask(Rc1, Lc1), row_mask(Rc2, Lc2), row_mask(Rc3, Lc3)

        def wspec(shape):
            nd = len(shape)
            return pl.BlockSpec((None,) + tuple(shape),
                                lambda br, bt: (br,) + (0,) * nd)

        in_specs = [
            pl.BlockSpec((None, Bt * Rc1, K1C0), lambda br, bt: (br, bt, 0)),
            pl.BlockSpec((Bt * Rc1, 1), lambda br, bt: (0, 0)),
            pl.BlockSpec((Bt * Rc2, 1), lambda br, bt: (0, 0)),
            pl.BlockSpec((Bt * Rc3, 1), lambda br, bt: (0, 0)),
            wspec(w1.shape[1:]), wspec(b1.shape[1:]),
            wspec(w2.shape[1:]), wspec(b2.shape[1:]),
            wspec(w3.shape[1:]), wspec(b3.shape[1:]),
            wspec(pw1s.shape[1:]), wspec(pc1.shape[1:]),
            wspec(pw2.shape[1:]), wspec(pb2.shape[1:]),
        ]
        out_specs = (
            pl.BlockSpec((None, Bt * Rq3, C3p), lambda br, bt: (br, bt, 0)),
            pl.BlockSpec((None, Bt, H2), lambda br, bt: (br, bt, 0)),
        )
        out_shape = (jax.ShapeDtypeStruct((2, B * Rq3, C3p), jnp.float32),
                     jax.ShapeDtypeStruct((2, B, H2), jnp.float32))
        scratch = [
            pltpu.VMEM((Bt * Rc2, 8 * Ci2), bf),                     # patch2 (im2col)
            pltpu.VMEM((Bt * Rc3, 8 * Ci3), bf),                     # patch3 (im2col)
            pltpu.VMEM((2 * _OFF + Bt * Rq1, Ci2), jnp.float32),     # pad2 (conv-2 input)
            pltpu.VMEM((2 * _OFF + Bt * Rq2, Ci3), jnp.float32),     # pad3 (conv-3 input)
            pltpu.VMEM((_G + Bt * Rc1, Co1), jnp.float32),           # pool staging 1
            pltpu.VMEM((_G + Bt * Rc2, Co2), jnp.float32),           # pool staging 2
            pltpu.VMEM((_G + Bt * Rc3, C3p), jnp.float32),           # pool staging 3
        ]

        flops = int(2 * 2 * B * (Rc1 * K1C0 * Co1 + Rc2 * 8 * Ci2 * Co2
                                 + Rc3 * 8 * Ci3 * C3p
                                 + Lp3 * C3p * H1 + H1 * H2))
        bytes_acc = int(patch1.size * 2 + (m1.size + m2.size + m3.size) * 4
                        + (w1.size + w2.size + w3.size + pw1s.size + pw2.size) * 2
                        + (b1.size + b2.size + b3.size + pc1.size + pb2.size) * 4
                        + (2 * B * Rq3 * C3p + 2 * B * H2) * 4)

        kern = functools.partial(_tfc_kernel, Bt=Bt, dims=dims, R=R, C3p=C3p)
        p3, z = pl.pallas_call(
            kern,
            out_shape=out_shape,
            grid=(2, nbt),                                # (branch, batch tile)
            in_specs=in_specs,
            out_specs=out_specs,
            scratch_shapes=scratch,
            compiler_params=pltpu.CompilerParams(
                dimension_semantics=("parallel", "parallel"),
                vmem_limit_bytes=vmem_limit),
            cost_estimate=pl.CostEstimate(flops=flops, transcendentals=0,
                                          bytes_accessed=bytes_acc),
        )(patch1, m1, m2, m3, w1, b1, w2, b2, w3, b3, pw1s, pc1, pw2, pb2)

        # PyTorch channel-major flatten of the (B, C3, Lp3) activation --
        # pure layout plumbing on the lane-dense kernel output.
        h = jnp.transpose(p3.reshape(2, B, Rq3, C3p)[:, :, :Lp3, :C3],
                          (0, 1, 3, 2)).reshape(2, B, F)
        return h[0], z[0], h[1], z[1]

    return fwd


# ----------------------------------------------------------------------------
# Parameter construction (deterministic synthetic weights; BN folded, eval mode)
# ----------------------------------------------------------------------------
def _init_conv_block_params(key, c_in, c_out, K):
    kw, kg, kb, km, kv = jax.random.split(key, 5)
    w = jax.random.normal(kw, (K, c_in, c_out), jnp.float32) * 0.1   # w[k,c,o]=W_pt[o,c,k]
    gamma = 1.0 + 0.1 * jax.random.normal(kg, (c_out,), jnp.float32)
    beta = 0.1 * jax.random.normal(kb, (c_out,), jnp.float32)
    mean = 0.1 * jax.random.normal(km, (c_out,), jnp.float32)
    var = jax.random.uniform(kv, (c_out,), jnp.float32, 0.5, 1.5)
    scale = gamma * jax.lax.rsqrt(var + _BN_EPS)
    bias = beta - mean * scale
    w_folded = (w * scale[None, None, :]).reshape(K * c_in, c_out)   # BN scale folded in
    return w_folded, bias[None, :]


def _init_projector_params(key, f_in, h1=256, h2=128):
    k1, kb1, kg, kb, km, kv, k2, kb2 = jax.random.split(key, 8)
    w1 = jax.random.normal(k1, (f_in, h1), jnp.float32) * 0.05
    b1 = 0.05 * jax.random.normal(kb1, (h1,), jnp.float32)
    gamma = 1.0 + 0.1 * jax.random.normal(kg, (h1,), jnp.float32)
    beta = 0.1 * jax.random.normal(kb, (h1,), jnp.float32)
    mean = 0.1 * jax.random.normal(km, (h1,), jnp.float32)
    var = jax.random.uniform(kv, (h1,), jnp.float32, 0.5, 1.5)
    s = gamma * jax.lax.rsqrt(var + _BN_EPS)
    c = beta - mean * s
    w1_eff = w1 * s[None, :]                 # Linear + BN scale folded together
    c1_eff = (b1 * s + c)[None, :]           # Linear bias + BN shift folded together
    w2 = jax.random.normal(k2, (h1, h2), jnp.float32) * 0.05
    b2 = (0.05 * jax.random.normal(kb2, (h2,), jnp.float32))[None, :]
    return w1_eff, c1_eff, w2, b2


def init_tfc_params(key, cfg):
    def branch(k):
        k1, k2, k3, kp = jax.random.split(k, 4)
        w1, b1 = _init_conv_block_params(k1, cfg['input_channels'], 32, cfg['kernel_size'])
        w2, b2 = _init_conv_block_params(k2, 32, 64, 8)
        w3, b3 = _init_conv_block_params(k3, 64, cfg['final_out_channels'], 8)
        pw1, pc1, pw2, pb2 = _init_projector_params(
            kp, cfg['CNNoutput_channel'] * cfg['final_out_channels'])
        return dict(w1=w1, b1=b1, w2=w2, b2=b2, w3=w3, b3=b3,
                    pw1=pw1, pc1=pc1, pw2=pw2, pb2=pb2)

    kt, kf = jax.random.split(key)
    pt, pf = branch(kt), branch(kf)
    return {name: jnp.stack([pt[name], pf[name]]) for name in pt}


# ----------------------------------------------------------------------------
# Pure-JAX reference (same folded params, bf16 matmul operands / f32 accum)
# ----------------------------------------------------------------------------
def _tfc_reference(params, cfg, x_in_t, x_in_f):
    B, _, L_in = x_in_t.shape
    dims, _ = _branch_dims(cfg, L_in)
    bf = jnp.bfloat16

    def branch(br, x_ncw):
        x = jnp.transpose(x_ncw, (0, 2, 1)).astype(jnp.float32)      # (B, L, C)
        for i, (K, stride, pad, Li, Lc, Lp, Ci, Co) in enumerate(dims):
            w = params['w%d' % (i + 1)][br].astype(bf)
            bias = params['b%d' % (i + 1)][br]
            xp = jnp.pad(x, ((0, 0), (pad, pad), (0, 0)))
            cols = jnp.concatenate(
                [xp[:, k:k + stride * (Lc - 1) + 1:stride, :] for k in range(K)],
                axis=-1)
            y = jnp.dot(cols.reshape(B * Lc, K * Ci).astype(bf), w,
                        preferred_element_type=jnp.float32).reshape(B, Lc, Co)
            y = jnp.maximum(y + bias, 0.0)
            ypad = jnp.pad(y, ((0, 0), (1, 2 * Lp - 1 - Lc), (0, 0)))
            x = jnp.maximum(ypad[:, 0::2, :], ypad[:, 1::2, :])       # (B, Lp, Co)
        h = jnp.transpose(x, (0, 2, 1)).reshape(B, -1)
        t = jnp.maximum(
            jnp.dot(h.astype(bf), params['pw1'][br].astype(bf),
                    preferred_element_type=jnp.float32) + params['pc1'][br], 0.0)
        z = jnp.dot(t.astype(bf), params['pw2'][br].astype(bf),
                    preferred_element_type=jnp.float32) + params['pb2'][br]
        return h, z

    h_t, z_t = branch(0, x_in_t)
    h_f, z_f = branch(1, x_in_f)
    return h_t, z_t, h_f, z_f


if __name__ == "__main__":
    # Small config consistent with the module's shape constraints:
    # L=16 -> pool lengths 9 -> 6 -> 4, so CNNoutput_channel=4 and flatten dim = 64.
    cfg = dict(input_channels=4, kernel_size=8, stride=1, dropout=0.35,
               final_out_channels=16, CNNoutput_channel=4)

    key = jax.random.PRNGKey(0)
    kp, kt, kf = jax.random.split(key, 3)
    params = init_tfc_params(kp, cfg)

    B, L = 2, 16
    x_in_t = jax.random.normal(kt, (B, cfg['input_channels'], L), jnp.float32)
    x_in_f = jax.random.normal(kf, (B, cfg['input_channels'], L), jnp.float32)

    fwd = make_tfc_forward(cfg)
    h_time, z_time, h_freq, z_freq = fwd(params, x_in_t, x_in_f)
    jax.block_until_ready((h_time, z_time, h_freq, z_freq))

    assert h_time.shape == (B, 64) and z_time.shape == (B, 128)
    assert h_freq.shape == (B, 64) and z_freq.shape == (B, 128)

    # Correctness check: reference uses the same bf16-operand / f32-accum
    # numerics as the kernel, so the tolerance can stay fairly tight.
    refs = _tfc_reference(params, cfg, x_in_t, x_in_f)
    for got, ref in zip((h_time, z_time, h_freq, z_freq), refs):
        assert jnp.allclose(got, ref, rtol=1e-2, atol=1e-2), \
            float(jnp.max(jnp.abs(got - ref)))

    print("KERNEL_OK")
</pallas_src>

<mosaic_0001>
module attributes {stable_mosaic.version = 11 : i64} {
  func.func @_tfc_kernel(%arg0: i32, %arg1: i32, %arg2: memref<1x128x32xbf16, #tpu.memory_space<vmem>>, %arg3: memref<128x1xf32, #tpu.memory_space<vmem>>, %arg4: memref<64x1xf32, #tpu.memory_space<vmem>>, %arg5: memref<32x1xf32, #tpu.memory_space<vmem>>, %arg6: memref<1x32x32xbf16, #tpu.memory_space<vmem>>, %arg7: memref<1x1x32xf32, #tpu.memory_space<vmem>>, %arg8: memref<1x256x64xbf16, #tpu.memory_space<vmem>>, %arg9: memref<1x1x64xf32, #tpu.memory_space<vmem>>, %arg10: memref<1x512x128xbf16, #tpu.memory_space<vmem>>, %arg11: memref<1x1x128xf32, #tpu.memory_space<vmem>>, %arg12: memref<1x4x128x256xbf16, #tpu.memory_space<vmem>>, %arg13: memref<1x1x256xf32, #tpu.memory_space<vmem>>, %arg14: memref<1x256x128xbf16, #tpu.memory_space<vmem>>, %arg15: memref<1x1x128xf32, #tpu.memory_space<vmem>>, %arg16: memref<1x16x128xf32, #tpu.memory_space<vmem>>, %arg17: memref<1x2x128xf32, #tpu.memory_space<vmem>>, %arg18: memref<64x256xbf16, #tpu.memory_space<vmem>>, %arg19: memref<32x512xbf16, #tpu.memory_space<vmem>>, %arg20: memref<80x32xf32, #tpu.memory_space<vmem>>, %arg21: memref<48x64xf32, #tpu.memory_space<vmem>>, %arg22: memref<136x32xf32, #tpu.memory_space<vmem>>, %arg23: memref<72x64xf32, #tpu.memory_space<vmem>>, %arg24: memref<40x128xf32, #tpu.memory_space<vmem>>) attributes {dimension_semantics = [#tpu.dimension_semantics<parallel>, #tpu.dimension_semantics<parallel>], iteration_bounds = array<i64: 2, 1>, scalar_prefetch = 0 : i64, scratch_operands = 7 : i64, tpu.core_type = #tpu.core_type<tc>, window_params = [{transform_indices = @transform_0, window_bounds = array<i64: 1, 128, 32>}, {pipeline_mode = #tpu.pipeline_mode<synchronous>, transform_indices = @transform_1, window_bounds = array<i64: 128, 1>}, {pipeline_mode = #tpu.pipeline_mode<synchronous>, transform_indices = @transform_2, window_bounds = array<i64: 64, 1>}, {pipeline_mode = #tpu.pipeline_mode<synchronous>, transform_indices = @transform_3, window_bounds = array<i64: 32, 1>}, {transform_indices = @transform_4, window_bounds = array<i64: 1, 32, 32>}, {transform_indices = @transform_5, window_bounds = array<i64: 1, 1, 32>}, {transform_indices = @transform_6, window_bounds = array<i64: 1, 256, 64>}, {transform_indices = @transform_7, window_bounds = array<i64: 1, 1, 64>}, {transform_indices = @transform_8, window_bounds = array<i64: 1, 512, 128>}, {transform_indices = @transform_9, window_bounds = array<i64: 1, 1, 128>}, {transform_indices = @transform_10, window_bounds = array<i64: 1, 4, 128, 256>}, {transform_indices = @transform_11, window_bounds = array<i64: 1, 1, 256>}, {transform_indices = @transform_12, window_bounds = array<i64: 1, 256, 128>}, {transform_indices = @transform_13, window_bounds = array<i64: 1, 1, 128>}, {transform_indices = @transform_14, window_bounds = array<i64: 1, 16, 128>}, {transform_indices = @transform_15, window_bounds = array<i64: 1, 2, 128>}]} {
    %c0 = arith.constant 0 : index
    %c0_0 = arith.constant 0 : index
    %c0_1 = arith.constant 0 : index
    %0 = vector.load %arg2[%c0, %c0_0, %c0_1] : memref<1x128x32xbf16, #tpu.memory_space<vmem>>, vector<1x128x32xbf16>
    %1 = vector.shape_cast %0 : vector<1x128x32xbf16> to vector<128x32xbf16>
    %c0_2 = arith.constant 0 : index
    %c0_3 = arith.constant 0 : index
    %c0_4 = arith.constant 0 : index
    %2 = vector.load %arg6[%c0_2, %c0_3, %c0_4] : memref<1x32x32xbf16, #tpu.memory_space<vmem>>, vector<1x32x32xbf16>
    %3 = vector.shape_cast %2 : vector<1x32x32xbf16> to vector<32x32xbf16>
    %cst = arith.constant dense<0.000000e+00> : vector<128x32xf32>
    %4 = tpu.matmul %1, %3, %cst {dimension_numbers = #tpu.dot_dimension_numbers<[1], [0], [0], [1], [0, 0, 1, 1], [], []>} : vector<128x32xbf16>, vector<32x32xbf16>, vector<128x32xf32> -> vector<128x32xf32>
    %c0_5 = arith.constant 0 : index
    %c0_6 = arith.constant 0 : index
    %c0_7 = arith.constant 0 : index
    %5 = vector.load %arg7[%c0_5, %c0_6, %c0_7] : memref<1x1x32xf32, #tpu.memory_space<vmem>>, vector<1x1x32xf32>
    %6 = vector.shape_cast %5 : vector<1x1x32xf32> to vector<1x32xf32>
    %7 = vector.broadcast %6 : vector<1x32xf32> to vector<128x32xf32>
    %8 = arith.addf %4, %7 : vector<128x32xf32>
    %cst_8 = arith.constant 0.000000e+00 : f32
    %9 = vector.broadcast %cst_8 : f32 to vector<128x32xf32>
    %10 = arith.maximumf %8, %9 : vector<128x32xf32>
    %c0_9 = arith.constant 0 : index
    %c0_10 = arith.constant 0 : index
    %11 = vector.load %arg3[%c0_9, %c0_10] : memref<128x1xf32, #tpu.memory_space<vmem>>, vector<128x1xf32>
    %12 = vector.broadcast %11 : vector<128x1xf32> to vector<128x32xf32>
    %13 = arith.mulf %10, %12 : vector<128x32xf32>
    %cst_11 = arith.constant 0.000000e+00 : f32
    %14 = vector.broadcast %cst_11 : f32 to vector<8x32xf32>
    %c0_12 = arith.constant 0 : index
    %c0_13 = arith.constant 0 : index
    %15 = vector.load %arg22[%c0_12, %c0_13] : memref<136x32xf32, #tpu.memory_space<vmem>>, vector<8x32xf32>
    tpu.vector_store %arg22[%c0_12, %c0_13], %14 {strides = array<i32>} : memref<136x32xf32, #tpu.memory_space<vmem>>, vector<8x32xf32>,
    %c8 = arith.constant 8 : index
    %c0_14 = arith.constant 0 : index
    %16 = vector.load %arg22[%c8, %c0_14] : memref<136x32xf32, #tpu.memory_space<vmem>>, vector<128x32xf32>
    tpu.vector_store %arg22[%c8, %c0_14], %13 {strides = array<i32>} : memref<136x32xf32, #tpu.memory_space<vmem>>, vector<128x32xf32>,
    %c7 = arith.constant 7 : index
    %c0_15 = arith.constant 0 : index
    %17 = tpu.strided_load %arg22[%c7, %c0_15] {strides = array<i32: 2, 1>} : memref<136x32xf32, #tpu.memory_space<vmem>>, vector<64x32xf32>
    %c8_16 = arith.constant 8 : index
    %c0_17 = arith.constant 0 : index
    %18 = tpu.strided_load %arg22[%c8_16, %c0_17] {strides = array<i32: 2, 1>} : memref<136x32xf32, #tpu.memory_space<vmem>>, vector<64x32xf32>
    %19 = arith.maximumf %17, %18 : vector<64x32xf32>
    %cst_18 = arith.constant 0.000000e+00 : f32
    %20 = vector.broadcast %cst_18 : f32 to vector<8x32xf32>
    %c0_19 = arith.constant 0 : index
    %c0_20 = arith.constant 0 : index
    %21 = vector.load %arg20[%c0_19, %c0_20] : memref<80x32xf32, #tpu.memory_space<vmem>>, vector<8x32xf32>
    tpu.vector_store %arg20[%c0_19, %c0_20], %20 {strides = array<i32>} : memref<80x32xf32, #tpu.memory_space<vmem>>, vector<8x32xf32>,
    %c8_21 = arith.constant 8 : index
    %c0_22 = arith.constant 0 : index
    %22 = vector.load %arg20[%c8_21, %c0_22] : memref<80x32xf32, #tpu.memory_space<vmem>>, vector<64x32xf32>
    tpu.vector_store %arg20[%c8_21, %c0_22], %19 {strides = array<i32>} : memref<80x32xf32, #tpu.memory_space<vmem>>, vector<64x32xf32>,
    %c4 = arith.constant 4 : index
    %c0_23 = arith.constant 0 : index
    %23 = vector.load %arg20[%c4, %c0_23] : memref<80x32xf32, #tpu.memory_space<vmem>>, vector<64x32xf32>
    %24 = arith.truncf %23 : vector<64x32xf32> to vector<64x32xbf16>
    %c0_24 = arith.constant 0 : index
    %c0_25 = arith.constant 0 : index
    %25 = vector.load %arg18[%c0_24, %c0_25] : memref<64x256xbf16, #tpu.memory_space<vmem>>, vector<64x32xbf16>
    tpu.vector_store %arg18[%c0_24, %c0_25], %24 {strides = array<i32>} : memref<64x256xbf16, #tpu.memory_space<vmem>>, vector<64x32xbf16>,
    %c5 = arith.constant 5 : index
    %c0_26 = arith.constant 0 : index
    %26 = vector.load %arg20[%c5, %c0_26] : memref<80x32xf32, #tpu.memory_space<vmem>>, vector<64x32xf32>
    %27 = arith.truncf %26 : vector<64x32xf32> to vector<64x32xbf16>
    %c0_27 = arith.constant 0 : index
    %c32 = arith.constant 32 : index
    %28 = vector.load %arg18[%c0_27, %c32] : memref<64x256xbf16, #tpu.memory_space<vmem>>, vector<64x32xbf16>
    tpu.vector_store %arg18[%c0_27, %c32], %27 {strides = array<i32>} : memref<64x256xbf16, #tpu.memory_space<vmem>>, vector<64x32xbf16>,
    %c6 = arith.constant 6 : index
    %c0_28 = arith.constant 0 : index
    %29 = vector.load %arg20[%c6, %c0_28] : memref<80x32xf32, #tpu.memory_space<vmem>>, vector<64x32xf32>
    %30 = arith.truncf %29 : vector<64x32xf32> to vector<64x32xbf16>
    %c0_29 = arith.constant 0 : index
    %c64 = arith.constant 64 : index
    %31 = vector.load %arg18[%c0_29, %c64] : memref<64x256xbf16, #tpu.memory_space<vmem>>, vector<64x32xbf16>
    tpu.vector_store %arg18[%c0_29, %c64], %30 {strides = array<i32>} : memref<64x256xbf16, #tpu.memory_space<vmem>>, vector<64x32xbf16>,
    %c7_30 = arith.constant 7 : index
    %c0_31 = arith.constant 0 : index
    %32 = vector.load %arg20[%c7_30, %c0_31] : memref<80x32xf32, #tpu.memory_space<vmem>>, vector<64x32xf32>
    %33 = arith.truncf %32 : vector<64x32xf32> to vector<64x32xbf16>
    %c0_32 = arith.constant 0 : index
    %c96 = arith.constant 96 : index
    %34 = vector.load %arg18[%c0_32, %c96] : memref<64x256xbf16, #tpu.memory_space<vmem>>, vector<64x32xbf16>
    tpu.vector_store %arg18[%c0_32, %c96], %33 {strides = array<i32>} : memref<64x256xbf16, #tpu.memory_space<vmem>>, vector<64x32xbf16>,
    %c8_33 = arith.constant 8 : index
    %c0_34 = arith.constant 0 : index
    %35 = vector.load %arg20[%c8_33, %c0_34] : memref<80x32xf32, #tpu.memory_space<vmem>>, vector<64x32xf32>
    %36 = arith.truncf %35 : vector<64x32xf32> to vector<64x32xbf16>
    %c0_35 = arith.constant 0 : index
    %c128 = arith.constant 128 : index
    %37 = vector.load %arg18[%c0_35, %c128] : memref<64x256xbf16, #tpu.memory_space<vmem>>, vector<64x32xbf16>
    tpu.vector_store %arg18[%c0_35, %c128], %36 {strides = array<i32>} : memref<64x256xbf16, #tpu.memory_space<vmem>>, vector<64x32xbf16>,
    %c9 = arith.constant 9 : index
    %c0_36 = arith.constant 0 : index
    %38 = vector.load %arg20[%c9, %c0_36] : memref<80x32xf32, #tpu.memory_space<vmem>>, vector<64x32xf32>
    %39 = arith.truncf %38 : vector<64x32xf32> to vector<64x32xbf16>
    %c0_37 = arith.constant 0 : index
    %c160 = arith.constant 160 : index
    %40 = vector.load %arg18[%c0_37, %c160] : memref<64x256xbf16, #tpu.memory_space<vmem>>, vector<64x32xbf16>
    tpu.vector_store %arg18[%c0_37, %c160], %39 {strides = array<i32>} : memref<64x256xbf16, #tpu.memory_space<vmem>>, vector<64x32xbf16>,
    %c10 = arith.constant 10 : index
    %c0_38 = arith.constant 0 : index
    %41 = vector.load %arg20[%c10, %c0_38] : memref<80x32xf32, #tpu.memory_space<vmem>>, vector<64x32xf32>
    %42 = arith.truncf %41 : vector<64x32xf32> to vector<64x32xbf16>
    %c0_39 = arith.constant 0 : index
    %c192 = arith.constant 192 : index
    %43 = vector.load %arg18[%c0_39, %c192] : memref<64x256xbf16, #tpu.memory_space<vmem>>, vector<64x32xbf16>
    tpu.vector_store %arg18[%c0_39, %c192], %42 {strides = array<i32>} : memref<64x256xbf16, #tpu.memory_space<vmem>>, vector<64x32xbf16>,
    %c11 = arith.constant 11 : index
    %c0_40 = arith.constant 0 : index
    %44 = vector.load %arg20[%c11, %c0_40] : memref<80x32xf32, #tpu.memory_space<vmem>>, vector<64x32xf32>
    %45 = arith.truncf %44 : vector<64x32xf32> to vector<64x32xbf16>
    %c0_41 = arith.constant 0 : index
    %c224 = arith.constant 224 : index
    %46 = vector.load %arg18[%c0_41, %c224] : memref<64x256xbf16, #tpu.memory_space<vmem>>, vector<64x32xbf16>
    tpu.vector_store %arg18[%c0_41, %c224], %45 {strides = array<i32>} : memref<64x256xbf16, #tpu.memory_space<vmem>>, vector<64x32xbf16>,
    %c0_42 = arith.constant 0 : index
    %c0_43 = arith.constant 0 : index
    %47 = vector.load %arg18[%c0_42, %c0_43] : memref<64x256xbf16, #tpu.memory_space<vmem>>, vector<64x256xbf16>
    %c0_44 = arith.constant 0 : index
    %c0_45 = arith.constant 0 : index
    %c0_46 = arith.constant 0 : index
    %48 = vector.load %arg8[%c0_44, %c0_45, %c0_46] : memref<1x256x64xbf16, #tpu.memory_space<vmem>>, vector<1x256x64xbf16>
    %49 = vector.shape_cast %48 : vector<1x256x64xbf16> to vector<256x64xbf16>
    %cst_47 = arith.constant dense<0.000000e+00> : vector<64x64xf32>
    %50 = tpu.matmul %47, %49, %cst_47 {dimension_numbers = #tpu.dot_dimension_numbers<[1], [0], [0], [1], [0, 0, 1, 1], [], []>} : vector<64x256xbf16>, vector<256x64xbf16>, vector<64x64xf32> -> vector<64x64xf32>
    %c0_48 = arith.constant 0 : index
    %c0_49 = arith.constant 0 : index
    %c0_50 = arith.constant 0 : index
    %51 = vector.load %arg9[%c0_48, %c0_49, %c0_50] : memref<1x1x64xf32, #tpu.memory_space<vmem>>, vector<1x1x64xf32>
    %52 = vector.shape_cast %51 : vector<1x1x64xf32> to vector<1x64xf32>
    %53 = vector.broadcast %52 : vector<1x64xf32> to vector<64x64xf32>
    %54 = arith.addf %50, %53 : vector<64x64xf32>
    %cst_51 = arith.constant 0.000000e+00 : f32
    %55 = vector.broadcast %cst_51 : f32 to vector<64x64xf32>
    %56 = arith.maximumf %54, %55 : vector<64x64xf32>
    %c0_52 = arith.constant 0 : index
    %c0_53 = arith.constant 0 : index
    %57 = vector.load %arg4[%c0_52, %c0_53] : memref<64x1xf32, #tpu.memory_space<vmem>>, vector<64x1xf32>
    %58 = vector.broadcast %57 : vector<64x1xf32> to vector<64x64xf32>
    %59 = arith.mulf %56, %58 : vector<64x64xf32>
    %cst_54 = arith.constant 0.000000e+00 : f32
    %60 = vector.broadcast %cst_54 : f32 to vector<8x64xf32>
    %c0_55 = arith.constant 0 : index
    %c0_56 = arith.constant 0 : index
    %61 = vector.load %arg23[%c0_55, %c0_56] : memref<72x64xf32, #tpu.memory_space<vmem>>, vector<8x64xf32>
    tpu.vector_store %arg23[%c0_55, %c0_56], %60 {strides = array<i32>} : memref<72x64xf32, #tpu.memory_space<vmem>>, vector<8x64xf32>,
    %c8_57 = arith.constant 8 : index
    %c0_58 = arith.constant 0 : index
    %62 = vector.load %arg23[%c8_57, %c0_58] : memref<72x64xf32, #tpu.memory_space<vmem>>, vector<64x64xf32>
    tpu.vector_store %arg23[%c8_57, %c0_58], %59 {strides = array<i32>} : memref<72x64xf32, #tpu.memory_space<vmem>>, vector<64x64xf32>,
    %c7_59 = arith.constant 7 : index
    %c0_60 = arith.constant 0 : index
    %63 = tpu.strided_load %arg23[%c7_59, %c0_60] {strides = array<i32: 2, 1>} : memref<72x64xf32, #tpu.memory_space<vmem>>, vector<32x64xf32>
    %c8_61 = arith.constant 8 : index
    %c0_62 = arith.constant 0 : index
    %64 = tpu.strided_load %arg23[%c8_61, %c0_62] {strides = array<i32: 2, 1>} : memref<72x64xf32, #tpu.memory_space<vmem>>, vector<32x64xf32>
    %65 = arith.maximumf %63, %64 : vector<32x64xf32>
    %cst_63 = arith.constant 0.000000e+00 : f32
    %66 = vector.broadcast %cst_63 : f32 to vector<8x64xf32>
    %c0_64 = arith.constant 0 : index
    %c0_65 = arith.constant 0 : index
    %67 = vector.load %arg21[%c0_64, %c0_65] : memref<48x64xf32, #tpu.memory_space<vmem>>, vector<8x64xf32>
    tpu.vector_store %arg21[%c0_64, %c0_65], %66 {strides = array<i32>} : memref<48x64xf32, #tpu.memory_space<vmem>>, vector<8x64xf32>,
    %c8_66 = arith.constant 8 : index
    %c0_67 = arith.constant 0 : index
    %68 = vector.load %arg21[%c8_66, %c0_67] : memref<48x64xf32, #tpu.memory_space<vmem>>, vector<32x64xf32>
    tpu.vector_store %arg21[%c8_66, %c0_67], %65 {strides = array<i32>} : memref<48x64xf32, #tpu.memory_space<vmem>>, vector<32x64xf32>,
    %c4_68 = arith.constant 4 : index
    %c0_69 = arith.constant 0 : index
    %69 = vector.load %arg21[%c4_68, %c0_69] : memref<48x64xf32, #tpu.memory_space<vmem>>, vector<32x64xf32>
    %70 = arith.truncf %69 : vector<32x64xf32> to vector<32x64xbf16>
    %c0_70 = arith.constant 0 : index
    %c0_71 = arith.constant 0 : index
    %71 = vector.load %arg19[%c0_70, %c0_71] : memref<32x512xbf16, #tpu.memory_space<vmem>>, vector<32x64xbf16>
    tpu.vector_store %arg19[%c0_70, %c0_71], %70 {strides = array<i32>} : memref<32x512xbf16, #tpu.memory_space<vmem>>, vector<32x64xbf16>,
    %c5_72 = arith.constant 5 : index
    %c0_73 = arith.constant 0 : index
    %72 = vector.load %arg21[%c5_72, %c0_73] : memref<48x64xf32, #tpu.memory_space<vmem>>, vector<32x64xf32>
    %73 = arith.truncf %72 : vector<32x64xf32> to vector<32x64xbf16>
    %c0_74 = arith.constant 0 : index
    %c64_75 = arith.constant 64 : index
    %74 = vector.load %arg19[%c0_74, %c64_75] : memref<32x512xbf16, #tpu.memory_space<vmem>>, vector<32x64xbf16>
    tpu.vector_store %arg19[%c0_74, %c64_75], %73 {strides = array<i32>} : memref<32x512xbf16, #tpu.memory_space<vmem>>, vector<32x64xbf16>,
    %c6_76 = arith.constant 6 : index
    %c0_77 = arith.constant 0 : index
    %75 = vector.load %arg21[%c6_76, %c0_77] : memref<48x64xf32, #tpu.memory_space<vmem>>, vector<32x64xf32>
    %76 = arith.truncf %75 : vector<32x64xf32> to vector<32x64xbf16>
    %c0_78 = arith.constant 0 : index
    %c128_79 = arith.constant 128 : index
    %77 = vector.load %arg19[%c0_78, %c128_79] : memref<32x512xbf16, #tpu.memory_space<vmem>>, vector<32x64xbf16>
    tpu.vector_store %arg19[%c0_78, %c128_79], %76 {strides = array<i32>} : memref<32x512xbf16, #tpu.memory_space<vmem>>, vector<32x64xbf16>,
    %c7_80 = arith.constant 7 : index
    %c0_81 = arith.constant 0 : index
    %78 = vector.load %arg21[%c7_80, %c0_81] : memref<48x64xf32, #tpu.memory_space<vmem>>, vector<32x64xf32>
    %79 = arith.truncf %78 : vector<32x64xf32> to vector<32x64xbf16>
    %c0_82 = arith.constant 0 : index
    %c192_83 = arith.constant 192 : index
    %80 = vector.load %arg19[%c0_82, %c192_83] : memref<32x512xbf16, #tpu.memory_space<vmem>>, vector<32x64xbf16>
    tpu.vector_store %arg19[%c0_82, %c192_83], %79 {strides = array<i32>} : memref<32x512xbf16, #tpu.memory_space<vmem>>, vector<32x64xbf16>,
    %c8_84 = arith.constant 8 : index
    %c0_85 = arith.constant 0 : index
    %81 = vector.load %arg21[%c8_84, %c0_85] : memref<48x64xf32, #tpu.memory_space<vmem>>, vector<32x64xf32>
    %82 = arith.truncf %81 : vector<32x64xf32> to vector<32x64xbf16>
    %c0_86 = arith.constant 0 : index
    %c256 = arith.constant 256 : index
    %83 = vector.load %arg19[%c0_86, %c256] : memref<32x512xbf16, #tpu.memory_space<vmem>>, vector<32x64xbf16>
    tpu.vector_store %arg19[%c0_86, %c256], %82 {strides = array<i32>} : memref<32x512xbf16, #tpu.memory_space<vmem>>, vector<32x64xbf16>,
    %c9_87 = arith.constant 9 : index
    %c0_88 = arith.constant 0 : index
    %84 = vector.load %arg21[%c9_87, %c0_88] : memref<48x64xf32, #tpu.memory_space<vmem>>, vector<32x64xf32>
    %85 = arith.truncf %84 : vector<32x64xf32> to vector<32x64xbf16>
    %c0_89 = arith.constant 0 : index
    %c320 = arith.constant 320 : index
    %86 = vector.load %arg19[%c0_89, %c320] : memref<32x512xbf16, #tpu.memory_space<vmem>>, vector<32x64xbf16>
    tpu.vector_store %arg19[%c0_89, %c320], %85 {strides = array<i32>} : memref<32x512xbf16, #tpu.memory_space<vmem>>, vector<32x64xbf16>,
    %c10_90 = arith.constant 10 : index
    %c0_91 = arith.constant 0 : index
    %87 = vector.load %arg21[%c10_90, %c0_91] : memref<48x64xf32, #tpu.memory_space<vmem>>, vector<32x64xf32>
    %88 = arith.truncf %87 : vector<32x64xf32> to vector<32x64xbf16>
    %c0_92 = arith.constant 0 : index
    %c384 = arith.constant 384 : index
    %89 = vector.load %arg19[%c0_92, %c384] : memref<32x512xbf16, #tpu.memory_space<vmem>>, vector<32x64xbf16>
    tpu.vector_store %arg19[%c0_92, %c384], %88 {strides = array<i32>} : memref<32x512xbf16, #tpu.memory_space<vmem>>, vector<32x64xbf16>,
    %c11_93 = arith.constant 11 : index
    %c0_94 = arith.constant 0 : index
    %90 = vector.load %arg21[%c11_93, %c0_94] : memref<48x64xf32, #tpu.memory_space<vmem>>, vector<32x64xf32>
    %91 = arith.truncf %90 : vector<32x64xf32> to vector<32x64xbf16>
    %c0_95 = arith.constant 0 : index
    %c448 = arith.constant 448 : index
    %92 = vector.load %arg19[%c0_95, %c448] : memref<32x512xbf16, #tpu.memory_space<vmem>>, vector<32x64xbf16>
    tpu.vector_store %arg19[%c0_95, %c448], %91 {strides = array<i32>} : memref<32x512xbf16, #tpu.memory_space<vmem>>, vector<32x64xbf16>,
    %c0_96 = arith.constant 0 : index
    %c0_97 = arith.constant 0 : index
    %93 = vector.load %arg19[%c0_96, %c0_97] : memref<32x512xbf16, #tpu.memory_space<vmem>>, vector<32x512xbf16>
    %c0_98 = arith.constant 0 : index
    %c0_99 = arith.constant 0 : index
    %c0_100 = arith.constant 0 : index
    %94 = vector.load %arg10[%c0_98, %c0_99, %c0_100] : memref<1x512x128xbf16, #tpu.memory_space<vmem>>, vector<1x512x128xbf16>
    %95 = vector.shape_cast %94 : vector<1x512x128xbf16> to vector<512x128xbf16>
    %cst_101 = arith.constant dense<0.000000e+00> : vector<32x128xf32>
    %96 = tpu.matmul %93, %95, %cst_101 {dimension_numbers = #tpu.dot_dimension_numbers<[1], [0], [0], [1], [0, 0, 1, 1], [], []>} : vector<32x512xbf16>, vector<512x128xbf16>, vector<32x128xf32> -> vector<32x128xf32>
    %c0_102 = arith.constant 0 : index
    %c0_103 = arith.constant 0 : index
    %c0_104 = arith.constant 0 : index
    %97 = vector.load %arg11[%c0_102, %c0_103, %c0_104] : memref<1x1x128xf32, #tpu.memory_space<vmem>>, vector<1x1x128xf32>
    %98 = vector.shape_cast %97 : vector<1x1x128xf32> to vector<1x128xf32>
    %99 = vector.broadcast %98 : vector<1x128xf32> to vector<32x128xf32>
    %100 = arith.addf %96, %99 : vector<32x128xf32>
    %cst_105 = arith.constant 0.000000e+00 : f32
    %101 = vector.broadcast %cst_105 : f32 to vector<32x128xf32>
    %102 = arith.maximumf %100, %101 : vector<32x128xf32>
    %c0_106 = arith.constant 0 : index
    %c0_107 = arith.constant 0 : index
    %103 = vector.load %arg5[%c0_106, %c0_107] : memref<32x1xf32, #tpu.memory_space<vmem>>, vector<32x1xf32>
    %104 = vector.broadcast %103 : vector<32x1xf32> to vector<32x128xf32>
    %105 = arith.mulf %102, %104 : vector<32x128xf32>
    %cst_108 = arith.constant 0.000000e+00 : f32
    %106 = vector.broadcast %cst_108 : f32 to vector<8x128xf32>
    %c0_109 = arith.constant 0 : index
    %c0_110 = arith.constant 0 : index
    %107 = vector.load %arg24[%c0_109, %c0_110] : memref<40x128xf32, #tpu.memory_space<vmem>>, vector<8x128xf32>
    tpu.vector_store %arg24[%c0_109, %c0_110], %106 {strides = array<i32>} : memref<40x128xf32, #tpu.memory_space<vmem>>, vector<8x128xf32>,
    %c8_111 = arith.constant 8 : index
    %c0_112 = arith.constant 0 : index
    %108 = vector.load %arg24[%c8_111, %c0_112] : memref<40x128xf32, #tpu.memory_space<vmem>>, vector<32x128xf32>
    tpu.vector_store %arg24[%c8_111, %c0_112], %105 {strides = array<i32>} : memref<40x128xf32, #tpu.memory_space<vmem>>, vector<32x128xf32>,
    %c7_113 = arith.constant 7 : index
    %c0_114 = arith.constant 0 : index
    %109 = tpu.strided_load %arg24[%c7_113, %c0_114] {strides = array<i32: 2, 1>} : memref<40x128xf32, #tpu.memory_space<vmem>>, vector<16x128xf32>
    %c8_115 = arith.constant 8 : index
    %c0_116 = arith.constant 0 : index
    %110 = tpu.strided_load %arg24[%c8_115, %c0_116] {strides = array<i32: 2, 1>} : memref<40x128xf32, #tpu.memory_space<vmem>>, vector<16x128xf32>
    %111 = arith.maximumf %109, %110 : vector<16x128xf32>
    %c0_117 = arith.constant 0 : index
    %c0_118 = arith.constant 0 : index
    %c0_119 = arith.constant 0 : index
    %112 = vector.load %arg16[%c0_117, %c0_118, %c0_119] : memref<1x16x128xf32, #tpu.memory_space<vmem>>, vector<1x16x128xf32>
    %113 = vector.shape_cast %112 : vector<1x16x128xf32> to vector<16x128xf32>
    %114 = vector.shape_cast %111 : vector<16x128xf32> to vector<1x16x128xf32>
    tpu.vector_store %arg16[%c0_117, %c0_118, %c0_119], %114 {strides = array<i32>} : memref<1x16x128xf32, #tpu.memory_space<vmem>>, vector<1x16x128xf32>,
    %cst_120 = arith.constant 0.000000e+00 : f32
    %115 = vector.broadcast %cst_120 : f32 to vector<2x256xf32>
    %c0_121 = arith.constant 0 : index
    %c0_122 = arith.constant 0 : index
    %c0_123 = arith.constant 0 : index
    %116 = tpu.strided_load %arg16[%c0_121, %c0_122, %c0_123] {strides = array<i32: 1, 8, 1>} : memref<1x16x128xf32, #tpu.memory_space<vmem>>, vector<1x2x128xf32>
    %117 = vector.shape_cast %116 : vector<1x2x128xf32> to vector<2x128xf32>
    %118 = arith.truncf %117 : vector<2x128xf32> to vector<2x128xbf16>
    %c0_124 = arith.constant 0 : index
    %c0_125 = arith.constant 0 : index
    %c0_126 = arith.constant 0 : index
    %c0_127 = arith.constant 0 : index
    %119 = vector.load %arg12[%c0_124, %c0_125, %c0_126, %c0_127] : memref<1x4x128x256xbf16, #tpu.memory_space<vmem>>, vector<1x1x128x256xbf16>
    %120 = vector.shape_cast %119 : vector<1x1x128x256xbf16> to vector<128x256xbf16>
    %cst_128 = arith.constant dense<0.000000e+00> : vector<2x256xf32>
    %121 = tpu.matmul %118, %120, %cst_128 {dimension_numbers = #tpu.dot_dimension_numbers<[1], [0], [0], [1], [0, 0, 1, 1], [], []>} : vector<2x128xbf16>, vector<128x256xbf16>, vector<2x256xf32> -> vector<2x256xf32>
    %122 = arith.addf %115, %121 : vector<2x256xf32>
    %c0_129 = arith.constant 0 : index
    %c1 = arith.constant 1 : index
    %c0_130 = arith.constant 0 : index
    %123 = tpu.strided_load %arg16[%c0_129, %c1, %c0_130] {strides = array<i32: 1, 8, 1>} : memref<1x16x128xf32, #tpu.memory_space<vmem>>, vector<1x2x128xf32>
    %124 = vector.shape_cast %123 : vector<1x2x128xf32> to vector<2x128xf32>
    %125 = arith.truncf %124 : vector<2x128xf32> to vector<2x128xbf16>
    %c0_131 = arith.constant 0 : index
    %c1_132 = arith.constant 1 : index
    %c0_133 = arith.constant 0 : index
    %c0_134 = arith.constant 0 : index
    %126 = vector.load %arg12[%c0_131, %c1_132, %c0_133, %c0_134] : memref<1x4x128x256xbf16, #tpu.memory_space<vmem>>, vector<1x1x128x256xbf16>
    %127 = vector.shape_cast %126 : vector<1x1x128x256xbf16> to vector<128x256xbf16>
    %cst_135 = arith.constant dense<0.000000e+00> : vector<2x256xf32>
    %128 = tpu.matmul %125, %127, %cst_135 {dimension_numbers = #tpu.dot_dimension_numbers<[1], [0], [0], [1], [0, 0, 1, 1], [], []>} : vector<2x128xbf16>, vector<128x256xbf16>, vector<2x256xf32> -> vector<2x256xf32>
    %129 = arith.addf %122, %128 : vector<2x256xf32>
    %c0_136 = arith.constant 0 : index
    %c2 = arith.constant 2 : index
    %c0_137 = arith.constant 0 : index
    %130 = tpu.strided_load %arg16[%c0_136, %c2, %c0_137] {strides = array<i32: 1, 8, 1>} : memref<1x16x128xf32, #tpu.memory_space<vmem>>, vector<1x2x128xf32>
    %131 = vector.shape_cast %130 : vector<1x2x128xf32> to vector<2x128xf32>
    %132 = arith.truncf %131 : vector<2x128xf32> to vector<2x128xbf16>
    %c0_138 = arith.constant 0 : index
    %c2_139 = arith.constant 2 : index
    %c0_140 = arith.constant 0 : index
    %c0_141 = arith.constant 0 : index
    %133 = vector.load %arg12[%c0_138, %c2_139, %c0_140, %c0_141] : memref<1x4x128x256xbf16, #tpu.memory_space<vmem>>, vector<1x1x128x256xbf16>
    %134 = vector.shape_cast %133 : vector<1x1x128x256xbf16> to vector<128x256xbf16>
    %cst_142 = arith.constant dense<0.000000e+00> : vector<2x256xf32>
    %135 = tpu.matmul %132, %134, %cst_142 {dimension_numbers = #tpu.dot_dimension_numbers<[1], [0], [0], [1], [0, 0, 1, 1], [], []>} : vector<2x128xbf16>, vector<128x256xbf16>, vector<2x256xf32> -> vector<2x256xf32>
    %136 = arith.addf %129, %135 : vector<2x256xf32>
    %c0_143 = arith.constant 0 : index
    %c3 = arith.constant 3 : index
    %c0_144 = arith.constant 0 : index
    %137 = tpu.strided_load %arg16[%c0_143, %c3, %c0_144] {strides = array<i32: 1, 8, 1>} : memref<1x16x128xf32, #tpu.memory_space<vmem>>, vector<1x2x128xf32>
    %138 = vector.shape_cast %137 : vector<1x2x128xf32> to vector<2x128xf32>
    %139 = arith.truncf %138 : vector<2x128xf32> to vector<2x128xbf16>
    %c0_145 = arith.constant 0 : index
    %c3_146 = arith.constant 3 : index
    %c0_147 = arith.constant 0 : index
    %c0_148 = arith.constant 0 : index
    %140 = vector.load %arg12[%c0_145, %c3_146, %c0_147, %c0_148] : memref<1x4x128x256xbf16, #tpu.memory_space<vmem>>, vector<1x1x128x256xbf16>
    %141 = vector.shape_cast %140 : vector<1x1x128x256xbf16> to vector<128x256xbf16>
    %cst_149 = arith.constant dense<0.000000e+00> : vector<2x256xf32>
    %142 = tpu.matmul %139, %141, %cst_149 {dimension_numbers = #tpu.dot_dimension_numbers<[1], [0], [0], [1], [0, 0, 1, 1], [], []>} : vector<2x128xbf16>, vector<128x256xbf16>, vector<2x256xf32> -> vector<2x256xf32>
    %143 = arith.addf %136, %142 : vector<2x256xf32>
    %c0_150 = arith.constant 0 : index
    %c0_151 = arith.constant 0 : index
    %c0_152 = arith.constant 0 : index
    %144 = vector.load %arg13[%c0_150, %c0_151, %c0_152] : memref<1x1x256xf32, #tpu.memory_space<vmem>>, vector<1x1x256xf32>
    %145 = vector.shape_cast %144 : vector<1x1x256xf32> to vector<1x256xf32>
    %146 = vector.broadcast %145 : vector<1x256xf32> to vector<2x256xf32>
    %147 = arith.addf %143, %146 : vector<2x256xf32>
    %cst_153 = arith.constant 0.000000e+00 : f32
    %148 = vector.broadcast %cst_153 : f32 to vector<2x256xf32>
    %149 = arith.maximumf %147, %148 : vector<2x256xf32>
    %150 = arith.truncf %149 : vector<2x256xf32> to vector<2x256xbf16>
    %c0_154 = arith.constant 0 : index
    %c0_155 = arith.constant 0 : index
    %c0_156 = arith.constant 0 : index
    %151 = vector.load %arg14[%c0_154, %c0_155, %c0_156] : memref<1x256x128xbf16, #tpu.memory_space<vmem>>, vector<1x256x128xbf16>
    %152 = vector.shape_cast %151 : vector<1x256x128xbf16> to vector<256x128xbf16>
    %cst_157 = arith.constant dense<0.000000e+00> : vector<2x128xf32>
    %153 = tpu.matmul %150, %152, %cst_157 {dimension_numbers = #tpu.dot_dimension_numbers<[1], [0], [0], [1], [0, 0, 1, 1], [], []>} : vector<2x256xbf16>, vector<256x128xbf16>, vector<2x128xf32> -> vector<2x128xf32>
    %c0_158 = arith.constant 0 : index
    %c0_159 = arith.constant 0 : index
    %c0_160 = arith.constant 0 : index
    %154 = vector.load %arg15[%c0_158, %c0_159, %c0_160] : memref<1x1x128xf32, #tpu.memory_space<vmem>>, vector<1x1x128xf32>
    %155 = vector.shape_cast %154 : vector<1x1x128xf32> to vector<1x128xf32>
    %156 = vector.broadcast %155 : vector<1x128xf32> to vector<2x128xf32>
    %157 = arith.addf %153, %156 : vector<2x128xf32>
    %c0_161 = arith.constant 0 : index
    %c0_162 = arith.constant 0 : index
    %c0_163 = arith.constant 0 : index
    %158 = vector.load %arg17[%c0_161, %c0_162, %c0_163] : memref<1x2x128xf32, #tpu.memory_space<vmem>>, vector<1x2x128xf32>
    %159 = vector.shape_cast %158 : vector<1x2x128xf32> to vector<2x128xf32>
    %160 = vector.shape_cast %157 : vector<2x128xf32> to vector<1x2x128xf32>
    tpu.vector_store %arg17[%c0_161, %c0_162, %c0_163], %160 {strides = array<i32>} : memref<1x2x128xf32, #tpu.memory_space<vmem>>, vector<1x2x128xf32>,
    return
  }
  func.func @transform_0(%arg0: i32, %arg1: i32) -> (i32, i32, i32) {
    %c0_i32 = arith.constant 0 : i32
    %c0_i32_0 = arith.constant 0 : i32
    return %arg0, %arg1, %c0_i32 : i32, i32, i32
  }
  func.func @transform_1(%arg0: i32, %arg1: i32) -> (i32, i32) {
    %c0_i32 = arith.constant 0 : i32
    %c0_i32_0 = arith.constant 0 : i32
    %c0_i32_1 = arith.constant 0 : i32
    return %c0_i32, %c0_i32_0 : i32, i32
  }
  func.func @transform_2(%arg0: i32, %arg1: i32) -> (i32, i32) {
    %c0_i32 = arith.constant 0 : i32
    %c0_i32_0 = arith.constant 0 : i32
    %c0_i32_1 = arith.constant 0 : i32
    return %c0_i32, %c0_i32_0 : i32, i32
  }
  func.func @transform_3(%arg0: i32, %arg1: i32) -> (i32, i32) {
    %c0_i32 = arith.constant 0 : i32
    %c0_i32_0 = arith.constant 0 : i32
    %c0_i32_1 = arith.constant 0 : i32
    return %c0_i32, %c0_i32_0 : i32, i32
  }
  func.func @transform_4(%arg0: i32, %arg1: i32) -> (i32, i32, i32) {
    %c0_i32 = arith.constant 0 : i32
    %c0_i32_0 = arith.constant 0 : i32
    %c0_i32_1 = arith.constant 0 : i32
    return %arg0, %c0_i32, %c0_i32_0 : i32, i32, i32
  }
  func.func @transform_5(%arg0: i32, %arg1: i32) -> (i32, i32, i32) {
    %c0_i32 = arith.constant 0 : i32
    %c0_i32_0 = arith.constant 0 : i32
    %c0_i32_1 = arith.constant 0 : i32
    return %arg0, %c0_i32, %c0_i32_0 : i32, i32, i32
  }
  func.func @transform_6(%arg0: i32, %arg1: i32) -> (i32, i32, i32) {
    %c0_i32 = arith.constant 0 : i32
    %c0_i32_0 = arith.constant 0 : i32
    %c0_i32_1 = arith.constant 0 : i32
    return %arg0, %c0_i32, %c0_i32_0 : i32, i32, i32
  }
  func.func @transform_7(%arg0: i32, %arg1: i32) -> (i32, i32, i32) {
    %c0_i32 = arith.constant 0 : i32
    %c0_i32_0 = arith.constant 0 : i32
    %c0_i32_1 = arith.constant 0 : i32
    return %arg0, %c0_i32, %c0_i32_0 : i32, i32, i32
  }
  func.func @transform_8(%arg0: i32, %arg1: i32) -> (i32, i32, i32) {
    %c0_i32 = arith.constant 0 : i32
    %c0_i32_0 = arith.constant 0 : i32
    %c0_i32_1 = arith.constant 0 : i32
    return %arg0, %c0_i32, %c0_i32_0 : i32, i32, i32
  }
  func.func @transform_9(%arg0: i32, %arg1: i32) -> (i32, i32, i32) {
    %c0_i32 = arith.constant 0 : i32
    %c0_i32_0 = arith.constant 0 : i32
    %c0_i32_1 = arith.constant 0 : i32
    return %arg0, %c0_i32, %c0_i32_0 : i32, i32, i32
  }
  func.func @transform_10(%arg0: i32, %arg1: i32) -> (i32, i32, i32, i32) {
    %c0_i32 = arith.constant 0 : i32
    %c0_i32_0 = arith.constant 0 : i32
    %c0_i32_1 = arith.constant 0 : i32
    %c0_i32_2 = arith.constant 0 : i32
    return %arg0, %c0_i32, %c0_i32_0, %c0_i32_1 : i32, i32, i32, i32
  }
  func.func @transform_11(%arg0: i32, %arg1: i32) -> (i32, i32, i32) {
    %c0_i32 = arith.constant 0 : i32
    %c0_i32_0 = arith.constant 0 : i32
    %c0_i32_1 = arith.constant 0 : i32
    return %arg0, %c0_i32, %c0_i32_0 : i32, i32, i32
  }
  func.func @transform_12(%arg0: i32, %arg1: i32) -> (i32, i32, i32) {
    %c0_i32 = arith.constant 0 : i32
    %c0_i32_0 = arith.constant 0 : i32
    %c0_i32_1 = arith.constant 0 : i32
    return %arg0, %c0_i32, %c0_i32_0 : i32, i32, i32
  }
  func.func @transform_13(%arg0: i32, %arg1: i32) -> (i32, i32, i32) {
    %c0_i32 = arith.constant 0 : i32
    %c0_i32_0 = arith.constant 0 : i32
    %c0_i32_1 = arith.constant 0 : i32
    return %arg0, %c0_i32, %c0_i32_0 : i32, i32, i32
  }
  func.func @transform_14(%arg0: i32, %arg1: i32) -> (i32, i32, i32) {
    %c0_i32 = arith.constant 0 : i32
    %c0_i32_0 = arith.constant 0 : i32
    return %arg0, %arg1, %c0_i32 : i32, i32, i32
  }
  func.func @transform_15(%arg0: i32, %arg1: i32) -> (i32, i32, i32) {
    %c0_i32 = arith.constant 0 : i32
    %c0_i32_0 = arith.constant 0 : i32
    return %arg0, %arg1, %c0_i32 : i32, i32, i32
  }
}

</mosaic_0001>

<llo_original>
// kernel: squeeze.4
$region0: #{squeeze.4}
  %s0 = inlined_call_operand.vmem [shape: f32[1,2,16,4], index: 0, kind: input, shape index: {}]
  %s1 = inlined_call_operand.hbm [shape: f32[2,64], index: 1, kind: output, shape index: {}]
  $region1: #{squeeze.4} parent=0
    #allocation0 [shape = 'u8[1024]{0}', space=vmem, size = 0x400, scoped, tag = 'operand span for operand 1']
    #allocation1 [shape = 's32[1]{0}', space=sflag, size = 0x4, scoped, tag = 'scoped memory for squeeze.4']
    #allocation2 [shape = 'u8[4096]{0}', space=vmem, size = 0x1000, scoped, tag = 'scoped mem for output reshape']
    %2 = vsyncpa [#allocation1], 0
    %s3 = smov 3
    %v4 = vld [vmem:[%s0] ss:$16 sm:%s3]
    %vm5 = vcmask 31744
    %6 = vst.msk [vmem:[#allocation2] sm:$0x3] %vm5, %v4
    %s7 = scalar_lea.vmem %s0, 15
    %s8 = smov 3
    %v9 = vld [vmem:[%s7] ss:$16 sm:%s8]
    %10 = vrot.lane.b32.xlu0 %v9, 60
    %v11 = vpop.permute.xlu0 %10
    %vm12 = vcmask 523744
    %13 = vst.msk [vmem:[#allocation2] sm:$0x3] %vm12, %v11
    %s14 = scalar_lea.vmem %s0, 14
    %s15 = smov 3
    %v16 = vld [vmem:[%s14] ss:$16 sm:%s15]
    %17 = vrot.lane.b32.xlu0 %v16, 56
    %v18 = vpop.permute.xlu0 %17
    %vm19 = vcmask 490944
    %20 = vst.msk [vmem:[#allocation2] sm:$0x3] %vm19, %v18
    %s21 = scalar_lea.vmem %s0, 13
    %s22 = smov 3
    %v23 = vld [vmem:[%s21] ss:$16 sm:%s22]
    %24 = vrot.lane.b32.xlu0 %v23, 52
    %v25 = vpop.permute.xlu0 %24
    %vm26 = vcmask 458144
    %27 = vst.msk [vmem:[#allocation2] sm:$0x3] %vm26, %v25
    %s28 = scalar_lea.vmem %s0, 12
    %s29 = smov 3
    %v30 = vld [vmem:[%s28] ss:$16 sm:%s29]
    %31 = vrot.lane.b32.xlu0 %v30, 48
    %v32 = vpop.permute.xlu0 %31
    %vm33 = vcmask 425344
    %34 = vst.msk [vmem:[#allocation2] sm:$0x3] %vm33, %v32
    %s35 = scalar_lea.vmem %s0, 11
    %s36 = smov 3
    %v37 = vld [vmem:[%s35] ss:$16 sm:%s36]
    %38 = vrot.lane.b32.xlu0 %v37, 44
    %v39 = vpop.permute.xlu0 %38
    %vm40 = vcmask 392544
    %41 = vst.msk [vmem:[#allocation2] sm:$0x3] %vm40, %v39
    %s42 = scalar_lea.vmem %s0, 10
    %s43 = smov 3
    %v44 = vld [vmem:[%s42] ss:$16 sm:%s43]
    %45 = vrot.lane.b32.xlu0 %v44, 40
    %v46 = vpop.permute.xlu0 %45
    %vm47 = vcmask 359744
    %48 = vst.msk [vmem:[#allocation2] sm:$0x3] %vm47, %v46
    %s49 = scalar_lea.vmem %s0, 9
    %s50 = smov 3
    %v51 = vld [vmem:[%s49] ss:$16 sm:%s50]
    %52 = vrot.lane.b32.xlu0 %v51, 36
    %v53 = vpop.permute.xlu0 %52
    %vm54 = vcmask 326944
    %55 = vst.msk [vmem:[#allocation2] sm:$0x3] %vm54, %v53
    %s56 = scalar_lea.vmem %s0, 8
    %s57 = smov 3
    %v58 = vld [vmem:[%s56] ss:$16 sm:%s57]
    %59 = vrot.lane.b32.xlu0 %v58, 32
    %v60 = vpop.permute.xlu0 %59
    %vm61 = vcmask 294144
    %62 = vst.msk [vmem:[#allocation2] sm:$0x3] %vm61, %v60
    %s63 = scalar_lea.vmem %s0, 7
    %s64 = smov 3
    %v65 = vld [vmem:[%s63] ss:$16 sm:%s64]
    %66 = vrot.lane.b32.xlu0 %v65, 28
    %v67 = vpop.permute.xlu0 %66
    %vm68 = vcmask 261344
    %69 = vst.msk [vmem:[#allocation2] sm:$0x3] %vm68, %v67
    %s70 = scalar_lea.vmem %s0, 6
    %s71 = smov 3
    %v72 = vld [vmem:[%s70] ss:$16 sm:%s71]
    %73 = vrot.lane.b32.xlu0 %v72, 24
    %v74 = vpop.permute.xlu0 %73
    %vm75 = vcmask 228544
    %76 = vst.msk [vmem:[#allocation2] sm:$0x3] %vm75, %v74
    %s77 = scalar_lea.vmem %s0, 5
    %s78 = smov 3
    %v79 = vld [vmem:[%s77] ss:$16 sm:%s78]
    %80 = vrot.lane.b32.xlu0 %v79, 20
    %v81 = vpop.permute.xlu0 %80
    %vm82 = vcmask 195744
    %83 = vst.msk [vmem:[#allocation2] sm:$0x3] %vm82, %v81
    %s84 = scalar_lea.vmem %s0, 4
    %s85 = smov 3
    %v86 = vld [vmem:[%s84] ss:$16 sm:%s85]
    %87 = vrot.lane.b32.xlu0 %v86, 16
    %v88 = vpop.permute.xlu0 %87
    %vm89 = vcmask 162944
    %90 = vst.msk [vmem:[#allocation2] sm:$0x3] %vm89, %v88
    %s91 = scalar_lea.vmem %s0, 3
    %s92 = smov 3
    %v93 = vld [vmem:[%s91] ss:$16 sm:%s92]
    %94 = vrot.lane.b32.xlu0 %v93, 12
    %v95 = vpop.permute.xlu0 %94
    %vm96 = vcmask 130144
    %97 = vst.msk [vmem:[#allocation2] sm:$0x3] %vm96, %v95
    %s98 = scalar_lea.vmem %s0, 2
    %s99 = smov 3
    %v100 = vld [vmem:[%s98] ss:$16 sm:%s99]
    %101 = vrot.lane.b32.xlu0 %v100, 8
    %v102 = vpop.permute.xlu0 %101
    %vm103 = vcmask 97344
    %104 = vst.msk [vmem:[#allocation2] sm:$0x3] %vm103, %v102
    %s105 = scalar_lea.vmem %s0, 1
    %s106 = smov 3
    %v107 = vld [vmem:[%s105] ss:$16 sm:%s106]
    %108 = vrot.lane.b32.xlu0 %v107, 4
    %v109 = vpop.permute.xlu0 %108
    %vm110 = vcmask 64544
    %111 = vst.msk [vmem:[#allocation2] sm:$0x3] %vm110, %v109
    %s113 = sshllo.u32 0, 2
    %v115 = vld [vmem:[#allocation2] sm:%s113]
    %s116 = sshllo.u32 0, 2
    %117 = vst [vmem:[#allocation0] sm:%s116] %v115
    %s119 = ssub.s32 32, 32
    %120 = vsyncadd [#allocation1], %s119
    %s122 = sshll.u32 [#allocation0], 4
    %s123 = int_to_ptr.vmem [resolvable:$true] %s122
    %125 = dma.vmem_to_hbm [thread:$0]  %s123, 32, %s1, [#allocation1]
    %126 = dma.done [#allocation1], 32
    %127 = vsyncpa [#allocation1], 1

// kernel: fwd.1
$region0: #{fwd.1}
  #allocation0 [shape = 'u32[]', space=smem, size = 0x4, offset = 0x4, fixed_abs, tag = 'smem constant byte address 0x4 - core index']
  #allocation1 [shape = 'u32[144,128]{1,0:T(1,128)}', space=vmem, size = 0x12000, scoped, tag = 'internal scratch']
  #allocation2 [shape = 'bf16[64,256]{1,0:T(16,128)(2,1)}', space=vmem, size = 0x8000, scoped, tag = 'scratch operand']
  #allocation3 [shape = 'bf16[32,512]{1,0:T(16,128)(2,1)}', space=vmem, size = 0x8000, scoped, tag = 'scratch operand']
  #allocation4 [shape = 'f32[80,32]{1,0:T(8,128)}', space=vmem, size = 0xa000, scoped, tag = 'scratch operand']
  #allocation5 [shape = 'f32[48,64]{1,0:T(8,128)}', space=vmem, size = 0x6000, scoped, tag = 'scratch operand']
  #allocation6 [shape = 'f32[136,32]{1,0:T(8,128)}', space=vmem, size = 0x11000, scoped, tag = 'scratch operand']
  #allocation7 [shape = 'f32[72,64]{1,0:T(8,128)}', space=vmem, size = 0x9000, scoped, tag = 'scratch operand']
  #allocation8 [shape = 'f32[40,128]{1,0:T(8,128)}', space=vmem, size = 0x5000, scoped, tag = 'scratch operand']
  %s0 = inlined_call_operand.vmem [shape: bf16[2,128,32], index: 0, kind: input, shape index: {}]
  %s1 = inlined_call_operand.vmem [shape: f32[128,1], index: 1, kind: input, shape index: {}]
  %s2 = inlined_call_operand.vmem [shape: f32[64,1], index: 2, kind: input, shape index: {}]
  %s3 = inlined_call_operand.vmem [shape: f32[32,1], index: 3, kind: input, shape index: {}]
  %s4 = inlined_call_operand.vmem [shape: bf16[2,32,32], index: 4, kind: input, shape index: {}]
  %s5 = inlined_call_operand.vmem [shape: f32[2,1,32], index: 5, kind: input, shape index: {}]
  %s6 = inlined_call_operand.vmem [shape: bf16[2,256,64], index: 6, kind: input, shape index: {}]
  %s7 = inlined_call_operand.vmem [shape: f32[2,1,64], index: 7, kind: input, shape index: {}]
  %s8 = inlined_call_operand.vmem [shape: bf16[2,512,128], index: 8, kind: input, shape index: {}]
  %s9 = inlined_call_operand.vmem [shape: f32[2,1,128], index: 9, kind: input, shape index: {}]
  %s10 = inlined_call_operand.vmem [shape: bf16[2,4,128,256], index: 10, kind: input, shape index: {}]
  %s11 = inlined_call_operand.vmem [shape: f32[2,1,256], index: 11, kind: input, shape index: {}]
  %s12 = inlined_call_operand.vmem [shape: bf16[2,256,128], index: 12, kind: input, shape index: {}]
  %s13 = inlined_call_operand.vmem [shape: f32[2,1,128], index: 13, kind: input, shape index: {}]
  %s14 = inlined_call_operand.vmem [shape: f32[2,16,128], index: 14, kind: output, shape index: {0}]
  %s15 = inlined_call_operand.vmem [shape: f32[2,2,128], index: 15, kind: output, shape index: {1}]
  %16 = xla_tuple %s14, %s15
  %s17 = sld [smem:[#allocation0]]
  $region97: #{fwd.1} parent=0
    _
  %s19 = ssub.s32 1, %s17
  %s20 = scalar_select 0, %s19, %s17
  loop: start=0, step=1, limit=4
  $region2: #{fwd.1} parent=0 // loop_pre_header
    _
  $region3: #{fwd.1} parent=0 // loop_header
    %s22 = sphi 0, %s26
    %p23 = scmp.ge.s32.totalorder %s22, 4
    %s29 = sphi 0, %s41
    %s30 = sphi 0, %s37
    %s31 = sphi 0, %s29
    %s32 = sphi 0, %s30
    %s33 = sphi 0, %s31
    %s34 = sphi 0, %s32
    %s46 = sphi 0, %s48
    %s49 = sphi 0, %s46
    %s50 = sphi 0, %s49
    %s66 = sphi 0, %s50
    %s70 = sphi 0, %s70
    %s72 = sphi 0, %s70
    %s73 = sphi 0, %s72
    %s87 = sphi 0, %s73
    %s91 = sphi 0, %s91
    %s93 = sphi 0, %s91
    %s94 = sphi 0, %s93
    %s108 = sphi 0, %s94
    %s112 = sphi 0, %s112
    %s114 = sphi 0, %s112
    %s115 = sphi 0, %s114
    %s129 = sphi 0, %s115
    %s135 = sphi 0, %s137
    %s138 = sphi 0, %s135
    %s139 = sphi 0, %s138
    %s155 = sphi 0, %s139
    %s161 = sphi 0, %s163
    %s164 = sphi 0, %s161
    %s165 = sphi 0, %s164
    %s181 = sphi 0, %s165
    %s187 = sphi 0, %s189
    %s190 = sphi 0, %s187
    %s191 = sphi 0, %s190
    %s207 = sphi 0, %s191
    %s213 = sphi 0, %s215
    %s216 = sphi 0, %s213
    %s217 = sphi 0, %s216
    %s233 = sphi 0, %s217
    %s239 = sphi 0, %s241
    %s242 = sphi 0, %s239
    %s243 = sphi 0, %s242
    %s259 = sphi 0, %s243
    %s265 = sphi 0, %s267
    %s268 = sphi 0, %s265
    %s269 = sphi 0, %s268
    %s285 = sphi 0, %s269
    %s291 = sphi 0, %s293
    %s294 = sphi 0, %s291
    %s295 = sphi 0, %s294
    %s311 = sphi 0, %s295
    %s317 = sphi 0, %s319
    %s320 = sphi 0, %s317
    %s321 = sphi 0, %s320
    %s337 = sphi 0, %s321
    %s343 = sphi 0, %s345
    %s346 = sphi 0, %s343
    %s347 = sphi 0, %s346
    %s363 = sphi 0, %s347
    %s369 = sphi 0, %s371
    %s372 = sphi 0, %s369
    %s373 = sphi 0, %s372
    %s389 = sphi 0, %s373
    %s397 = sphi 0, %s399
    %s400 = sphi 0, %s397
    %s401 = sphi 0, %s400
    %s417 = sphi 0, %s401
    %s425 = sphi 0, %s427
    %s428 = sphi 0, %s425
    %s429 = sphi 0, %s428
    %s445 = sphi 0, %s429
  $region4: #{fwd.1} parent=0 // loop_header_branch
    %25 = sbr.rel (%p23) target = $region8
  $region5: #{fwd.1} parent=0 // loop_body
    %s27 = ssub.s32 %s22, 1
    %s28 = ssub.s32 %s22, 2
    %s35 = sadd.s32 1, %s30
    %p36 = scmp.ge.s32.totalorder %s35, 1
    %s37 = scalar_select %p36, 0, %s35
    %s38 = sadd.s32 1, %s29
    %s39 = scalar_select %p36, %s38, %s29
    %p40 = scmp.ge.s32.totalorder %s39, 2
    %s41 = scalar_select %p40, 0, %s39
    %s42 = ssub.s32 %s29, %s41
    %s43 = ssub.s32 %s30, %s37
    %s44 = sor.u32 %s42, %s43
    %p45 = scmp.eq.s32.totalorder %s44, 0
    %s47 = sadd.s32 %s46, 1
    %s48 = scalar_select %p45, %s46, %s47
    %p51 = pneg %p45
    %p52 = scmp.eq.s32.totalorder %s22, 1
    %p53 = por %p51, %p52
    %p54 = scmp.ne.s32.totalorder %s46, %s49
    %p55 = scmp.eq.s32.totalorder %s22, 0
    %p56 = por %p54, %p55
    %p57 = scmp.ne.s32.totalorder %s46, %s49
    %p58 = scmp.eq.s32.totalorder %s27, 1
    %p59 = por %p57, %p58
    %p60 = scmp.ne.s32.totalorder %s49, %s50
    %p61 = scmp.eq.s32.totalorder %s27, 0
    %p62 = por %p60, %p61
    %p63 = scmp.ne.s32.totalorder %s49, %s50
    %p64 = scmp.eq.s32.totalorder %s28, 1
    %p65 = por %p63, %p64
    %p67 = scmp.ne.s32.totalorder %s50, %s66
    %p68 = scmp.eq.s32.totalorder %s28, 0
    %p69 = por %p67, %p68
    %s71 = sadd.s32 %s70, 1
    %p74 = scmp.eq.s32.totalorder %s22, 1
    %p75 = scmp.ne.s32.totalorder %s70, %s72
    %p76 = scmp.eq.s32.totalorder %s22, 0
    %p77 = por %p75, %p76
    %p78 = scmp.ne.s32.totalorder %s70, %s72
    %p79 = scmp.eq.s32.totalorder %s27, 1
    %p80 = por %p78, %p79
    %p81 = scmp.ne.s32.totalorder %s72, %s73
    %p82 = scmp.eq.s32.totalorder %s27, 0
    %p83 = por %p81, %p82
    %p84 = scmp.ne.s32.totalorder %s72, %s73
    %p85 = scmp.eq.s32.totalorder %s28, 1
    %p86 = por %p84, %p85
    %p88 = scmp.ne.s32.totalorder %s73, %s87
    %p89 = scmp.eq.s32.totalorder %s28, 0
    %p90 = por %p88, %p89
    %s92 = sadd.s32 %s91, 1
    %p95 = scmp.eq.s32.totalorder %s22, 1
    %p96 = scmp.ne.s32.totalorder %s91, %s93
    %p97 = scmp.eq.s32.totalorder %s22, 0
    %p98 = por %p96, %p97
    %p99 = scmp.ne.s32.totalorder %s91, %s93
    %p100 = scmp.eq.s32.totalorder %s27, 1
    %p101 = por %p99, %p100
    %p102 = scmp.ne.s32.totalorder %s93, %s94
    %p103 = scmp.eq.s32.totalorder %s27, 0
    %p104 = por %p102, %p103
    %p105 = scmp.ne.s32.totalorder %s93, %s94
    %p106 = scmp.eq.s32.totalorder %s28, 1
    %p107 = por %p105, %p106
    %p109 = scmp.ne.s32.totalorder %s94, %s108
    %p110 = scmp.eq.s32.totalorder %s28, 0
    %p111 = por %p109, %p110
    %s113 = sadd.s32 %s112, 1
    %p116 = scmp.eq.s32.totalorder %s22, 1
    %p117 = scmp.ne.s32.totalorder %s112, %s114
    %p118 = scmp.eq.s32.totalorder %s22, 0
    %p119 = por %p117, %p118
    %p120 = scmp.ne.s32.totalorder %s112, %s114
    %p121 = scmp.eq.s32.totalorder %s27, 1
    %p122 = por %p120, %p121
    %p123 = scmp.ne.s32.totalorder %s114, %s115
    %p124 = scmp.eq.s32.totalorder %s27, 0
    %p125 = por %p123, %p124
    %p126 = scmp.ne.s32.totalorder %s114, %s115
    %p127 = scmp.eq.s32.totalorder %s28, 1
    %p128 = por %p126, %p127
    %p130 = scmp.ne.s32.totalorder %s115, %s129
    %p131 = scmp.eq.s32.totalorder %s28, 0
    %p132 = por %p130, %p131
    %s133 = ssub.s32 %s29, %s41
    %p134 = scmp.eq.s32.totalorder %s133, 0
    %s136 = sadd.s32 %s135, 1
    %s137 = scalar_select %p134, %s135, %s136
    %p140 = pneg %p134
    %p141 = scmp.eq.s32.totalorder %s22, 1
    %p142 = por %p140, %p141
    %p143 = scmp.ne.s32.totalorder %s135, %s138
    %p144 = scmp.eq.s32.totalorder %s22, 0
    %p145 = por %p143, %p144
    %p146 = scmp.ne.s32.totalorder %s135, %s138
    %p147 = scmp.eq.s32.totalorder %s27, 1
    %p148 = por %p146, %p147
    %p149 = scmp.ne.s32.totalorder %s138, %s139
    %p150 = scmp.eq.s32.totalorder %s27, 0
    %p151 = por %p149, %p150
    %p152 = scmp.ne.s32.totalorder %s138, %s139
    %p153 = scmp.eq.s32.totalorder %s28, 1
    %p154 = por %p152, %p153
    %p156 = scmp.ne.s32.totalorder %s139, %s155
    %p157 = scmp.eq.s32.totalorder %s28, 0
    %p158 = por %p156, %p157
    %s159 = ssub.s32 %s29, %s41
    %p160 = scmp.eq.s32.totalorder %s159, 0
    %s162 = sadd.s32 %s161, 1
    %s163 = scalar_select %p160, %s161, %s162
    %p166 = pneg %p160
    %p167 = scmp.eq.s32.totalorder %s22, 1
    %p168 = por %p166, %p167
    %p169 = scmp.ne.s32.totalorder %s161, %s164
    %p170 = scmp.eq.s32.totalorder %s22, 0
    %p171 = por %p169, %p170
    %p172 = scmp.ne.s32.totalorder %s161, %s164
    %p173 = scmp.eq.s32.totalorder %s27, 1
    %p174 = por %p172, %p173
    %p175 = scmp.ne.s32.totalorder %s164, %s165
    %p176 = scmp.eq.s32.totalorder %s27, 0
    %p177 = por %p175, %p176
    %p178 = scmp.ne.s32.totalorder %s164, %s165
    %p179 = scmp.eq.s32.totalorder %s28, 1
    %p180 = por %p178, %p179
    %p182 = scmp.ne.s32.totalorder %s165, %s181
    %p183 = scmp.eq.s32.totalorder %s28, 0
    %p184 = por %p182, %p183
    %s185 = ssub.s32 %s29, %s41
    %p186 = scmp.eq.s32.totalorder %s185, 0
    %s188 = sadd.s32 %s187, 1
    %s189 = scalar_select %p186, %s187, %s188
    %p192 = pneg %p186
    %p193 = scmp.eq.s32.totalorder %s22, 1
    %p194 = por %p192, %p193
    %p195 = scmp.ne.s32.totalorder %s187, %s190
    %p196 = scmp.eq.s32.totalorder %s22, 0
    %p197 = por %p195, %p196
    %p198 = scmp.ne.s32.totalorder %s187, %s190
    %p199 = scmp.eq.s32.totalorder %s27, 1
    %p200 = por %p198, %p199
    %p201 = scmp.ne.s32.totalorder %s190, %s191
    %p202 = scmp.eq.s32.totalorder %s27, 0
    %p203 = por %p201, %p202
    %p204 = scmp.ne.s32.totalorder %s190, %s191
    %p205 = scmp.eq.s32.totalorder %s28, 1
    %p206 = por %p204, %p205
    %p208 = scmp.ne.s32.totalorder %s191, %s207
    %p209 = scmp.eq.s32.totalorder %s28, 0
    %p210 = por %p208, %p209
    %s211 = ssub.s32 %s29, %s41
    %p212 = scmp.eq.s32.totalorder %s211, 0
    %s214 = sadd.s32 %s213, 1
    %s215 = scalar_select %p212, %s213, %s214
    %p218 = pneg %p212
    %p219 = scmp.eq.s32.totalorder %s22, 1
    %p220 = por %p218, %p219
    %p221 = scmp.ne.s32.totalorder %s213, %s216
    %p222 = scmp.eq.s32.totalorder %s22, 0
    %p223 = por %p221, %p222
    %p224 = scmp.ne.s32.totalorder %s213, %s216
    %p225 = scmp.eq.s32.totalorder %s27, 1
    %p226 = por %p224, %p225
    %p227 = scmp.ne.s32.totalorder %s216, %s217
    %p228 = scmp.eq.s32.totalorder %s27, 0
    %p229 = por %p227, %p228
    %p230 = scmp.ne.s32.totalorder %s216, %s217
    %p231 = scmp.eq.s32.totalorder %s28, 1
    %p232 = por %p230, %p231
    %p234 = scmp.ne.s32.totalorder %s217, %s233
    %p235 = scmp.eq.s32.totalorder %s28, 0
    %p236 = por %p234, %p235
    %s237 = ssub.s32 %s29, %s41
    %p238 = scmp.eq.s32.totalorder %s237, 0
    %s240 = sadd.s32 %s239, 1
    %s241 = scalar_select %p238, %s239, %s240
    %p244 = pneg %p238
    %p245 = scmp.eq.s32.totalorder %s22, 1
    %p246 = por %p244, %p245
    %p247 = scmp.ne.s32.totalorder %s239, %s242
    %p248 = scmp.eq.s32.totalorder %s22, 0
    %p249 = por %p247, %p248
    %p250 = scmp.ne.s32.totalorder %s239, %s242
    %p251 = scmp.eq.s32.totalorder %s27, 1
    %p252 = por %p250, %p251
    %p253 = scmp.ne.s32.totalorder %s242, %s243
    %p254 = scmp.eq.s32.totalorder %s27, 0
    %p255 = por %p253, %p254
    %p256 = scmp.ne.s32.totalorder %s242, %s243
    %p257 = scmp.eq.s32.totalorder %s28, 1
    %p258 = por %p256, %p257
    %p260 = scmp.ne.s32.totalorder %s243, %s259
    %p261 = scmp.eq.s32.totalorder %s28, 0
    %p262 = por %p260, %p261
    %s263 = ssub.s32 %s29, %s41
    %p264 = scmp.eq.s32.totalorder %s263, 0
    %s266 = sadd.s32 %s265, 1
    %s267 = scalar_select %p264, %s265, %s266
    %p270 = pneg %p264
    %p271 = scmp.eq.s32.totalorder %s22, 1
    %p272 = por %p270, %p271
    %p273 = scmp.ne.s32.totalorder %s265, %s268
    %p274 = scmp.eq.s32.totalorder %s22, 0
    %p275 = por %p273, %p274
    %p276 = scmp.ne.s32.totalorder %s265, %s268
    %p277 = scmp.eq.s32.totalorder %s27, 1
    %p278 = por %p276, %p277
    %p279 = scmp.ne.s32.totalorder %s268, %s269
    %p280 = scmp.eq.s32.totalorder %s27, 0
    %p281 = por %p279, %p280
    %p282 = scmp.ne.s32.totalorder %s268, %s269
    %p283 = scmp.eq.s32.totalorder %s28, 1
    %p284 = por %p282, %p283
    %p286 = scmp.ne.s32.totalorder %s269, %s285
    %p287 = scmp.eq.s32.totalorder %s28, 0
    %p288 = por %p286, %p287
    %s289 = ssub.s32 %s29, %s41
    %p290 = scmp.eq.s32.totalorder %s289, 0
    %s292 = sadd.s32 %s291, 1
    %s293 = scalar_select %p290, %s291, %s292
    %p296 = pneg %p290
    %p297 = scmp.eq.s32.totalorder %s22, 1
    %p298 = por %p296, %p297
    %p299 = scmp.ne.s32.totalorder %s291, %s294
    %p300 = scmp.eq.s32.totalorder %s22, 0
    %p301 = por %p299, %p300
    %p302 = scmp.ne.s32.totalorder %s291, %s294
    %p303 = scmp.eq.s32.totalorder %s27, 1
    %p304 = por %p302, %p303
    %p305 = scmp.ne.s32.totalorder %s294, %s295
    %p306 = scmp.eq.s32.totalorder %s27, 0
    %p307 = por %p305, %p306
    %p308 = scmp.ne.s32.totalorder %s294, %s295
    %p309 = scmp.eq.s32.totalorder %s28, 1
    %p310 = por %p308, %p309
    %p312 = scmp.ne.s32.totalorder %s295, %s311
    %p313 = scmp.eq.s32.totalorder %s28, 0
    %p314 = por %p312, %p313
    %s315 = ssub.s32 %s29, %s41
    %p316 = scmp.eq.s32.totalorder %s315, 0
    %s318 = sadd.s32 %s317, 1
    %s319 = scalar_select %p316, %s317, %s318
    %p322 = pneg %p316
    %p323 = scmp.eq.s32.totalorder %s22, 1
    %p324 = por %p322, %p323
    %p325 = scmp.ne.s32.totalorder %s317, %s320
    %p326 = scmp.eq.s32.totalorder %s22, 0
    %p327 = por %p325, %p326
    %p328 = scmp.ne.s32.totalorder %s317, %s320
    %p329 = scmp.eq.s32.totalorder %s27, 1
    %p330 = por %p328, %p329
    %p331 = scmp.ne.s32.totalorder %s320, %s321
    %p332 = scmp.eq.s32.totalorder %s27, 0
    %p333 = por %p331, %p332
    %p334 = scmp.ne.s32.totalorder %s320, %s321
    %p335 = scmp.eq.s32.totalorder %s28, 1
    %p336 = por %p334, %p335
    %p338 = scmp.ne.s32.totalorder %s321, %s337
    %p339 = scmp.eq.s32.totalorder %s28, 0
    %p340 = por %p338, %p339
    %s341 = ssub.s32 %s29, %s41
    %p342 = scmp.eq.s32.totalorder %s341, 0
    %s344 = sadd.s32 %s343, 1
    %s345 = scalar_select %p342, %s343, %s344
    %p348 = pneg %p342
    %p349 = scmp.eq.s32.totalorder %s22, 1
    %p350 = por %p348, %p349
    %p351 = scmp.ne.s32.totalorder %s343, %s346
    %p352 = scmp.eq.s32.totalorder %s22, 0
    %p353 = por %p351, %p352
    %p354 = scmp.ne.s32.totalorder %s343, %s346
    %p355 = scmp.eq.s32.totalorder %s27, 1
    %p356 = por %p354, %p355
    %p357 = scmp.ne.s32.totalorder %s346, %s347
    %p358 = scmp.eq.s32.totalorder %s27, 0
    %p359 = por %p357, %p358
    %p360 = scmp.ne.s32.totalorder %s346, %s347
    %p361 = scmp.eq.s32.totalorder %s28, 1
    %p362 = por %p360, %p361
    %p364 = scmp.ne.s32.totalorder %s347, %s363
    %p365 = scmp.eq.s32.totalorder %s28, 0
    %p366 = por %p364, %p365
    %s367 = ssub.s32 %s29, %s41
    %p368 = scmp.eq.s32.totalorder %s367, 0
    %s370 = sadd.s32 %s369, 1
    %s371 = scalar_select %p368, %s369, %s370
    %p374 = pneg %p368
    %p375 = scmp.eq.s32.totalorder %s22, 1
    %p376 = por %p374, %p375
    %p377 = scmp.ne.s32.totalorder %s369, %s372
    %p378 = scmp.eq.s32.totalorder %s22, 0
    %p379 = por %p377, %p378
    %p380 = scmp.ne.s32.totalorder %s369, %s372
    %p381 = scmp.eq.s32.totalorder %s27, 1
    %p382 = por %p380, %p381
    %p383 = scmp.ne.s32.totalorder %s372, %s373
    %p384 = scmp.eq.s32.totalorder %s27, 0
    %p385 = por %p383, %p384
    %p386 = scmp.ne.s32.totalorder %s372, %s373
    %p387 = scmp.eq.s32.totalorder %s28, 1
    %p388 = por %p386, %p387
    %p390 = scmp.ne.s32.totalorder %s373, %s389
    %p391 = scmp.eq.s32.totalorder %s28, 0
    %p392 = por %p390, %p391
    %s393 = ssub.s32 %s29, %s41
    %s394 = ssub.s32 %s30, %s37
    %s395 = sor.u32 %s393, %s394
    %p396 = scmp.eq.s32.totalorder %s395, 0
    %s398 = sadd.s32 %s397, 1
    %s399 = scalar_select %p396, %s397, %s398
    %p402 = pneg %p396
    %p403 = scmp.eq.s32.totalorder %s22, 1
    %p404 = por %p402, %p403
    %p405 = scmp.ne.s32.totalorder %s397, %s400
    %p406 = scmp.eq.s32.totalorder %s22, 0
    %p407 = por %p405, %p406
    %p408 = scmp.ne.s32.totalorder %s397, %s400
    %p409 = scmp.eq.s32.totalorder %s27, 1
    %p410 = por %p408, %p409
    %p411 = scmp.ne.s32.totalorder %s400, %s401
    %p412 = scmp.eq.s32.totalorder %s27, 0
    %p413 = por %p411, %p412
    %p414 = scmp.ne.s32.totalorder %s400, %s401
    %p415 = scmp.eq.s32.totalorder %s28, 1
    %p416 = por %p414, %p415
    %p418 = scmp.ne.s32.totalorder %s401, %s417
    %p419 = scmp.eq.s32.totalorder %s28, 0
    %p420 = por %p418, %p419
    %s421 = ssub.s32 %s29, %s41
    %s422 = ssub.s32 %s30, %s37
    %s423 = sor.u32 %s421, %s422
    %p424 = scmp.eq.s32.totalorder %s423, 0
    %s426 = sadd.s32 %s425, 1
    %s427 = scalar_select %p424, %s425, %s426
    %p430 = pneg %p424
    %p431 = scmp.eq.s32.totalorder %s22, 1
    %p432 = por %p430, %p431
    %p433 = scmp.ne.s32.totalorder %s425, %s428
    %p434 = scmp.eq.s32.totalorder %s22, 0
    %p435 = por %p433, %p434
    %p436 = scmp.ne.s32.totalorder %s425, %s428
    %p437 = scmp.eq.s32.totalorder %s27, 1
    %p438 = por %p436, %p437
    %p439 = scmp.ne.s32.totalorder %s428, %s429
    %p440 = scmp.eq.s32.totalorder %s27, 0
    %p441 = por %p439, %p440
    %p442 = scmp.ne.s32.totalorder %s428, %s429
    %p443 = scmp.eq.s32.totalorder %s28, 1
    %p444 = por %p442, %p443
    %p446 = scmp.ne.s32.totalorder %s429, %s445
    %p447 = scmp.eq.s32.totalorder %s28, 0
    %p448 = por %p446, %p447
    %p449 = scmp.le.s32.totalorder 1, %s22
    %p450 = scmp.lt.s32.totalorder %s22, 3
    %p451 = pnand %p449, %p450
    %p452 = pneg %p451
    // Predicated region
    $region9: #{fwd.1} parent=5 // pred_check
      _
    $region10: #{fwd.1} parent=5 // pred_check_branch
      %454 = sbr.rel (%p451) target = $region12
    $region11: #{fwd.1} parent=5 // pred_region
      %s455 = ssub.s32 %s22, 1
      // Predicated region
      $region13: #{fwd.1} parent=11 // pred_check
        %p456 = pneg %p83
      $region14: #{fwd.1} parent=11 // pred_check_branch
        %458 = sbr.rel (%p456) target = $region16
      $region15: #{fwd.1} parent=11 // pred_region
        _
      $region16: #{fwd.1} parent=11 // pred_fallthru
        _
      // Predicated region
      $region17: #{fwd.1} parent=11 // pred_check
        %p459 = pneg %p104
      $region18: #{fwd.1} parent=11 // pred_check_branch
        %461 = sbr.rel (%p459) target = $region20
      $region19: #{fwd.1} parent=11 // pred_region
        _
      $region20: #{fwd.1} parent=11 // pred_fallthru
        _
      // Predicated region
      $region21: #{fwd.1} parent=11 // pred_check
        %p462 = pneg %p125
      $region22: #{fwd.1} parent=11 // pred_check_branch
        %464 = sbr.rel (%p462) target = $region24
      $region23: #{fwd.1} parent=11 // pred_region
        _
      $region24: #{fwd.1} parent=11 // pred_fallthru
        _
    $region12: #{fwd.1} parent=5 // pred_fallthru
      _
    %p465 = scmp.lt.s32.totalorder %s22, 2
    // Predicated region
    $region25: #{fwd.1} parent=5 // pred_check
      %p466 = pneg %p465
    $region26: #{fwd.1} parent=5 // pred_check_branch
      %468 = sbr.rel (%p466) target = $region28
    $region27: #{fwd.1} parent=5 // pred_region
      // Predicated region
      $region29: #{fwd.1} parent=27 // pred_check
        %p469 = pneg %p56
      $region30: #{fwd.1} parent=27 // pred_check_branch
        %471 = sbr.rel (%p469) target = $region32
      $region31: #{fwd.1} parent=27 // pred_region
        %s472 = smul.u32 16, %s30
        %p473 = scmp.lt.s32.totalorder %s29, 1
        %s474 = scalar_select %p473, %s29, 1
        %p475 = scmp.lt.s32.totalorder %s472, 15
        %s476 = scalar_select %p475, %s472, 15
        %s477 = smul.addr %s474, 16
        %s478 = sadd.s32 %s476, %s477
        %s479 = smul.addr %s478, 4
        %s480 = scalar_lea.vmem %s0, %s479
        %s481 = smul.u32 16, %s30
      $region32: #{fwd.1} parent=27 // pred_fallthru
        _
      // Predicated region
      $region33: #{fwd.1} parent=27 // pred_check
        %p482 = pneg %p145
      $region34: #{fwd.1} parent=27 // pred_check_branch
        %484 = sbr.rel (%p482) target = $region36
      $region35: #{fwd.1} parent=27 // pred_region
        %p485 = scmp.lt.s32.totalorder %s29, 1
        %s486 = scalar_select %p485, %s29, 1
        %s487 = smul.addr %s486, 4
        %s488 = smul.addr %s487, 4
        %s489 = scalar_lea.vmem %s4, %s488
      $region36: #{fwd.1} parent=27 // pred_fallthru
        _
      // Predicated region
      $region37: #{fwd.1} parent=27 // pred_check
        %p490 = pneg %p171
      $region38: #{fwd.1} parent=27 // pred_check_branch
        %492 = sbr.rel (%p490) target = $region40
      $region39: #{fwd.1} parent=27 // pred_region
        %p493 = scmp.lt.s32.totalorder %s29, 1
        %s494 = scalar_select %p493, %s29, 1
        %s495 = scalar_lea.vmem %s5, %s494
      $region40: #{fwd.1} parent=27 // pred_fallthru
        _
      // Predicated region
      $region41: #{fwd.1} parent=27 // pred_check
        %p496 = pneg %p197
      $region42: #{fwd.1} parent=27 // pred_check_branch
        %498 = sbr.rel (%p496) target = $region44
      $region43: #{fwd.1} parent=27 // pred_region
        %p499 = scmp.lt.s32.totalorder %s29, 1
        %s500 = scalar_select %p499, %s29, 1
        %s501 = smul.addr %s500, 32
        %s502 = smul.addr %s501, 4
        %s503 = scalar_lea.vmem %s6, %s502
      $region44: #{fwd.1} parent=27 // pred_fallthru
        _
      // Predicated region
      $region45: #{fwd.1} parent=27 // pred_check
        %p504 = pneg %p223
      $region46: #{fwd.1} parent=27 // pred_check_branch
        %506 = sbr.rel (%p504) target = $region48
      $region47: #{fwd.1} parent=27 // pred_region
        %p507 = scmp.lt.s32.totalorder %s29, 1
        %s508 = scalar_select %p507, %s29, 1
        %s509 = scalar_lea.vmem %s7, %s508
      $region48: #{fwd.1} parent=27 // pred_fallthru
        _
      // Predicated region
      $region49: #{fwd.1} parent=27 // pred_check
        %p510 = pneg %p249
      $region50: #{fwd.1} parent=27 // pred_check_branch
        %512 = sbr.rel (%p510) target = $region52
      $region51: #{fwd.1} parent=27 // pred_region
        %p513 = scmp.lt.s32.totalorder %s29, 1
        %s514 = scalar_select %p513, %s29, 1
        %s515 = smul.addr %s514, 64
        %s516 = smul.addr %s515, 4
        %s517 = scalar_lea.vmem %s8, %s516
      $region52: #{fwd.1} parent=27 // pred_fallthru
        _
      // Predicated region
      $region53: #{fwd.1} parent=27 // pred_check
        %p518 = pneg %p275
      $region54: #{fwd.1} parent=27 // pred_check_branch
        %520 = sbr.rel (%p518) target = $region56
      $region55: #{fwd.1} parent=27 // pred_region
        %p521 = scmp.lt.s32.totalorder %s29, 1
        %s522 = scalar_select %p521, %s29, 1
        %s523 = scalar_lea.vmem %s9, %s522
      $region56: #{fwd.1} parent=27 // pred_fallthru
        _
      // Predicated region
      $region57: #{fwd.1} parent=27 // pred_check
        %p524 = pneg %p301
      $region58: #{fwd.1} parent=27 // pred_check_branch
        %526 = sbr.rel (%p524) target = $region60
      $region59: #{fwd.1} parent=27 // pred_region
        %p527 = scmp.lt.s32.totalorder %s29, 1
        %s528 = scalar_select %p527, %s29, 1
        %s529 = smul.addr %s528, 128
        %s530 = smul.addr %s529, 4
        %s531 = scalar_lea.vmem %s10, %s530
      $region60: #{fwd.1} parent=27 // pred_fallthru
        _
      // Predicated region
      $region61: #{fwd.1} parent=27 // pred_check
        %p532 = pneg %p327
      $region62: #{fwd.1} parent=27 // pred_check_branch
        %534 = sbr.rel (%p532) target = $region64
      $region63: #{fwd.1} parent=27 // pred_region
        %p535 = scmp.lt.s32.totalorder %s29, 1
        %s536 = scalar_select %p535, %s29, 1
        %s537 = smul.addr %s536, 2
        %s538 = scalar_lea.vmem %s11, %s537
      $region64: #{fwd.1} parent=27 // pred_fallthru
        _
      // Predicated region
      $region65: #{fwd.1} parent=27 // pred_check
        %p539 = pneg %p353
      $region66: #{fwd.1} parent=27 // pred_check_branch
        %541 = sbr.rel (%p539) target = $region68
      $region67: #{fwd.1} parent=27 // pred_region
        %p542 = scmp.lt.s32.totalorder %s29, 1
        %s543 = scalar_select %p542, %s29, 1
        %s544 = smul.addr %s543, 32
        %s545 = smul.addr %s544, 4
        %s546 = scalar_lea.vmem %s12, %s545
      $region68: #{fwd.1} parent=27 // pred_fallthru
        _
      // Predicated region
      $region69: #{fwd.1} parent=27 // pred_check
        %p547 = pneg %p379
      $region70: #{fwd.1} parent=27 // pred_check_branch
        %549 = sbr.rel (%p547) target = $region72
      $region71: #{fwd.1} parent=27 // pred_region
        %p550 = scmp.lt.s32.totalorder %s29, 1
        %s551 = scalar_select %p550, %s29, 1
        %s552 = scalar_lea.vmem %s13, %s551
      $region72: #{fwd.1} parent=27 // pred_fallthru
        _
    $region28: #{fwd.1} parent=5 // pred_fallthru
      _
    %p553 = scmp.le.s32.totalorder 1, %s22
    %p554 = scmp.lt.s32.totalorder %s22, 3
    %p555 = pnand %p553, %p554
    %p556 = pneg %p555
    // Predicated region
    $region73: #{fwd.1} parent=5 // pred_check
      _
    $region74: #{fwd.1} parent=5 // pred_check_branch
      %558 = sbr.rel (%p555) target = $region76
    $region75: #{fwd.1} parent=5 // pred_region
      %s559 = ssub.s32 %s22, 1
      %s560 = smul.u32 16, %s32
      %p561 = scmp.lt.s32.totalorder %s31, 1
      %s562 = scalar_select %p561, %s31, 1
      %p563 = scmp.lt.s32.totalorder %s560, 15
      %s564 = scalar_select %p563, %s560, 15
      %s565 = smul.addr %s562, 16
      %s566 = sadd.s32 %s564, %s565
      %s567 = smul.addr %s566, 4
      %s568 = scalar_lea.vmem %s0, %s567
      %p569 = pneg %p62
      %p570 = pneg %p59
      %p571 = pneg %p83
      %p572 = pneg %p80
      %p573 = pneg %p104
      %p574 = pneg %p101
      %p575 = pneg %p125
      %p576 = pneg %p122
      %p577 = scmp.lt.s32.totalorder %s31, 1
      %s578 = scalar_select %p577, %s31, 1
      %s579 = smul.addr %s578, 4
      %s580 = smul.addr %s579, 4
      %s581 = scalar_lea.vmem %s4, %s580
      %p582 = pneg %p151
      %p583 = pneg %p148
      %p584 = scmp.lt.s32.totalorder %s31, 1
      %s585 = scalar_select %p584, %s31, 1
      %s586 = scalar_lea.vmem %s5, %s585
      %p587 = pneg %p177
      %p588 = pneg %p174
      %p589 = scmp.lt.s32.totalorder %s31, 1
      %s590 = scalar_select %p589, %s31, 1
      %s591 = smul.addr %s590, 32
      %s592 = smul.addr %s591, 4
      %s593 = scalar_lea.vmem %s6, %s592
      %p594 = pneg %p203
      %p595 = pneg %p200
      %p596 = scmp.lt.s32.totalorder %s31, 1
      %s597 = scalar_select %p596, %s31, 1
      %s598 = scalar_lea.vmem %s7, %s597
      %p599 = pneg %p229
      %p600 = pneg %p226
      %p601 = scmp.lt.s32.totalorder %s31, 1
      %s602 = scalar_select %p601, %s31, 1
      %s603 = smul.addr %s602, 64
      %s604 = smul.addr %s603, 4
      %s605 = scalar_lea.vmem %s8, %s604
      %p606 = pneg %p255
      %p607 = pneg %p252
      %p608 = scmp.lt.s32.totalorder %s31, 1
      %s609 = scalar_select %p608, %s31, 1
      %s610 = scalar_lea.vmem %s9, %s609
      %p611 = pneg %p281
      %p612 = pneg %p278
      %p613 = scmp.lt.s32.totalorder %s31, 1
      %s614 = scalar_select %p613, %s31, 1
      %s615 = smul.addr %s614, 128
      %s616 = smul.addr %s615, 4
      %s617 = scalar_lea.vmem %s10, %s616
      %p618 = pneg %p307
      %p619 = pneg %p304
      %p620 = scmp.lt.s32.totalorder %s31, 1
      %s621 = scalar_select %p620, %s31, 1
      %s622 = smul.addr %s621, 2
      %s623 = scalar_lea.vmem %s11, %s622
      %p624 = pneg %p333
      %p625 = pneg %p330
      %p626 = scmp.lt.s32.totalorder %s31, 1
      %s627 = scalar_select %p626, %s31, 1
      %s628 = smul.addr %s627, 32
      %s629 = smul.addr %s628, 4
      %s630 = scalar_lea.vmem %s12, %s629
      %p631 = pneg %p359
      %p632 = pneg %p356
      %p633 = scmp.lt.s32.totalorder %s31, 1
      %s634 = scalar_select %p633, %s31, 1
      %s635 = scalar_lea.vmem %s13, %s634
      %p636 = pneg %p385
      %p637 = pneg %p382
      %p638 = pneg %p413
      %p639 = pneg %p410
      %s640 = smul.u32 2, %s32
      %p641 = scmp.lt.s32.totalorder %s31, 1
      %s642 = scalar_select %p641, %s31, 1
      %p643 = scmp.lt.s32.totalorder %s640, 1
      %s644 = scalar_select %p643, %s640, 1
      %s645 = smul.addr %s642, 2
      %s646 = sadd.s32 %s644, %s645
      %s647 = smul.addr %s646, 8
      %s648 = scalar_lea.vmem %s14, %s647
      %p649 = pneg %p441
      %p650 = pneg %p438
      %p651 = scmp.lt.s32.totalorder %s31, 1
      %s652 = scalar_select %p651, %s31, 1
      %p653 = scmp.lt.s32.totalorder %s32, 0
      %s654 = scalar_select %p653, %s32, 0
      %s655 = sadd.s32 %s654, %s652
      %s656 = smul.addr %s655, 2
      %s657 = scalar_lea.vmem %s15, %s656
      %s658 = smul.u32 16, %s32
      %p659 = scmp.lt.s32.totalorder %s31, 1
      %s660 = scalar_select %p659, %s31, 1
      %p661 = scmp.lt.s32.totalorder %s658, 15
      %s662 = scalar_select %p661, %s658, 15
      %s663 = smul.addr %s660, 16
      %s664 = sadd.s32 %s662, %s663
      %s665 = smul.addr %s664, 4
      %s666 = scalar_lea.vmem %s0, %s665
      %s667 = smul.u32 16, %s32
      %p668 = scmp.lt.s32.totalorder %s31, 1
      %s669 = scalar_select %p668, %s31, 1
      %s670 = smul.addr %s669, 4
      %s671 = smul.addr %s670, 4
      %s672 = scalar_lea.vmem %s4, %s671
      %p673 = scmp.lt.s32.totalorder %s31, 1
      %s674 = scalar_select %p673, %s31, 1
      %s675 = scalar_lea.vmem %s5, %s674
      %p676 = scmp.lt.s32.totalorder %s31, 1
      %s677 = scalar_select %p676, %s31, 1
      %s678 = smul.addr %s677, 32
      %s679 = smul.addr %s678, 4
      %s680 = scalar_lea.vmem %s6, %s679
      %p681 = scmp.lt.s32.totalorder %s31, 1
      %s682 = scalar_select %p681, %s31, 1
      %s683 = scalar_lea.vmem %s7, %s682
      %p684 = scmp.lt.s32.totalorder %s31, 1
      %s685 = scalar_select %p684, %s31, 1
      %s686 = smul.addr %s685, 64
      %s687 = smul.addr %s686, 4
      %s688 = scalar_lea.vmem %s8, %s687
      %p689 = scmp.lt.s32.totalorder %s31, 1
      %s690 = scalar_select %p689, %s31, 1
      %s691 = scalar_lea.vmem %s9, %s690
      %p692 = scmp.lt.s32.totalorder %s31, 1
      %s693 = scalar_select %p692, %s31, 1
      %s694 = smul.addr %s693, 128
      %s695 = smul.addr %s694, 4
      %s696 = scalar_lea.vmem %s10, %s695
      %p697 = scmp.lt.s32.totalorder %s31, 1
      %s698 = scalar_select %p697, %s31, 1
      %s699 = smul.addr %s698, 2
      %s700 = scalar_lea.vmem %s11, %s699
      %p701 = scmp.lt.s32.totalorder %s31, 1
      %s702 = scalar_select %p701, %s31, 1
      %s703 = smul.addr %s702, 32
      %s704 = smul.addr %s703, 4
      %s705 = scalar_lea.vmem %s12, %s704
      %p706 = scmp.lt.s32.totalorder %s31, 1
      %s707 = scalar_select %p706, %s31, 1
      %s708 = scalar_lea.vmem %s13, %s707
      %s709 = smul.u32 2, %s32
      %p710 = scmp.lt.s32.totalorder %s31, 1
      %s711 = scalar_select %p710, %s31, 1
      %p712 = scmp.lt.s32.totalorder %s709, 1
      %s713 = scalar_select %p712, %s709, 1
      %s714 = smul.addr %s711, 2
      %s715 = sadd.s32 %s713, %s714
      %s716 = smul.addr %s715, 8
      %s717 = scalar_lea.vmem %s14, %s716
      %s718 = smul.u32 2, %s32
      %p719 = scmp.lt.s32.totalorder %s31, 1
      %s720 = scalar_select %p719, %s31, 1
      %p721 = scmp.lt.s32.totalorder %s32, 0
      %s722 = scalar_select %p721, %s32, 0
      %s723 = sadd.s32 %s722, %s720
      %s724 = smul.addr %s723, 2
      %s725 = scalar_lea.vmem %s15, %s724
      %v727 = vld [vmem:[%s666] sm:$0xf]
      %v728 = vld [vmem:[%s666 + $0x4] sm:$0xf]
      %v729 = vld [vmem:[%s666 + $0x8] sm:$0xf]
      %v730 = vld [vmem:[%s666 + $0xc] sm:$0xf]
      %v731 = vld [vmem:[%s666 + $0x10] sm:$0xf]
      %v732 = vld [vmem:[%s666 + $0x14] sm:$0xf]
      %v733 = vld [vmem:[%s666 + $0x18] sm:$0xf]
      %v734 = vld [vmem:[%s666 + $0x1c] sm:$0xf]
      %v735 = vld [vmem:[%s666 + $0x20] sm:$0xf]
      %v736 = vld [vmem:[%s666 + $0x24] sm:$0xf]
      %v737 = vld [vmem:[%s666 + $0x28] sm:$0xf]
      %v738 = vld [vmem:[%s666 + $0x2c] sm:$0xf]
      %v739 = vld [vmem:[%s666 + $0x30] sm:$0xf]
      %v740 = vld [vmem:[%s666 + $0x34] sm:$0xf]
      %v741 = vld [vmem:[%s666 + $0x38] sm:$0xf]
      %v742 = vld [vmem:[%s666 + $0x3c] sm:$0xf]
      %v743 = vld [vmem:[%s672] sm:$0xf]
      %v744 = vld [vmem:[%s672 + $0x4] sm:$0xf]
      %v745 = vld [vmem:[%s672 + $0x8] sm:$0xf]
      %v746 = vld [vmem:[%s672 + $0xc] sm:$0xf]
      %v747 = vld [vmem:[%s675] sm:$0x1]
      %v749 = vlaneseq
      %v750 = vshrl.u32 %v749, 7
      %v751 = vsub.s32 0, %v750
      %v752 = vrot.slane %v747, %v751
      %v770 = vunpack.c.l.b16 %v727
      %v771 = vunpack.c.l.b16 %v728
      %v772 = vunpack.c.l.b16 %v729
      %v773 = vunpack.c.l.b16 %v730
      %v774 = vunpack.c.l.b16 %v731
      %v775 = vunpack.c.l.b16 %v732
      %v776 = vunpack.c.l.b16 %v733
      %v777 = vunpack.c.l.b16 %v734
      %v778 = vunpack.c.l.b16 %v735
      %v779 = vunpack.c.l.b16 %v736
      %v780 = vunpack.c.l.b16 %v737
      %v781 = vunpack.c.l.b16 %v738
      %v782 = vunpack.c.l.b16 %v739
      %v783 = vunpack.c.l.b16 %v740
      %v784 = vunpack.c.l.b16 %v741
      %v785 = vunpack.c.l.b16 %v742
      %v786 = vpack.c.b16 %v771, %v770
      %v787 = vpack.c.b16 %v773, %v772
      %v788 = vpack.c.b16 %v775, %v774
      %v789 = vpack.c.b16 %v777, %v776
      %v790 = vpack.c.b16 %v779, %v778
      %v791 = vpack.c.b16 %v781, %v780
      %v792 = vpack.c.b16 %v783, %v782
      %v793 = vpack.c.b16 %v785, %v784
      %v798 = vunpack.c.l.b16 %v743
      %v799 = vunpack.c.l.b16 %v744
      %v800 = vunpack.c.l.b16 %v745
      %v801 = vunpack.c.l.b16 %v746
      %v802 = vpack.c.b16 %v799, %v798
      %v803 = vpack.c.b16 %v801, %v800
      %vm806 = vcmask 261120
      %v808 = vsel %vm806, %v786, 0
      %v811 = vsel %vm806, %v787, 0
      %v814 = vsel %vm806, %v788, 0
      %v817 = vsel %vm806, %v789, 0
      %v820 = vsel %vm806, %v790, 0
      %v823 = vsel %vm806, %v791, 0
      %v826 = vsel %vm806, %v792, 0
      %v829 = vsel %vm806, %v793, 0
      %831 = vmatprep.subr.bf16.mxu0 0
      %832 = vmatpush1.bf16.msra.mxu0 %v802
      %833 = vmatprep.subr.bf16.mxu0 0
      %834 = vmatpush1.bf16.msra.mxu0 %v803
      %835 = vmatprep.subr.bf16.mxu0 0
      %836 = vmatpush1.bf16.msra.mxu0 0
      %837 = vmatprep.subr.bf16.mxu0 0
      %838 = vmatpush1.bf16.msra.mxu0 0
      %839 = vmatprep.subr.bf16.mxu0 0
      %840 = vmatpush1.bf16.msra.mxu0 0
      %841 = vmatprep.subr.bf16.mxu0 0
      %842 = vmatpush1.bf16.msra.mxu0 0
      %843 = vmatprep.subr.bf16.mxu0 0
      %844 = vmatpush1.bf16.msra.mxu0 0
      %845 = vmatprep.subr.bf16.mxu0 0
      %846 = vmatpush1.bf16.msra.mxu0 0
      %847 = vmatprep.subr.bf16.mxu0 0
      %848 = vmatpush1.bf16.msra.mxu0 0
      %849 = vmatprep.subr.bf16.mxu0 0
      %850 = vmatpush1.bf16.msra.mxu0 0
      %851 = vmatprep.subr.bf16.mxu0 0
      %852 = vmatpush1.bf16.msra.mxu0 0
      %853 = vmatprep.subr.bf16.mxu0 0
      %854 = vmatpush1.bf16.msra.mxu0 0
      %855 = vmatprep.subr.bf16.mxu0 0
      %856 = vmatpush1.bf16.msra.mxu0 0
      %857 = vmatprep.subr.bf16.mxu0 0
      %858 = vmatpush1.bf16.msra.mxu0 0
      %859 = vmatprep.subr.bf16.mxu0 0
      %860 = vmatpush1.bf16.msra.mxu0 0
      %861 = vmatprep.subr.bf16.mxu0 0
      %862 = vmatpush1.bf16.msra.mxu0 0
      %863 = vmatprep.mubr.bf16.mxu0 0
      %864 = vmatmul.mubr.bf16.gmra.mrb[0].mxu0 %v808
      %v865 = vpop.f32.mrb[0].mxu0
      %v866 = vadd.f32 %v752, %v865
      %v867 = vpop.f32.mrb[0].mxu0
      %v868 = vpop.f32.mrb[0].mxu0
      %v869 = vadd.f32 %v752, %v868
      %v870 = vpop.f32.mrb[0].mxu0
      %871 = vmatprep.mubr.bf16.mxu0 0
      %872 = vmatmul.mubr.bf16.gmra.mrb[0].mxu0 %v811
      %v873 = vpop.f32.mrb[0].mxu0
      %v874 = vadd.f32 %v752, %v873
      %v875 = vpop.f32.mrb[0].mxu0
      %v876 = vpop.f32.mrb[0].mxu0
      %v877 = vadd.f32 %v752, %v876
      %v878 = vpop.f32.mrb[0].mxu0
      %879 = vmatprep.mubr.bf16.mxu0 0
      %880 = vmatmul.mubr.bf16.gmra.mrb[0].mxu0 %v814
      %v881 = vpop.f32.mrb[0].mxu0
      %v882 = vadd.f32 %v752, %v881
      %v883 = vpop.f32.mrb[0].mxu0
      %v884 = vpop.f32.mrb[0].mxu0
      %v885 = vadd.f32 %v752, %v884
      %v886 = vpop.f32.mrb[0].mxu0
      %887 = vmatprep.mubr.bf16.mxu0 0
      %888 = vmatmul.mubr.bf16.gmra.mrb[0].mxu0 %v817
      %v889 = vpop.f32.mrb[0].mxu0
      %v890 = vadd.f32 %v752, %v889
      %v891 = vpop.f32.mrb[0].mxu0
      %v892 = vpop.f32.mrb[0].mxu0
      %v893 = vadd.f32 %v752, %v892
      %v894 = vpop.f32.mrb[0].mxu0
      %895 = vmatprep.mubr.bf16.mxu0 0
      %896 = vmatmul.mubr.bf16.gmra.mrb[0].mxu0 %v820
      %v897 = vpop.f32.mrb[0].mxu0
      %v898 = vadd.f32 %v752, %v897
      %v899 = vpop.f32.mrb[0].mxu0
      %v900 = vpop.f32.mrb[0].mxu0
      %v901 = vadd.f32 %v752, %v900
      %v902 = vpop.f32.mrb[0].mxu0
      %903 = vmatprep.mubr.bf16.mxu0 0
      %904 = vmatmul.mubr.bf16.gmra.mrb[0].mxu0 %v823
      %v905 = vpop.f32.mrb[0].mxu0
      %v906 = vadd.f32 %v752, %v905
      %v907 = vpop.f32.mrb[0].mxu0
      %v908 = vpop.f32.mrb[0].mxu0
      %v909 = vadd.f32 %v752, %v908
      %v910 = vpop.f32.mrb[0].mxu0
      %911 = vmatprep.mubr.bf16.mxu0 0
      %912 = vmatmul.mubr.bf16.gmra.mrb[0].mxu0 %v826
      %v913 = vpop.f32.mrb[0].mxu0
      %v914 = vadd.f32 %v752, %v913
      %v915 = vpop.f32.mrb[0].mxu0
      %v916 = vpop.f32.mrb[0].mxu0
      %v917 = vadd.f32 %v752, %v916
      %v918 = vpop.f32.mrb[0].mxu0
      %919 = vmatprep.mubr.bf16.mxu0 0
      %920 = vmatmul.mubr.bf16.gmra.mrb[0].mxu0 %v829
      %v921 = vpop.f32.mrb[0].mxu0
      %v922 = vadd.f32 %v752, %v921
      %v923 = vpop.f32.mrb[0].mxu0
      %v924 = vpop.f32.mrb[0].mxu0
      %v925 = vadd.f32 %v752, %v924
      %v926 = vpop.f32.mrb[0].mxu0
      %927 = vdwg.mxu0
      %v928 = vmax.f32 %v866, 0.0
      %v929 = vmax.f32 %v869, 0.0
      %v930 = vmax.f32 %v874, 0.0
      %v931 = vmax.f32 %v877, 0.0
      %v932 = vmax.f32 %v882, 0.0
      %v933 = vmax.f32 %v885, 0.0
      %v934 = vmax.f32 %v890, 0.0
      %v935 = vmax.f32 %v893, 0.0
      %v936 = vmax.f32 %v898, 0.0
      %v937 = vmax.f32 %v901, 0.0
      %v938 = vmax.f32 %v906, 0.0
      %v939 = vmax.f32 %v909, 0.0
      %v940 = vmax.f32 %v914, 0.0
      %v941 = vmax.f32 %v917, 0.0
      %v942 = vmax.f32 %v922, 0.0
      %v943 = vmax.f32 %v925, 0.0
      %v944 = vld [vmem:[%s1] sm:$0xff]
      %v945 = vld [vmem:[%s1 + $0x8] sm:$0xff]
      %v946 = vld [vmem:[%s1 + $0x10] sm:$0xff]
      %v947 = vld [vmem:[%s1 + $0x18] sm:$0xff]
      %v948 = vld [vmem:[%s1 + $0x20] sm:$0xff]
      %v949 = vld [vmem:[%s1 + $0x28] sm:$0xff]
      %v950 = vld [vmem:[%s1 + $0x30] sm:$0xff]
      %v951 = vld [vmem:[%s1 + $0x38] sm:$0xff]
      %v952 = vld [vmem:[%s1 + $0x40] sm:$0xff]
      %v953 = vld [vmem:[%s1 + $0x48] sm:$0xff]
      %v954 = vld [vmem:[%s1 + $0x50] sm:$0xff]
      %v955 = vld [vmem:[%s1 + $0x58] sm:$0xff]
      %v956 = vld [vmem:[%s1 + $0x60] sm:$0xff]
      %v957 = vld [vmem:[%s1 + $0x68] sm:$0xff]
      %v958 = vld [vmem:[%s1 + $0x70] sm:$0xff]
      %v959 = vld [vmem:[%s1 + $0x78] sm:$0xff]
      %961 = vset.pattern.permute.xlu0 0
      %962 = vperm.xlu0 %961, %v944
      %v963 = vpop.permute.xlu0 %962
      %966 = vset.pattern.permute.xlu0 0
      %967 = vperm.xlu0 %966, %v945
      %v968 = vpop.permute.xlu0 %967
      %971 = vset.pattern.permute.xlu0 0
      %972 = vperm.xlu0 %971, %v946
      %v973 = vpop.permute.xlu0 %972
      %976 = vset.pattern.permute.xlu0 0
      %977 = vperm.xlu0 %976, %v947
      %v978 = vpop.permute.xlu0 %977
      %981 = vset.pattern.permute.xlu0 0
      %982 = vperm.xlu0 %981, %v948
      %v983 = vpop.permute.xlu0 %982
      %986 = vset.pattern.permute.xlu0 0
      %987 = vperm.xlu0 %986, %v949
      %v988 = vpop.permute.xlu0 %987
      %991 = vset.pattern.permute.xlu0 0
      %992 = vperm.xlu0 %991, %v950
      %v993 = vpop.permute.xlu0 %992
      %996 = vset.pattern.permute.xlu0 0
      %997 = vperm.xlu0 %996, %v951
      %v998 = vpop.permute.xlu0 %997
      %1001 = vset.pattern.permute.xlu0 0
      %1002 = vperm.xlu0 %1001, %v952
      %v1003 = vpop.permute.xlu0 %1002
      %1006 = vset.pattern.permute.xlu0 0
      %1007 = vperm.xlu0 %1006, %v953
      %v1008 = vpop.permute.xlu0 %1007
      %1011 = vset.pattern.permute.xlu0 0
      %1012 = vperm.xlu0 %1011, %v954
      %v1013 = vpop.permute.xlu0 %1012
      %1016 = vset.pattern.permute.xlu0 0
      %1017 = vperm.xlu0 %1016, %v955
      %v1018 = vpop.permute.xlu0 %1017
      %1021 = vset.pattern.permute.xlu0 0
      %1022 = vperm.xlu0 %1021, %v956
      %v1023 = vpop.permute.xlu0 %1022
      %1026 = vset.pattern.permute.xlu0 0
      %1027 = vperm.xlu0 %1026, %v957
      %v1028 = vpop.permute.xlu0 %1027
      %1031 = vset.pattern.permute.xlu0 0
      %1032 = vperm.xlu0 %1031, %v958
      %v1033 = vpop.permute.xlu0 %1032
      %1036 = vset.pattern.permute.xlu0 0
      %1037 = vperm.xlu0 %1036, %v959
      %v1038 = vpop.permute.xlu0 %1037
      %v1040 = vmul.f32 %v928, %v963
      %v1041 = vmul.f32 %v929, %v968
      %v1042 = vmul.f32 %v930, %v973
      %v1043 = vmul.f32 %v931, %v978
      %v1044 = vmul.f32 %v932, %v983
      %v1045 = vmul.f32 %v933, %v988
      %v1046 = vmul.f32 %v934, %v993
      %v1047 = vmul.f32 %v935, %v998
      %v1048 = vmul.f32 %v936, %v1003
      %v1049 = vmul.f32 %v937, %v1008
      %v1050 = vmul.f32 %v938, %v1013
      %v1051 = vmul.f32 %v939, %v1018
      %v1052 = vmul.f32 %v940, %v1023
      %v1053 = vmul.f32 %v941, %v1028
      %v1054 = vmul.f32 %v942, %v1033
      %v1055 = vmul.f32 %v943, %v1038
      %1056 = vst.msk [vmem:[#allocation6] sm:$0xff] %vm806, 0.0
      %1057 = vst.msk [vmem:[#allocation6 + $0x8] sm:$0xff] %vm806, %v1040
      %1058 = vst.msk [vmem:[#allocation6 + $0x10] sm:$0xff] %vm806, %v1041
      %1059 = vst.msk [vmem:[#allocation6 + $0x18] sm:$0xff] %vm806, %v1042
      %1060 = vst.msk [vmem:[#allocation6 + $0x20] sm:$0xff] %vm806, %v1043
      %1061 = vst.msk [vmem:[#allocation6 + $0x28] sm:$0xff] %vm806, %v1044
      %1062 = vst.msk [vmem:[#allocation6 + $0x30] sm:$0xff] %vm806, %v1045
      %1063 = vst.msk [vmem:[#allocation6 + $0x38] sm:$0xff] %vm806, %v1046
      %1064 = vst.msk [vmem:[#allocation6 + $0x40] sm:$0xff] %vm806, %v1047
      %1065 = vst.msk [vmem:[#allocation6 + $0x48] sm:$0xff] %vm806, %v1048
      %1066 = vst.msk [vmem:[#allocation6 + $0x50] sm:$0xff] %vm806, %v1049
      %1067 = vst.msk [vmem:[#allocation6 + $0x58] sm:$0xff] %vm806, %v1050
      %1068 = vst.msk [vmem:[#allocation6 + $0x60] sm:$0xff] %vm806, %v1051
      %1069 = vst.msk [vmem:[#allocation6 + $0x68] sm:$0xff] %vm806, %v1052
      %1070 = vst.msk [vmem:[#allocation6 + $0x70] sm:$0xff] %vm806, %v1053
      %1071 = vst.msk [vmem:[#allocation6 + $0x78] sm:$0xff] %vm806, %v1054
      %1072 = vst.msk [vmem:[#allocation6 + $0x80] sm:$0xff] %vm806, %v1055
      %s1073 = scalar_lea.vmem [#allocation6], 7
      %v1074 = vld [vmem:[%s1073] ss:$2 sm:$0xff]
      %s1075 = scalar_lea.vmem [#allocation6], 23
      %v1076 = vld [vmem:[%s1075] ss:$2 sm:$0xff]
      %s1077 = scalar_lea.vmem [#allocation6], 39
      %v1078 = vld [vmem:[%s1077] ss:$2 sm:$0xff]
      %s1079 = scalar_lea.vmem [#allocation6], 55
      %v1080 = vld [vmem:[%s1079] ss:$2 sm:$0xff]
      %s1081 = scalar_lea.vmem [#allocation6], 71
      %v1082 = vld [vmem:[%s1081] ss:$2 sm:$0xff]
      %s1083 = scalar_lea.vmem [#allocation6], 87
      %v1084 = vld [vmem:[%s1083] ss:$2 sm:$0xff]
      %s1085 = scalar_lea.vmem [#allocation6], 103
      %v1086 = vld [vmem:[%s1085] ss:$2 sm:$0xff]
      %s1087 = scalar_lea.vmem [#allocation6], 119
      %v1088 = vld [vmem:[%s1087] ss:$2 sm:$0xff]
      %s1089 = scalar_lea.vmem [#allocation6], 8
      %v1090 = vld [vmem:[%s1089] ss:$2 sm:$0xff]
      %s1091 = scalar_lea.vmem [#allocation6], 24
      %v1092 = vld [vmem:[%s1091] ss:$2 sm:$0xff]
      %s1093 = scalar_lea.vmem [#allocation6], 40
      %v1094 = vld [vmem:[%s1093] ss:$2 sm:$0xff]
      %s1095 = scalar_lea.vmem [#allocation6], 56
      %v1096 = vld [vmem:[%s1095] ss:$2 sm:$0xff]
      %s1097 = scalar_lea.vmem [#allocation6], 72
      %v1098 = vld [vmem:[%s1097] ss:$2 sm:$0xff]
      %s1099 = scalar_lea.vmem [#allocation6], 88
      %v1100 = vld [vmem:[%s1099] ss:$2 sm:$0xff]
      %s1101 = scalar_lea.vmem [#allocation6], 104
      %v1102 = vld [vmem:[%s1101] ss:$2 sm:$0xff]
      %s1103 = scalar_lea.vmem [#allocation6], 120
      %v1104 = vld [vmem:[%s1103] ss:$2 sm:$0xff]
      %v1105 = vmax.f32 %v1074, %v1090
      %v1106 = vmax.f32 %v1076, %v1092
      %v1107 = vmax.f32 %v1078, %v1094
      %v1108 = vmax.f32 %v1080, %v1096
      %v1109 = vmax.f32 %v1082, %v1098
      %v1110 = vmax.f32 %v1084, %v1100
      %v1111 = vmax.f32 %v1086, %v1102
      %v1112 = vmax.f32 %v1088, %v1104
      %1113 = vst.msk [vmem:[#allocation4] sm:$0xff] %vm806, 0.0
      %1114 = vst.msk [vmem:[#allocation4 + $0x8] sm:$0xff] %vm806, %v1105
      %1115 = vst.msk [vmem:[#allocation4 + $0x10] sm:$0xff] %vm806, %v1106
      %1116 = vst.msk [vmem:[#allocation4 + $0x18] sm:$0xff] %vm806, %v1107
      %1117 = vst.msk [vmem:[#allocation4 + $0x20] sm:$0xff] %vm806, %v1108
      %1118 = vst.msk [vmem:[#allocation4 + $0x28] sm:$0xff] %vm806, %v1109
      %1119 = vst.msk [vmem:[#allocation4 + $0x30] sm:$0xff] %vm806, %v1110
      %1120 = vst.msk [vmem:[#allocation4 + $0x38] sm:$0xff] %vm806, %v1111
      %1121 = vst.msk [vmem:[#allocation4 + $0x40] sm:$0xff] %vm806, %v1112
      %v1122 = vld [vmem:[#allocation4 + $0x4] sm:$0xff]
      %v1123 = vld [vmem:[#allocation4 + $0xc] sm:$0xff]
      %v1124 = vld [vmem:[#allocation4 + $0x14] sm:$0xff]
      %v1125 = vld [vmem:[#allocation4 + $0x1c] sm:$0xff]
      %v1126 = vld [vmem:[#allocation4 + $0x24] sm:$0xff]
      %v1127 = vld [vmem:[#allocation4 + $0x2c] sm:$0xff]
      %v1128 = vld [vmem:[#allocation4 + $0x34] sm:$0xff]
      %v1129 = vld [vmem:[#allocation4 + $0x3c] sm:$0xff]
      %v1130 = vpack.c.bf16 %v1123, %v1122
      %v1131 = vpack.c.bf16 %v1125, %v1124
      %v1132 = vpack.c.bf16 %v1127, %v1126
      %v1133 = vpack.c.bf16 %v1129, %v1128
      %1134 = vst.msk [vmem:[#allocation2] sm:$0xff] %vm806, %v1130
      %1135 = vst.msk [vmem:[#allocation2 + $0x10] sm:$0xff] %vm806, %v1131
      %1136 = vst.msk [vmem:[#allocation2 + $0x20] sm:$0xff] %vm806, %v1132
      %1137 = vst.msk [vmem:[#allocation2 + $0x30] sm:$0xff] %vm806, %v1133
      %v1138 = vld [vmem:[#allocation4 + $0x5] sm:$0xff]
      %v1139 = vld [vmem:[#allocation4 + $0xd] sm:$0xff]
      %v1140 = vld [vmem:[#allocation4 + $0x15] sm:$0xff]
      %v1141 = vld [vmem:[#allocation4 + $0x1d] sm:$0xff]
      %v1142 = vld [vmem:[#allocation4 + $0x25] sm:$0xff]
      %v1143 = vld [vmem:[#allocation4 + $0x2d] sm:$0xff]
      %v1144 = vld [vmem:[#allocation4 + $0x35] sm:$0xff]
      %v1145 = vld [vmem:[#allocation4 + $0x3d] sm:$0xff]
      %v1146 = vpack.c.bf16 %v1139, %v1138
      %v1147 = vpack.c.bf16 %v1141, %v1140
      %v1148 = vpack.c.bf16 %v1143, %v1142
      %v1149 = vpack.c.bf16 %v1145, %v1144
      %1154 = vrot.lane.b32.xlu0 %v1146, 32
      %v1155 = vpop.permute.xlu0 %1154
      %1156 = vrot.lane.b32.xlu0 %v1147, 32
      %v1157 = vpop.permute.xlu0 %1156
      %1158 = vrot.lane.b32.xlu0 %v1148, 32
      %v1159 = vpop.permute.xlu0 %1158
      %1160 = vrot.lane.b32.xlu0 %v1149, 32
      %v1161 = vpop.permute.xlu0 %1160
      %vm1166 = vcmask 523520
      %1167 = vst.msk [vmem:[#allocation2] sm:$0xff] %vm1166, %v1155
      %1168 = vst.msk [vmem:[#allocation2 + $0x10] sm:$0xff] %vm1166, %v1157
      %1169 = vst.msk [vmem:[#allocation2 + $0x20] sm:$0xff] %vm1166, %v1159
      %1170 = vst.msk [vmem:[#allocation2 + $0x30] sm:$0xff] %vm1166, %v1161
      %v1171 = vld [vmem:[#allocation4 + $0x6] sm:$0xff]
      %v1172 = vld [vmem:[#allocation4 + $0xe] sm:$0xff]
      %v1173 = vld [vmem:[#allocation4 + $0x16] sm:$0xff]
      %v1174 = vld [vmem:[#allocation4 + $0x1e] sm:$0xff]
      %v1175 = vld [vmem:[#allocation4 + $0x26] sm:$0xff]
      %v1176 = vld [vmem:[#allocation4 + $0x2e] sm:$0xff]
      %v1177 = vld [vmem:[#allocation4 + $0x36] sm:$0xff]
      %v1178 = vld [vmem:[#allocation4 + $0x3e] sm:$0xff]
      %v1179 = vpack.c.bf16 %v1172, %v1171
      %v1180 = vpack.c.bf16 %v1174, %v1173
      %v1181 = vpack.c.bf16 %v1176, %v1175
      %v1182 = vpack.c.bf16 %v1178, %v1177
      %1187 = vrot.lane.b32.xlu0 %v1179, 64
      %v1188 = vpop.permute.xlu0 %1187
      %1189 = vrot.lane.b32.xlu0 %v1180, 64
      %v1190 = vpop.permute.xlu0 %1189
      %1191 = vrot.lane.b32.xlu0 %v1181, 64
      %v1192 = vpop.permute.xlu0 %1191
      %1193 = vrot.lane.b32.xlu0 %v1182, 64
      %v1194 = vpop.permute.xlu0 %1193
      %vm1199 = vcmask 785920
      %1200 = vst.msk [vmem:[#allocation2] sm:$0xff] %vm1199, %v1188
      %1201 = vst.msk [vmem:[#allocation2 + $0x10] sm:$0xff] %vm1199, %v1190
      %1202 = vst.msk [vmem:[#allocation2 + $0x20] sm:$0xff] %vm1199, %v1192
      %1203 = vst.msk [vmem:[#allocation2 + $0x30] sm:$0xff] %vm1199, %v1194
      %v1204 = vld [vmem:[#allocation4 + $0x7] sm:$0xff]
      %v1205 = vld [vmem:[#allocation4 + $0xf] sm:$0xff]
      %v1206 = vld [vmem:[#allocation4 + $0x17] sm:$0xff]
      %v1207 = vld [vmem:[#allocation4 + $0x1f] sm:$0xff]
      %v1208 = vld [vmem:[#allocation4 + $0x27] sm:$0xff]
      %v1209 = vld [vmem:[#allocation4 + $0x2f] sm:$0xff]
      %v1210 = vld [vmem:[#allocation4 + $0x37] sm:$0xff]
      %v1211 = vld [vmem:[#allocation4 + $0x3f] sm:$0xff]
      %v1212 = vpack.c.bf16 %v1205, %v1204
      %v1213 = vpack.c.bf16 %v1207, %v1206
      %v1214 = vpack.c.bf16 %v1209, %v1208
      %v1215 = vpack.c.bf16 %v1211, %v1210
      %1220 = vrot.lane.b32.xlu0 %v1212, 96
      %v1221 = vpop.permute.xlu0 %1220
      %1222 = vrot.lane.b32.xlu0 %v1213, 96
      %v1223 = vpop.permute.xlu0 %1222
      %1224 = vrot.lane.b32.xlu0 %v1214, 96
      %v1225 = vpop.permute.xlu0 %1224
      %1226 = vrot.lane.b32.xlu0 %v1215, 96
      %v1227 = vpop.permute.xlu0 %1226
      %vm1232 = vcmask 1048320
      %1233 = vst.msk [vmem:[#allocation2] sm:$0xff] %vm1232, %v1221
      %1234 = vst.msk [vmem:[#allocation2 + $0x10] sm:$0xff] %vm1232, %v1223
      %1235 = vst.msk [vmem:[#allocation2 + $0x20] sm:$0xff] %vm1232, %v1225
      %1236 = vst.msk [vmem:[#allocation2 + $0x30] sm:$0xff] %vm1232, %v1227
      %v1237 = vld [vmem:[#allocation4 + $0x8] sm:$0xff]
      %v1238 = vld [vmem:[#allocation4 + $0x10] sm:$0xff]
      %v1239 = vld [vmem:[#allocation4 + $0x18] sm:$0xff]
      %v1240 = vld [vmem:[#allocation4 + $0x20] sm:$0xff]
      %v1241 = vld [vmem:[#allocation4 + $0x28] sm:$0xff]
      %v1242 = vld [vmem:[#allocation4 + $0x30] sm:$0xff]
      %v1243 = vld [vmem:[#allocation4 + $0x38] sm:$0xff]
      %v1244 = vld [vmem:[#allocation4 + $0x40] sm:$0xff]
      %v1245 = vpack.c.bf16 %v1238, %v1237
      %v1246 = vpack.c.bf16 %v1240, %v1239
      %v1247 = vpack.c.bf16 %v1242, %v1241
      %v1248 = vpack.c.bf16 %v1244, %v1243
      %1249 = vst.msk [vmem:[#allocation2 + $0x8] sm:$0xff] %vm806, %v1245
      %1250 = vst.msk [vmem:[#allocation2 + $0x18] sm:$0xff] %vm806, %v1246
      %1251 = vst.msk [vmem:[#allocation2 + $0x28] sm:$0xff] %vm806, %v1247
      %1252 = vst.msk [vmem:[#allocation2 + $0x38] sm:$0xff] %vm806, %v1248
      %v1253 = vld [vmem:[#allocation4 + $0x9] sm:$0xff]
      %v1254 = vld [vmem:[#allocation4 + $0x11] sm:$0xff]
      %v1255 = vld [vmem:[#allocation4 + $0x19] sm:$0xff]
      %v1256 = vld [vmem:[#allocation4 + $0x21] sm:$0xff]
      %v1257 = vld [vmem:[#allocation4 + $0x29] sm:$0xff]
      %v1258 = vld [vmem:[#allocation4 + $0x31] sm:$0xff]
      %v1259 = vld [vmem:[#allocation4 + $0x39] sm:$0xff]
      %v1260 = vld [vmem:[#allocation4 + $0x41] sm:$0xff]
      %v1261 = vpack.c.bf16 %v1254, %v1253
      %v1262 = vpack.c.bf16 %v1256, %v1255
      %v1263 = vpack.c.bf16 %v1258, %v1257
      %v1264 = vpack.c.bf16 %v1260, %v1259
      %1269 = vrot.lane.b32.xlu0 %v1261, 32
      %v1270 = vpop.permute.xlu0 %1269
      %1271 = vrot.lane.b32.xlu0 %v1262, 32
      %v1272 = vpop.permute.xlu0 %1271
      %1273 = vrot.lane.b32.xlu0 %v1263, 32
      %v1274 = vpop.permute.xlu0 %1273
      %1275 = vrot.lane.b32.xlu0 %v1264, 32
      %v1276 = vpop.permute.xlu0 %1275
      %1281 = vst.msk [vmem:[#allocation2 + $0x8] sm:$0xff] %vm1166, %v1270
      %1282 = vst.msk [vmem:[#allocation2 + $0x18] sm:$0xff] %vm1166, %v1272
      %1283 = vst.msk [vmem:[#allocation2 + $0x28] sm:$0xff] %vm1166, %v1274
      %1284 = vst.msk [vmem:[#allocation2 + $0x38] sm:$0xff] %vm1166, %v1276
      %v1285 = vld [vmem:[#allocation4 + $0xa] sm:$0xff]
      %v1286 = vld [vmem:[#allocation4 + $0x12] sm:$0xff]
      %v1287 = vld [vmem:[#allocation4 + $0x1a] sm:$0xff]
      %v1288 = vld [vmem:[#allocation4 + $0x22] sm:$0xff]
      %v1289 = vld [vmem:[#allocation4 + $0x2a] sm:$0xff]
      %v1290 = vld [vmem:[#allocation4 + $0x32] sm:$0xff]
      %v1291 = vld [vmem:[#allocation4 + $0x3a] sm:$0xff]
      %v1292 = vld [vmem:[#allocation4 + $0x42] sm:$0xff]
      %v1293 = vpack.c.bf16 %v1286, %v1285
      %v1294 = vpack.c.bf16 %v1288, %v1287
      %v1295 = vpack.c.bf16 %v1290, %v1289
      %v1296 = vpack.c.bf16 %v1292, %v1291
      %1301 = vrot.lane.b32.xlu0 %v1293, 64
      %v1302 = vpop.permute.xlu0 %1301
      %1303 = vrot.lane.b32.xlu0 %v1294, 64
      %v1304 = vpop.permute.xlu0 %1303
      %1305 = vrot.lane.b32.xlu0 %v1295, 64
      %v1306 = vpop.permute.xlu0 %1305
      %1307 = vrot.lane.b32.xlu0 %v1296, 64
      %v1308 = vpop.permute.xlu0 %1307
      %1313 = vst.msk [vmem:[#allocation2 + $0x8] sm:$0xff] %vm1199, %v1302
      %1314 = vst.msk [vmem:[#allocation2 + $0x18] sm:$0xff] %vm1199, %v1304
      %1315 = vst.msk [vmem:[#allocation2 + $0x28] sm:$0xff] %vm1199, %v1306
      %1316 = vst.msk [vmem:[#allocation2 + $0x38] sm:$0xff] %vm1199, %v1308
      %v1317 = vld [vmem:[#allocation4 + $0xb] sm:$0xff]
      %v1318 = vld [vmem:[#allocation4 + $0x13] sm:$0xff]
      %v1319 = vld [vmem:[#allocation4 + $0x1b] sm:$0xff]
      %v1320 = vld [vmem:[#allocation4 + $0x23] sm:$0xff]
      %v1321 = vld [vmem:[#allocation4 + $0x2b] sm:$0xff]
      %v1322 = vld [vmem:[#allocation4 + $0x33] sm:$0xff]
      %v1323 = vld [vmem:[#allocation4 + $0x3b] sm:$0xff]
      %v1324 = vld [vmem:[#allocation4 + $0x43] sm:$0xff]
      %v1325 = vpack.c.bf16 %v1318, %v1317
      %v1326 = vpack.c.bf16 %v1320, %v1319
      %v1327 = vpack.c.bf16 %v1322, %v1321
      %v1328 = vpack.c.bf16 %v1324, %v1323
      %1333 = vrot.lane.b32.xlu0 %v1325, 96
      %v1334 = vpop.permute.xlu0 %1333
      %1335 = vrot.lane.b32.xlu0 %v1326, 96
      %v1336 = vpop.permute.xlu0 %1335
      %1337 = vrot.lane.b32.xlu0 %v1327, 96
      %v1338 = vpop.permute.xlu0 %1337
      %1339 = vrot.lane.b32.xlu0 %v1328, 96
      %v1340 = vpop.permute.xlu0 %1339
      %1345 = vst.msk [vmem:[#allocation2 + $0x8] sm:$0xff] %vm1232, %v1334
      %1346 = vst.msk [vmem:[#allocation2 + $0x18] sm:$0xff] %vm1232, %v1336
      %1347 = vst.msk [vmem:[#allocation2 + $0x28] sm:$0xff] %vm1232, %v1338
      %1348 = vst.msk [vmem:[#allocation2 + $0x38] sm:$0xff] %vm1232, %v1340
      %v1349 = vld [vmem:[#allocation2] sm:$0xff]
      %v1350 = vld [vmem:[#allocation2 + $0x8] sm:$0xff]
      %v1351 = vld [vmem:[#allocation2 + $0x10] sm:$0xff]
      %v1352 = vld [vmem:[#allocation2 + $0x18] sm:$0xff]
      %v1353 = vld [vmem:[#allocation2 + $0x20] sm:$0xff]
      %v1354 = vld [vmem:[#allocation2 + $0x28] sm:$0xff]
      %v1355 = vld [vmem:[#allocation2 + $0x30] sm:$0xff]
      %v1356 = vld [vmem:[#allocation2 + $0x38] sm:$0xff]
      %v1357 = vld [vmem:[%s680] sm:$0xf]
      %v1358 = vld [vmem:[%s680 + $0x4] sm:$0xf]
      %v1359 = vld [vmem:[%s680 + $0x8] sm:$0xf]
      %v1360 = vld [vmem:[%s680 + $0xc] sm:$0xf]
      %v1361 = vld [vmem:[%s680 + $0x10] sm:$0xf]
      %v1362 = vld [vmem:[%s680 + $0x14] sm:$0xf]
      %v1363 = vld [vmem:[%s680 + $0x18] sm:$0xf]
      %v1364 = vld [vmem:[%s680 + $0x1c] sm:$0xf]
      %v1365 = vld [vmem:[%s680 + $0x20] sm:$0xf]
      %v1366 = vld [vmem:[%s680 + $0x24] sm:$0xf]
      %v1367 = vld [vmem:[%s680 + $0x28] sm:$0xf]
      %v1368 = vld [vmem:[%s680 + $0x2c] sm:$0xf]
      %v1369 = vld [vmem:[%s680 + $0x30] sm:$0xf]
      %v1370 = vld [vmem:[%s680 + $0x34] sm:$0xf]
      %v1371 = vld [vmem:[%s680 + $0x38] sm:$0xf]
      %v1372 = vld [vmem:[%s680 + $0x3c] sm:$0xf]
      %v1373 = vld [vmem:[%s680 + $0x40] sm:$0xf]
      %v1374 = vld [vmem:[%s680 + $0x44] sm:$0xf]
      %v1375 = vld [vmem:[%s680 + $0x48] sm:$0xf]
      %v1376 = vld [vmem:[%s680 + $0x4c] sm:$0xf]
      %v1377 = vld [vmem:[%s680 + $0x50] sm:$0xf]
      %v1378 = vld [vmem:[%s680 + $0x54] sm:$0xf]
      %v1379 = vld [vmem:[%s680 + $0x58] sm:$0xf]
      %v1380 = vld [vmem:[%s680 + $0x5c] sm:$0xf]
      %v1381 = vld [vmem:[%s680 + $0x60] sm:$0xf]
      %v1382 = vld [vmem:[%s680 + $0x64] sm:$0xf]
      %v1383 = vld [vmem:[%s680 + $0x68] sm:$0xf]
      %v1384 = vld [vmem:[%s680 + $0x6c] sm:$0xf]
      %v1385 = vld [vmem:[%s680 + $0x70] sm:$0xf]
      %v1386 = vld [vmem:[%s680 + $0x74] sm:$0xf]
      %v1387 = vld [vmem:[%s680 + $0x78] sm:$0xf]
      %v1388 = vld [vmem:[%s680 + $0x7c] sm:$0xf]
      %v1389 = vld [vmem:[%s683] sm:$0x1]
      %v1391 = vlaneseq
      %v1392 = vshrl.u32 %v1391, 7
      %v1393 = vsub.s32 0, %v1392
      %v1394 = vrot.slane %v1389, %v1393
      %v1428 = vunpack.c.l.b16 %v1357
      %v1429 = vunpack.c.l.b16 %v1358
      %v1430 = vunpack.c.l.b16 %v1359
      %v1431 = vunpack.c.l.b16 %v1360
      %v1432 = vunpack.c.l.b16 %v1361
      %v1433 = vunpack.c.l.b16 %v1362
      %v1434 = vunpack.c.l.b16 %v1363
      %v1435 = vunpack.c.l.b16 %v1364
      %v1436 = vunpack.c.l.b16 %v1365
      %v1437 = vunpack.c.l.b16 %v1366
      %v1438 = vunpack.c.l.b16 %v1367
      %v1439 = vunpack.c.l.b16 %v1368
      %v1440 = vunpack.c.l.b16 %v1369
      %v1441 = vunpack.c.l.b16 %v1370
      %v1442 = vunpack.c.l.b16 %v1371
      %v1443 = vunpack.c.l.b16 %v1372
      %v1444 = vunpack.c.l.b16 %v1373
      %v1445 = vunpack.c.l.b16 %v1374
      %v1446 = vunpack.c.l.b16 %v1375
      %v1447 = vunpack.c.l.b16 %v1376
      %v1448 = vunpack.c.l.b16 %v1377
      %v1449 = vunpack.c.l.b16 %v1378
      %v1450 = vunpack.c.l.b16 %v1379
      %v1451 = vunpack.c.l.b16 %v1380
      %v1452 = vunpack.c.l.b16 %v1381
      %v1453 = vunpack.c.l.b16 %v1382
      %v1454 = vunpack.c.l.b16 %v1383
      %v1455 = vunpack.c.l.b16 %v1384
      %v1456 = vunpack.c.l.b16 %v1385
      %v1457 = vunpack.c.l.b16 %v1386
      %v1458 = vunpack.c.l.b16 %v1387
      %v1459 = vunpack.c.l.b16 %v1388
      %v1460 = vpack.c.b16 %v1429, %v1428
      %v1461 = vpack.c.b16 %v1431, %v1430
      %v1462 = vpack.c.b16 %v1433, %v1432
      %v1463 = vpack.c.b16 %v1435, %v1434
      %v1464 = vpack.c.b16 %v1437, %v1436
      %v1465 = vpack.c.b16 %v1439, %v1438
      %v1466 = vpack.c.b16 %v1441, %v1440
      %v1467 = vpack.c.b16 %v1443, %v1442
      %v1468 = vpack.c.b16 %v1445, %v1444
      %v1469 = vpack.c.b16 %v1447, %v1446
      %v1470 = vpack.c.b16 %v1449, %v1448
      %v1471 = vpack.c.b16 %v1451, %v1450
      %v1472 = vpack.c.b16 %v1453, %v1452
      %v1473 = vpack.c.b16 %v1455, %v1454
      %v1474 = vpack.c.b16 %v1457, %v1456
      %v1475 = vpack.c.b16 %v1459, %v1458
      %1492 = vmatprep.subr.bf16.mxu0 0
      %1493 = vmatpush1.bf16.msra.mxu0 %v1460
      %1494 = vmatprep.subr.bf16.mxu0 0
      %1495 = vmatpush1.bf16.msra.mxu0 %v1461
      %1496 = vmatprep.subr.bf16.mxu0 0
      %1497 = vmatpush1.bf16.msra.mxu0 %v1462
      %1498 = vmatprep.subr.bf16.mxu0 0
      %1499 = vmatpush1.bf16.msra.mxu0 %v1463
      %1500 = vmatprep.subr.bf16.mxu0 0
      %1501 = vmatpush1.bf16.msra.mxu0 %v1464
      %1502 = vmatprep.subr.bf16.mxu0 0
      %1503 = vmatpush1.bf16.msra.mxu0 %v1465
      %1504 = vmatprep.subr.bf16.mxu0 0
      %1505 = vmatpush1.bf16.msra.mxu0 %v1466
      %1506 = vmatprep.subr.bf16.mxu0 0
      %1507 = vmatpush1.bf16.msra.mxu0 %v1467
      %1508 = vmatprep.subr.bf16.mxu0 0
      %1509 = vmatpush1.bf16.msra.mxu0 %v1468
      %1510 = vmatprep.subr.bf16.mxu0 0
      %1511 = vmatpush1.bf16.msra.mxu0 %v1469
      %1512 = vmatprep.subr.bf16.mxu0 0
      %1513 = vmatpush1.bf16.msra.mxu0 %v1470
      %1514 = vmatprep.subr.bf16.mxu0 0
      %1515 = vmatpush1.bf16.msra.mxu0 %v1471
      %1516 = vmatprep.subr.bf16.mxu0 0
      %1517 = vmatpush1.bf16.msra.mxu0 %v1472
      %1518 = vmatprep.subr.bf16.mxu0 0
      %1519 = vmatpush1.bf16.msra.mxu0 %v1473
      %1520 = vmatprep.subr.bf16.mxu0 0
      %1521 = vmatpush1.bf16.msra.mxu0 %v1474
      %1522 = vmatprep.subr.bf16.mxu0 0
      %1523 = vmatpush1.bf16.msra.mxu0 %v1475
      %1524 = vmatprep.mubr.bf16.mxu0 %v1350
      %1525 = vmatmul.mubr.bf16.gmra.mrb[0].mxu0 %v1349
      %v1526 = vpop.f32.mrb[0].mxu0
      %v1527 = vadd.f32 %v1394, %v1526
      %v1528 = vpop.f32.mrb[0].mxu0
      %v1529 = vpop.f32.mrb[0].mxu0
      %v1530 = vadd.f32 %v1394, %v1529
      %v1531 = vpop.f32.mrb[0].mxu0
      %1532 = vmatprep.mubr.bf16.mxu0 %v1352
      %1533 = vmatmul.mubr.bf16.gmra.mrb[0].mxu0 %v1351
      %v1534 = vpop.f32.mrb[0].mxu0
      %v1535 = vadd.f32 %v1394, %v1534
      %v1536 = vpop.f32.mrb[0].mxu0
      %v1537 = vpop.f32.mrb[0].mxu0
      %v1538 = vadd.f32 %v1394, %v1537
      %v1539 = vpop.f32.mrb[0].mxu0
      %1540 = vmatprep.mubr.bf16.mxu0 %v1354
      %1541 = vmatmul.mubr.bf16.gmra.mrb[0].mxu0 %v1353
      %v1542 = vpop.f32.mrb[0].mxu0
      %v1543 = vadd.f32 %v1394, %v1542
      %v1544 = vpop.f32.mrb[0].mxu0
      %v1545 = vpop.f32.mrb[0].mxu0
      %v1546 = vadd.f32 %v1394, %v1545
      %v1547 = vpop.f32.mrb[0].mxu0
      %1548 = vmatprep.mubr.bf16.mxu0 %v1356
      %1549 = vmatmul.mubr.bf16.gmra.mrb[0].mxu0 %v1355
      %v1550 = vpop.f32.mrb[0].mxu0
      %v1551 = vadd.f32 %v1394, %v1550
      %v1552 = vpop.f32.mrb[0].mxu0
      %v1553 = vpop.f32.mrb[0].mxu0
      %v1554 = vadd.f32 %v1394, %v1553
      %v1555 = vpop.f32.mrb[0].mxu0
      %1556 = vdwg.mxu0
      %v1557 = vmax.f32 %v1527, 0.0
      %v1558 = vmax.f32 %v1530, 0.0
      %v1559 = vmax.f32 %v1535, 0.0
      %v1560 = vmax.f32 %v1538, 0.0
      %v1561 = vmax.f32 %v1543, 0.0
      %v1562 = vmax.f32 %v1546, 0.0
      %v1563 = vmax.f32 %v1551, 0.0
      %v1564 = vmax.f32 %v1554, 0.0
      %v1565 = vld [vmem:[%s2] sm:$0xff]
      %v1566 = vld [vmem:[%s2 + $0x8] sm:$0xff]
      %v1567 = vld [vmem:[%s2 + $0x10] sm:$0xff]
      %v1568 = vld [vmem:[%s2 + $0x18] sm:$0xff]
      %v1569 = vld [vmem:[%s2 + $0x20] sm:$0xff]
      %v1570 = vld [vmem:[%s2 + $0x28] sm:$0xff]
      %v1571 = vld [vmem:[%s2 + $0x30] sm:$0xff]
      %v1572 = vld [vmem:[%s2 + $0x38] sm:$0xff]
      %1574 = vset.pattern.permute.xlu0 0
      %1575 = vperm.xlu0 %1574, %v1565
      %v1576 = vpop.permute.xlu0 %1575
      %1579 = vset.pattern.permute.xlu0 0
      %1580 = vperm.xlu0 %1579, %v1566
      %v1581 = vpop.permute.xlu0 %1580
      %1584 = vset.pattern.permute.xlu0 0
      %1585 = vperm.xlu0 %1584, %v1567
      %v1586 = vpop.permute.xlu0 %1585
      %1589 = vset.pattern.permute.xlu0 0
      %1590 = vperm.xlu0 %1589, %v1568
      %v1591 = vpop.permute.xlu0 %1590
      %1594 = vset.pattern.permute.xlu0 0
      %1595 = vperm.xlu0 %1594, %v1569
      %v1596 = vpop.permute.xlu0 %1595
      %1599 = vset.pattern.permute.xlu0 0
      %1600 = vperm.xlu0 %1599, %v1570
      %v1601 = vpop.permute.xlu0 %1600
      %1604 = vset.pattern.permute.xlu0 0
      %1605 = vperm.xlu0 %1604, %v1571
      %v1606 = vpop.permute.xlu0 %1605
      %1609 = vset.pattern.permute.xlu0 0
      %1610 = vperm.xlu0 %1609, %v1572
      %v1611 = vpop.permute.xlu0 %1610
      %v1613 = vmul.f32 %v1557, %v1576
      %v1614 = vmul.f32 %v1558, %v1581
      %v1615 = vmul.f32 %v1559, %v1586
      %v1616 = vmul.f32 %v1560, %v1591
      %v1617 = vmul.f32 %v1561, %v1596
      %v1618 = vmul.f32 %v1562, %v1601
      %v1619 = vmul.f32 %v1563, %v1606
      %v1620 = vmul.f32 %v1564, %v1611
      %vm1621 = vcmask 523264
      %1622 = vst.msk [vmem:[#allocation7] sm:$0xff] %vm1621, 0.0
      %1623 = vst.msk [vmem:[#allocation7 + $0x8] sm:$0xff] %vm1621, %v1613
      %1624 = vst.msk [vmem:[#allocation7 + $0x10] sm:$0xff] %vm1621, %v1614
      %1625 = vst.msk [vmem:[#allocation7 + $0x18] sm:$0xff] %vm1621, %v1615
      %1626 = vst.msk [vmem:[#allocation7 + $0x20] sm:$0xff] %vm1621, %v1616
      %1627 = vst.msk [vmem:[#allocation7 + $0x28] sm:$0xff] %vm1621, %v1617
      %1628 = vst.msk [vmem:[#allocation7 + $0x30] sm:$0xff] %vm1621, %v1618
      %1629 = vst.msk [vmem:[#allocation7 + $0x38] sm:$0xff] %vm1621, %v1619
      %1630 = vst.msk [vmem:[#allocation7 + $0x40] sm:$0xff] %vm1621, %v1620
      %s1631 = scalar_lea.vmem [#allocation7], 7
      %v1632 = vld [vmem:[%s1631] ss:$2 sm:$0xff]
      %s1633 = scalar_lea.vmem [#allocation7], 23
      %v1634 = vld [vmem:[%s1633] ss:$2 sm:$0xff]
      %s1635 = scalar_lea.vmem [#allocation7], 39
      %v1636 = vld [vmem:[%s1635] ss:$2 sm:$0xff]
      %s1637 = scalar_lea.vmem [#allocation7], 55
      %v1638 = vld [vmem:[%s1637] ss:$2 sm:$0xff]
      %s1639 = scalar_lea.vmem [#allocation7], 8
      %v1640 = vld [vmem:[%s1639] ss:$2 sm:$0xff]
      %s1641 = scalar_lea.vmem [#allocation7], 24
      %v1642 = vld [vmem:[%s1641] ss:$2 sm:$0xff]
      %s1643 = scalar_lea.vmem [#allocation7], 40
      %v1644 = vld [vmem:[%s1643] ss:$2 sm:$0xff]
      %s1645 = scalar_lea.vmem [#allocation7], 56
      %v1646 = vld [vmem:[%s1645] ss:$2 sm:$0xff]
      %v1647 = vmax.f32 %v1632, %v1640
      %v1648 = vmax.f32 %v1634, %v1642
      %v1649 = vmax.f32 %v1636, %v1644
      %v1650 = vmax.f32 %v1638, %v1646
      %1651 = vst.msk [vmem:[#allocation5] sm:$0xff] %vm1621, 0.0
      %1652 = vst.msk [vmem:[#allocation5 + $0x8] sm:$0xff] %vm1621, %v1647
      %1653 = vst.msk [vmem:[#allocation5 + $0x10] sm:$0xff] %vm1621, %v1648
      %1654 = vst.msk [vmem:[#allocation5 + $0x18] sm:$0xff] %vm1621, %v1649
      %1655 = vst.msk [vmem:[#allocation5 + $0x20] sm:$0xff] %vm1621, %v1650
      %v1656 = vld [vmem:[#allocation5 + $0x4] sm:$0xff]
      %v1657 = vld [vmem:[#allocation5 + $0xc] sm:$0xff]
      %v1658 = vld [vmem:[#allocation5 + $0x14] sm:$0xff]
      %v1659 = vld [vmem:[#allocation5 + $0x1c] sm:$0xff]
      %v1660 = vpack.c.bf16 %v1657, %v1656
      %v1661 = vpack.c.bf16 %v1659, %v1658
      %1662 = vst.msk [vmem:[#allocation3] sm:$0xff] %vm1621, %v1660
      %1663 = vst.msk [vmem:[#allocation3 + $0x20] sm:$0xff] %vm1621, %v1661
      %v1664 = vld [vmem:[#allocation5 + $0x5] sm:$0xff]
      %v1665 = vld [vmem:[#allocation5 + $0xd] sm:$0xff]
      %v1666 = vld [vmem:[#allocation5 + $0x15] sm:$0xff]
      %v1667 = vld [vmem:[#allocation5 + $0x1d] sm:$0xff]
      %v1668 = vpack.c.bf16 %v1665, %v1664
      %v1669 = vpack.c.bf16 %v1667, %v1666
      %1672 = vrot.lane.b32.xlu0 %v1668, 64
      %v1673 = vpop.permute.xlu0 %1672
      %1674 = vrot.lane.b32.xlu0 %v1669, 64
      %v1675 = vpop.permute.xlu0 %1674
      %vm1678 = vcmask 1048064
      %1679 = vst.msk [vmem:[#allocation3] sm:$0xff] %vm1678, %v1673
      %1680 = vst.msk [vmem:[#allocation3 + $0x20] sm:$0xff] %vm1678, %v1675
      %v1681 = vld [vmem:[#allocation5 + $0x6] sm:$0xff]
      %v1682 = vld [vmem:[#allocation5 + $0xe] sm:$0xff]
      %v1683 = vld [vmem:[#allocation5 + $0x16] sm:$0xff]
      %v1684 = vld [vmem:[#allocation5 + $0x1e] sm:$0xff]
      %v1685 = vpack.c.bf16 %v1682, %v1681
      %v1686 = vpack.c.bf16 %v1684, %v1683
      %1687 = vst.msk [vmem:[#allocation3 + $0x8] sm:$0xff] %vm1621, %v1685
      %1688 = vst.msk [vmem:[#allocation3 + $0x28] sm:$0xff] %vm1621, %v1686
      %v1689 = vld [vmem:[#allocation5 + $0x7] sm:$0xff]
      %v1690 = vld [vmem:[#allocation5 + $0xf] sm:$0xff]
      %v1691 = vld [vmem:[#allocation5 + $0x17] sm:$0xff]
      %v1692 = vld [vmem:[#allocation5 + $0x1f] sm:$0xff]
      %v1693 = vpack.c.bf16 %v1690, %v1689
      %v1694 = vpack.c.bf16 %v1692, %v1691
      %1697 = vrot.lane.b32.xlu0 %v1693, 64
      %v1698 = vpop.permute.xlu0 %1697
      %1699 = vrot.lane.b32.xlu0 %v1694, 64
      %v1700 = vpop.permute.xlu0 %1699
      %1703 = vst.msk [vmem:[#allocation3 + $0x8] sm:$0xff] %vm1678, %v1698
      %1704 = vst.msk [vmem:[#allocation3 + $0x28] sm:$0xff] %vm1678, %v1700
      %v1705 = vld [vmem:[#allocation5 + $0x8] sm:$0xff]
      %v1706 = vld [vmem:[#allocation5 + $0x10] sm:$0xff]
      %v1707 = vld [vmem:[#allocation5 + $0x18] sm:$0xff]
      %v1708 = vld [vmem:[#allocation5 + $0x20] sm:$0xff]
      %v1709 = vpack.c.bf16 %v1706, %v1705
      %v1710 = vpack.c.bf16 %v1708, %v1707
      %1711 = vst.msk [vmem:[#allocation3 + $0x10] sm:$0xff] %vm1621, %v1709
      %1712 = vst.msk [vmem:[#allocation3 + $0x30] sm:$0xff] %vm1621, %v1710
      %v1713 = vld [vmem:[#allocation5 + $0x9] sm:$0xff]
      %v1714 = vld [vmem:[#allocation5 + $0x11] sm:$0xff]
      %v1715 = vld [vmem:[#allocation5 + $0x19] sm:$0xff]
      %v1716 = vld [vmem:[#allocation5 + $0x21] sm:$0xff]
      %v1717 = vpack.c.bf16 %v1714, %v1713
      %v1718 = vpack.c.bf16 %v1716, %v1715
      %1721 = vrot.lane.b32.xlu0 %v1717, 64
      %v1722 = vpop.permute.xlu0 %1721
      %1723 = vrot.lane.b32.xlu0 %v1718, 64
      %v1724 = vpop.permute.xlu0 %1723
      %1727 = vst.msk [vmem:[#allocation3 + $0x10] sm:$0xff] %vm1678, %v1722
      %1728 = vst.msk [vmem:[#allocation3 + $0x30] sm:$0xff] %vm1678, %v1724
      %v1729 = vld [vmem:[#allocation5 + $0xa] sm:$0xff]
      %v1730 = vld [vmem:[#allocation5 + $0x12] sm:$0xff]
      %v1731 = vld [vmem:[#allocation5 + $0x1a] sm:$0xff]
      %v1732 = vld [vmem:[#allocation5 + $0x22] sm:$0xff]
      %v1733 = vpack.c.bf16 %v1730, %v1729
      %v1734 = vpack.c.bf16 %v1732, %v1731
      %1735 = vst.msk [vmem:[#allocation3 + $0x18] sm:$0xff] %vm1621, %v1733
      %1736 = vst.msk [vmem:[#allocation3 + $0x38] sm:$0xff] %vm1621, %v1734
      %v1737 = vld [vmem:[#allocation5 + $0xb] sm:$0xff]
      %v1738 = vld [vmem:[#allocation5 + $0x13] sm:$0xff]
      %v1739 = vld [vmem:[#allocation5 + $0x1b] sm:$0xff]
      %v1740 = vld [vmem:[#allocation5 + $0x23] sm:$0xff]
      %v1741 = vpack.c.bf16 %v1738, %v1737
      %v1742 = vpack.c.bf16 %v1740, %v1739
      %1745 = vrot.lane.b32.xlu0 %v1741, 64
      %v1746 = vpop.permute.xlu0 %1745
      %1747 = vrot.lane.b32.xlu0 %v1742, 64
      %v1748 = vpop.permute.xlu0 %1747
      %1751 = vst.msk [vmem:[#allocation3 + $0x18] sm:$0xff] %vm1678, %v1746
      %1752 = vst.msk [vmem:[#allocation3 + $0x38] sm:$0xff] %vm1678, %v1748
      %v1753 = vld [vmem:[#allocation3] sm:$0xff]
      %v1754 = vld [vmem:[#allocation3 + $0x8] sm:$0xff]
      %v1755 = vld [vmem:[#allocation3 + $0x10] sm:$0xff]
      %v1756 = vld [vmem:[#allocation3 + $0x18] sm:$0xff]
      %v1757 = vld [vmem:[#allocation3 + $0x20] sm:$0xff]
      %v1758 = vld [vmem:[#allocation3 + $0x28] sm:$0xff]
      %v1759 = vld [vmem:[#allocation3 + $0x30] sm:$0xff]
      %v1760 = vld [vmem:[#allocation3 + $0x38] sm:$0xff]
      %v1761 = vld [vmem:[%s688] sm:$0xf]
      %v1762 = vld [vmem:[%s688 + $0x4] sm:$0xf]
      %v1763 = vld [vmem:[%s688 + $0x8] sm:$0xf]
      %v1764 = vld [vmem:[%s688 + $0xc] sm:$0xf]
      %v1765 = vld [vmem:[%s688 + $0x10] sm:$0xf]
      %v1766 = vld [vmem:[%s688 + $0x14] sm:$0xf]
      %v1767 = vld [vmem:[%s688 + $0x18] sm:$0xf]
      %v1768 = vld [vmem:[%s688 + $0x1c] sm:$0xf]
      %v1769 = vld [vmem:[%s688 + $0x20] sm:$0xf]
      %v1770 = vld [vmem:[%s688 + $0x24] sm:$0xf]
      %v1771 = vld [vmem:[%s688 + $0x28] sm:$0xf]
      %v1772 = vld [vmem:[%s688 + $0x2c] sm:$0xf]
      %v1773 = vld [vmem:[%s688 + $0x30] sm:$0xf]
      %v1774 = vld [vmem:[%s688 + $0x34] sm:$0xf]
      %v1775 = vld [vmem:[%s688 + $0x38] sm:$0xf]
      %v1776 = vld [vmem:[%s688 + $0x3c] sm:$0xf]
      %v1777 = vld [vmem:[%s688 + $0x40] sm:$0xf]
      %v1778 = vld [vmem:[%s688 + $0x44] sm:$0xf]
      %v1779 = vld [vmem:[%s688 + $0x48] sm:$0xf]
      %v1780 = vld [vmem:[%s688 + $0x4c] sm:$0xf]
      %v1781 = vld [vmem:[%s688 + $0x50] sm:$0xf]
      %v1782 = vld [vmem:[%s688 + $0x54] sm:$0xf]
      %v1783 = vld [vmem:[%s688 + $0x58] sm:$0xf]
      %v1784 = vld [vmem:[%s688 + $0x5c] sm:$0xf]
      %v1785 = vld [vmem:[%s688 + $0x60] sm:$0xf]
      %v1786 = vld [vmem:[%s688 + $0x64] sm:$0xf]
      %v1787 = vld [vmem:[%s688 + $0x68] sm:$0xf]
      %v1788 = vld [vmem:[%s688 + $0x6c] sm:$0xf]
      %v1789 = vld [vmem:[%s688 + $0x70] sm:$0xf]
      %v1790 = vld [vmem:[%s688 + $0x74] sm:$0xf]
      %v1791 = vld [vmem:[%s688 + $0x78] sm:$0xf]
      %v1792 = vld [vmem:[%s688 + $0x7c] sm:$0xf]
      %v1793 = vld [vmem:[%s688 + $0x80] sm:$0xf]
      %v1794 = vld [vmem:[%s688 + $0x84] sm:$0xf]
      %v1795 = vld [vmem:[%s688 + $0x88] sm:$0xf]
      %v1796 = vld [vmem:[%s688 + $0x8c] sm:$0xf]
      %v1797 = vld [vmem:[%s688 + $0x90] sm:$0xf]
      %v1798 = vld [vmem:[%s688 + $0x94] sm:$0xf]
      %v1799 = vld [vmem:[%s688 + $0x98] sm:$0xf]
      %v1800 = vld [vmem:[%s688 + $0x9c] sm:$0xf]
      %v1801 = vld [vmem:[%s688 + $0xa0] sm:$0xf]
      %v1802 = vld [vmem:[%s688 + $0xa4] sm:$0xf]
      %v1803 = vld [vmem:[%s688 + $0xa8] sm:$0xf]
      %v1804 = vld [vmem:[%s688 + $0xac] sm:$0xf]
      %v1805 = vld [vmem:[%s688 + $0xb0] sm:$0xf]
      %v1806 = vld [vmem:[%s688 + $0xb4] sm:$0xf]
      %v1807 = vld [vmem:[%s688 + $0xb8] sm:$0xf]
      %v1808 = vld [vmem:[%s688 + $0xbc] sm:$0xf]
      %v1809 = vld [vmem:[%s688 + $0xc0] sm:$0xf]
      %v1810 = vld [vmem:[%s688 + $0xc4] sm:$0xf]
      %v1811 = vld [vmem:[%s688 + $0xc8] sm:$0xf]
      %v1812 = vld [vmem:[%s688 + $0xcc] sm:$0xf]
      %v1813 = vld [vmem:[%s688 + $0xd0] sm:$0xf]
      %v1814 = vld [vmem:[%s688 + $0xd4] sm:$0xf]
      %v1815 = vld [vmem:[%s688 + $0xd8] sm:$0xf]
      %v1816 = vld [vmem:[%s688 + $0xdc] sm:$0xf]
      %v1817 = vld [vmem:[%s688 + $0xe0] sm:$0xf]
      %v1818 = vld [vmem:[%s688 + $0xe4] sm:$0xf]
      %v1819 = vld [vmem:[%s688 + $0xe8] sm:$0xf]
      %v1820 = vld [vmem:[%s688 + $0xec] sm:$0xf]
      %v1821 = vld [vmem:[%s688 + $0xf0] sm:$0xf]
      %v1822 = vld [vmem:[%s688 + $0xf4] sm:$0xf]
      %v1823 = vld [vmem:[%s688 + $0xf8] sm:$0xf]
      %v1824 = vld [vmem:[%s688 + $0xfc] sm:$0xf]
      %v1825 = vld [vmem:[%s691] sm:$0x1]
      %v1827 = vlaneseq
      %v1828 = vshrl.u32 %v1827, 7
      %v1829 = vsub.s32 0, %v1828
      %v1830 = vrot.slane %v1825, %v1829
      %v1896 = vunpack.c.l.b16 %v1761
      %v1897 = vunpack.c.l.b16 %v1762
      %v1898 = vunpack.c.l.b16 %v1763
      %v1899 = vunpack.c.l.b16 %v1764
      %v1900 = vunpack.c.l.b16 %v1765
      %v1901 = vunpack.c.l.b16 %v1766
      %v1902 = vunpack.c.l.b16 %v1767
      %v1903 = vunpack.c.l.b16 %v1768
      %v1904 = vunpack.c.l.b16 %v1769
      %v1905 = vunpack.c.l.b16 %v1770
      %v1906 = vunpack.c.l.b16 %v1771
      %v1907 = vunpack.c.l.b16 %v1772
      %v1908 = vunpack.c.l.b16 %v1773
      %v1909 = vunpack.c.l.b16 %v1774
      %v1910 = vunpack.c.l.b16 %v1775
      %v1911 = vunpack.c.l.b16 %v1776
      %v1912 = vunpack.c.l.b16 %v1777
      %v1913 = vunpack.c.l.b16 %v1778
      %v1914 = vunpack.c.l.b16 %v1779
      %v1915 = vunpack.c.l.b16 %v1780
      %v1916 = vunpack.c.l.b16 %v1781
      %v1917 = vunpack.c.l.b16 %v1782
      %v1918 = vunpack.c.l.b16 %v1783
      %v1919 = vunpack.c.l.b16 %v1784
      %v1920 = vunpack.c.l.b16 %v1785
      %v1921 = vunpack.c.l.b16 %v1786
      %v1922 = vunpack.c.l.b16 %v1787
      %v1923 = vunpack.c.l.b16 %v1788
      %v1924 = vunpack.c.l.b16 %v1789
      %v1925 = vunpack.c.l.b16 %v1790
      %v1926 = vunpack.c.l.b16 %v1791
      %v1927 = vunpack.c.l.b16 %v1792
      %v1928 = vunpack.c.l.b16 %v1793
      %v1929 = vunpack.c.l.b16 %v1794
      %v1930 = vunpack.c.l.b16 %v1795
      %v1931 = vunpack.c.l.b16 %v1796
      %v1932 = vunpack.c.l.b16 %v1797
      %v1933 = vunpack.c.l.b16 %v1798
      %v1934 = vunpack.c.l.b16 %v1799
      %v1935 = vunpack.c.l.b16 %v1800
      %v1936 = vunpack.c.l.b16 %v1801
      %v1937 = vunpack.c.l.b16 %v1802
      %v1938 = vunpack.c.l.b16 %v1803
      %v1939 = vunpack.c.l.b16 %v1804
      %v1940 = vunpack.c.l.b16 %v1805
      %v1941 = vunpack.c.l.b16 %v1806
      %v1942 = vunpack.c.l.b16 %v1807
      %v1943 = vunpack.c.l.b16 %v1808
      %v1944 = vunpack.c.l.b16 %v1809
      %v1945 = vunpack.c.l.b16 %v1810
      %v1946 = vunpack.c.l.b16 %v1811
      %v1947 = vunpack.c.l.b16 %v1812
      %v1948 = vunpack.c.l.b16 %v1813
      %v1949 = vunpack.c.l.b16 %v1814
      %v1950 = vunpack.c.l.b16 %v1815
      %v1951 = vunpack.c.l.b16 %v1816
      %v1952 = vunpack.c.l.b16 %v1817
      %v1953 = vunpack.c.l.b16 %v1818
      %v1954 = vunpack.c.l.b16 %v1819
      %v1955 = vunpack.c.l.b16 %v1820
      %v1956 = vunpack.c.l.b16 %v1821
      %v1957 = vunpack.c.l.b16 %v1822
      %v1958 = vunpack.c.l.b16 %v1823
      %v1959 = vunpack.c.l.b16 %v1824
      %v1960 = vpack.c.b16 %v1897, %v1896
      %v1961 = vpack.c.b16 %v1899, %v1898
      %v1962 = vpack.c.b16 %v1901, %v1900
      %v1963 = vpack.c.b16 %v1903, %v1902
      %v1964 = vpack.c.b16 %v1905, %v1904
      %v1965 = vpack.c.b16 %v1907, %v1906
      %v1966 = vpack.c.b16 %v1909, %v1908
      %v1967 = vpack.c.b16 %v1911, %v1910
      %v1968 = vpack.c.b16 %v1913, %v1912
      %v1969 = vpack.c.b16 %v1915, %v1914
      %v1970 = vpack.c.b16 %v1917, %v1916
      %v1971 = vpack.c.b16 %v1919, %v1918
      %v1972 = vpack.c.b16 %v1921, %v1920
      %v1973 = vpack.c.b16 %v1923, %v1922
      %v1974 = vpack.c.b16 %v1925, %v1924
      %v1975 = vpack.c.b16 %v1927, %v1926
      %v1976 = vpack.c.b16 %v1929, %v1928
      %v1977 = vpack.c.b16 %v1931, %v1930
      %v1978 = vpack.c.b16 %v1933, %v1932
      %v1979 = vpack.c.b16 %v1935, %v1934
      %v1980 = vpack.c.b16 %v1937, %v1936
      %v1981 = vpack.c.b16 %v1939, %v1938
      %v1982 = vpack.c.b16 %v1941, %v1940
      %v1983 = vpack.c.b16 %v1943, %v1942
      %v1984 = vpack.c.b16 %v1945, %v1944
      %v1985 = vpack.c.b16 %v1947, %v1946
      %v1986 = vpack.c.b16 %v1949, %v1948
      %v1987 = vpack.c.b16 %v1951, %v1950
      %v1988 = vpack.c.b16 %v1953, %v1952
      %v1989 = vpack.c.b16 %v1955, %v1954
      %v1990 = vpack.c.b16 %v1957, %v1956
      %v1991 = vpack.c.b16 %v1959, %v1958
      %2024 = vmatprep.subr.bf16.mxu0 0
      %2025 = vmatpush1.bf16.msra.mxu0 %v1960
      %2026 = vmatprep.subr.bf16.mxu0 0
      %2027 = vmatpush1.bf16.msra.mxu0 %v1961
      %2028 = vmatprep.subr.bf16.mxu0 0
      %2029 = vmatpush1.bf16.msra.mxu0 %v1962
      %2030 = vmatprep.subr.bf16.mxu0 0
      %2031 = vmatpush1.bf16.msra.mxu0 %v1963
      %2032 = vmatprep.subr.bf16.mxu0 0
      %2033 = vmatpush1.bf16.msra.mxu0 %v1964
      %2034 = vmatprep.subr.bf16.mxu0 0
      %2035 = vmatpush1.bf16.msra.mxu0 %v1965
      %2036 = vmatprep.subr.bf16.mxu0 0
      %2037 = vmatpush1.bf16.msra.mxu0 %v1966
      %2038 = vmatprep.subr.bf16.mxu0 0
      %2039 = vmatpush1.bf16.msra.mxu0 %v1967
      %2040 = vmatprep.subr.bf16.mxu0 0
      %2041 = vmatpush1.bf16.msra.mxu0 %v1968
      %2042 = vmatprep.subr.bf16.mxu0 0
      %2043 = vmatpush1.bf16.msra.mxu0 %v1969
      %2044 = vmatprep.subr.bf16.mxu0 0
      %2045 = vmatpush1.bf16.msra.mxu0 %v1970
      %2046 = vmatprep.subr.bf16.mxu0 0
      %2047 = vmatpush1.bf16.msra.mxu0 %v1971
      %2048 = vmatprep.subr.bf16.mxu0 0
      %2049 = vmatpush1.bf16.msra.mxu0 %v1972
      %2050 = vmatprep.subr.bf16.mxu0 0
      %2051 = vmatpush1.bf16.msra.mxu0 %v1973
      %2052 = vmatprep.subr.bf16.mxu0 0
      %2053 = vmatpush1.bf16.msra.mxu0 %v1974
      %2054 = vmatprep.subr.bf16.mxu0 0
      %2055 = vmatpush1.bf16.msra.mxu0 %v1975
      %2056 = vmatprep.mubr.bf16.mxu0 %v1754
      %2057 = vmatmul.mubr.bf16.gmra.mrb[0].mxu0 %v1753
      %v2058 = vpop.f32.mrb[0].mxu0
      %v2059 = vadd.f32 %v1830, %v2058
      %v2060 = vpop.f32.mrb[0].mxu0
      %v2061 = vpop.f32.mrb[0].mxu0
      %v2062 = vadd.f32 %v1830, %v2061
      %v2063 = vpop.f32.mrb[0].mxu0
      %2064 = vmatprep.mubr.bf16.mxu0 %v1758
      %2065 = vmatmul.mubr.bf16.gmra.mrb[0].mxu0 %v1757
      %v2066 = vpop.f32.mrb[0].mxu0
      %v2067 = vadd.f32 %v1830, %v2066
      %v2068 = vpop.f32.mrb[0].mxu0
      %v2069 = vpop.f32.mrb[0].mxu0
      %v2070 = vadd.f32 %v1830, %v2069
      %v2071 = vpop.f32.mrb[0].mxu0
      %2072 = vdwg.mxu0
      %2073 = vmatprep.subr.bf16.mxu0 0
      %2074 = vmatpush1.bf16.msra.mxu0 %v1976
      %2075 = vmatprep.subr.bf16.mxu0 0
      %2076 = vmatpush1.bf16.msra.mxu0 %v1977
      %2077 = vmatprep.subr.bf16.mxu0 0
      %2078 = vmatpush1.bf16.msra.mxu0 %v1978
      %2079 = vmatprep.subr.bf16.mxu0 0
      %2080 = vmatpush1.bf16.msra.mxu0 %v1979
      %2081 = vmatprep.subr.bf16.mxu0 0
      %2082 = vmatpush1.bf16.msra.mxu0 %v1980
      %2083 = vmatprep.subr.bf16.mxu0 0
      %2084 = vmatpush1.bf16.msra.mxu0 %v1981
      %2085 = vmatprep.subr.bf16.mxu0 0
      %2086 = vmatpush1.bf16.msra.mxu0 %v1982
      %2087 = vmatprep.subr.bf16.mxu0 0
      %2088 = vmatpush1.bf16.msra.mxu0 %v1983
      %2089 = vmatprep.subr.bf16.mxu0 0
      %2090 = vmatpush1.bf16.msra.mxu0 %v1984
      %2091 = vmatprep.subr.bf16.mxu0 0
      %2092 = vmatpush1.bf16.msra.mxu0 %v1985
      %2093 = vmatprep.subr.bf16.mxu0 0
      %2094 = vmatpush1.bf16.msra.mxu0 %v1986
      %2095 = vmatprep.subr.bf16.mxu0 0
      %2096 = vmatpush1.bf16.msra.mxu0 %v1987
      %2097 = vmatprep.subr.bf16.mxu0 0
      %2098 = vmatpush1.bf16.msra.mxu0 %v1988
      %2099 = vmatprep.subr.bf16.mxu0 0
      %2100 = vmatpush1.bf16.msra.mxu0 %v1989
      %2101 = vmatprep.subr.bf16.mxu0 0
      %2102 = vmatpush1.bf16.msra.mxu0 %v1990
      %2103 = vmatprep.subr.bf16.mxu0 0
      %2104 = vmatpush1.bf16.msra.mxu0 %v1991
      %2105 = vmatprep.mubr.bf16.mxu0 %v1756
      %2106 = vmatmul.mubr.bf16.gmra.mrb[0].mxu0 %v1755
      %v2107 = vpop.f32.mrb[0].mxu0
      %v2108 = vadd.f32 %v2059, %v2107
      %v2109 = vpop.f32.mrb[0].mxu0
      %v2110 = vpop.f32.mrb[0].mxu0
      %v2111 = vadd.f32 %v2062, %v2110
      %v2112 = vpop.f32.mrb[0].mxu0
      %2113 = vmatprep.mubr.bf16.mxu0 %v1760
      %2114 = vmatmul.mubr.bf16.gmra.mrb[0].mxu0 %v1759
      %v2115 = vpop.f32.mrb[0].mxu0
      %v2116 = vadd.f32 %v2067, %v2115
      %v2117 = vpop.f32.mrb[0].mxu0
      %v2118 = vpop.f32.mrb[0].mxu0
      %v2119 = vadd.f32 %v2070, %v2118
      %v2120 = vpop.f32.mrb[0].mxu0
      %2121 = vdwg.mxu0
      %v2122 = vmax.f32 %v2108, 0.0
      %v2123 = vmax.f32 %v2111, 0.0
      %v2124 = vmax.f32 %v2116, 0.0
      %v2125 = vmax.f32 %v2119, 0.0
      %v2126 = vld [vmem:[%s3] sm:$0xff]
      %v2127 = vld [vmem:[%s3 + $0x8] sm:$0xff]
      %v2128 = vld [vmem:[%s3 + $0x10] sm:$0xff]
      %v2129 = vld [vmem:[%s3 + $0x18] sm:$0xff]
      %2131 = vset.pattern.permute.xlu0 0
      %2132 = vperm.xlu0 %2131, %v2126
      %v2133 = vpop.permute.xlu0 %2132
      %2136 = vset.pattern.permute.xlu0 0
      %2137 = vperm.xlu0 %2136, %v2127
      %v2138 = vpop.permute.xlu0 %2137
      %2141 = vset.pattern.permute.xlu0 0
      %2142 = vperm.xlu0 %2141, %v2128
      %v2143 = vpop.permute.xlu0 %2142
      %2146 = vset.pattern.permute.xlu0 0
      %2147 = vperm.xlu0 %2146, %v2129
      %v2148 = vpop.permute.xlu0 %2147
      %v2150 = vmul.f32 %v2122, %v2133
      %v2151 = vmul.f32 %v2123, %v2138
      %v2152 = vmul.f32 %v2124, %v2143
      %v2153 = vmul.f32 %v2125, %v2148
      %2154 = vst [vmem:[#allocation8] sm:$0xff] 0.0
      %2155 = vst [vmem:[#allocation8 + $0x8] sm:$0xff] %v2150
      %2156 = vst [vmem:[#allocation8 + $0x10] sm:$0xff] %v2151
      %2157 = vst [vmem:[#allocation8 + $0x18] sm:$0xff] %v2152
      %2158 = vst [vmem:[#allocation8 + $0x20] sm:$0xff] %v2153
      %s2159 = scalar_lea.vmem [#allocation8], 7
      %v2160 = vld [vmem:[%s2159] ss:$2 sm:$0xff]
      %s2161 = scalar_lea.vmem [#allocation8], 23
      %v2162 = vld [vmem:[%s2161] ss:$2 sm:$0xff]
      %s2163 = scalar_lea.vmem [#allocation8], 8
      %v2164 = vld [vmem:[%s2163] ss:$2 sm:$0xff]
      %s2165 = scalar_lea.vmem [#allocation8], 24
      %v2166 = vld [vmem:[%s2165] ss:$2 sm:$0xff]
      %v2167 = vmax.f32 %v2160, %v2164
      %v2168 = vmax.f32 %v2162, %v2166
      %2169 = vst [vmem:[%s717] sm:$0xff] %v2167
      %2170 = vst [vmem:[%s717 + $0x8] sm:$0xff] %v2168
      %v2171 = vld [vmem:[%s717] ss:$8 sm:$0x3]
      %v2172 = vpack.c.bf16 %v2171, %v2171
      %v2173 = vld [vmem:[%s696] sm:$0xff]
      %v2174 = vld [vmem:[%s696 + $0x8] sm:$0xff]
      %v2175 = vld [vmem:[%s696 + $0x10] sm:$0xff]
      %v2176 = vld [vmem:[%s696 + $0x18] sm:$0xff]
      %v2177 = vld [vmem:[%s696 + $0x20] sm:$0xff]
      %v2178 = vld [vmem:[%s696 + $0x28] sm:$0xff]
      %v2179 = vld [vmem:[%s696 + $0x30] sm:$0xff]
      %v2180 = vld [vmem:[%s696 + $0x38] sm:$0xff]
      %v2181 = vld [vmem:[%s696 + $0x40] sm:$0xff]
      %v2182 = vld [vmem:[%s696 + $0x48] sm:$0xff]
      %v2183 = vld [vmem:[%s696 + $0x50] sm:$0xff]
      %v2184 = vld [vmem:[%s696 + $0x58] sm:$0xff]
      %v2185 = vld [vmem:[%s696 + $0x60] sm:$0xff]
      %v2186 = vld [vmem:[%s696 + $0x68] sm:$0xff]
      %v2187 = vld [vmem:[%s696 + $0x70] sm:$0xff]
      %v2188 = vld [vmem:[%s696 + $0x78] sm:$0xff]
      %s2189 = scalar_lea.vmem %s717, 1
      %v2190 = vld [vmem:[%s2189] ss:$8 sm:$0x3]
      %v2191 = vpack.c.bf16 %v2190, %v2190
      %s2192 = scalar_lea.vmem %s696, 128
      %v2193 = vld [vmem:[%s2192] sm:$0xff]
      %v2194 = vld [vmem:[%s2192 + $0x8] sm:$0xff]
      %v2195 = vld [vmem:[%s2192 + $0x10] sm:$0xff]
      %v2196 = vld [vmem:[%s2192 + $0x18] sm:$0xff]
      %v2197 = vld [vmem:[%s2192 + $0x20] sm:$0xff]
      %v2198 = vld [vmem:[%s2192 + $0x28] sm:$0xff]
      %v2199 = vld [vmem:[%s2192 + $0x30] sm:$0xff]
      %v2200 = vld [vmem:[%s2192 + $0x38] sm:$0xff]
      %v2201 = vld [vmem:[%s2192 + $0x40] sm:$0xff]
      %v2202 = vld [vmem:[%s2192 + $0x48] sm:$0xff]
      %v2203 = vld [vmem:[%s2192 + $0x50] sm:$0xff]
      %v2204 = vld [vmem:[%s2192 + $0x58] sm:$0xff]
      %v2205 = vld [vmem:[%s2192 + $0x60] sm:$0xff]
      %v2206 = vld [vmem:[%s2192 + $0x68] sm:$0xff]
      %v2207 = vld [vmem:[%s2192 + $0x70] sm:$0xff]
      %v2208 = vld [vmem:[%s2192 + $0x78] sm:$0xff]
      %v2225 = vunpack.c.l.b16 %v2193
      %v2226 = vunpack.c.h.b16 %v2193
      %v2227 = vunpack.c.l.b16 %v2194
      %v2228 = vunpack.c.h.b16 %v2194
      %v2229 = vunpack.c.l.b16 %v2195
      %v2230 = vunpack.c.h.b16 %v2195
      %v2231 = vunpack.c.l.b16 %v2196
      %v2232 = vunpack.c.h.b16 %v2196
      %v2233 = vunpack.c.l.b16 %v2197
      %v2234 = vunpack.c.h.b16 %v2197
      %v2235 = vunpack.c.l.b16 %v2198
      %v2236 = vunpack.c.h.b16 %v2198
      %v2237 = vunpack.c.l.b16 %v2199
      %v2238 = vunpack.c.h.b16 %v2199
      %v2239 = vunpack.c.l.b16 %v2200
      %v2240 = vunpack.c.h.b16 %v2200
      %v2241 = vunpack.c.l.b16 %v2201
      %v2242 = vunpack.c.h.b16 %v2201
      %v2243 = vunpack.c.l.b16 %v2202
      %v2244 = vunpack.c.h.b16 %v2202
      %v2245 = vunpack.c.l.b16 %v2203
      %v2246 = vunpack.c.h.b16 %v2203
      %v2247 = vunpack.c.l.b16 %v2204
      %v2248 = vunpack.c.h.b16 %v2204
      %v2249 = vunpack.c.l.b16 %v2205
      %v2250 = vunpack.c.h.b16 %v2205
      %v2251 = vunpack.c.l.b16 %v2206
      %v2252 = vunpack.c.h.b16 %v2206
      %v2253 = vunpack.c.l.b16 %v2207
      %v2254 = vunpack.c.h.b16 %v2207
      %v2255 = vunpack.c.l.b16 %v2208
      %v2256 = vunpack.c.h.b16 %v2208
      %v2257 = vpack.c.b16 %v2227, %v2225
      %v2258 = vpack.c.b16 %v2228, %v2226
      %v2259 = vpack.c.b16 %v2231, %v2229
      %v2260 = vpack.c.b16 %v2232, %v2230
      %v2261 = vpack.c.b16 %v2235, %v2233
      %v2262 = vpack.c.b16 %v2236, %v2234
      %v2263 = vpack.c.b16 %v2239, %v2237
      %v2264 = vpack.c.b16 %v2240, %v2238
      %v2265 = vpack.c.b16 %v2243, %v2241
      %v2266 = vpack.c.b16 %v2244, %v2242
      %v2267 = vpack.c.b16 %v2247, %v2245
      %v2268 = vpack.c.b16 %v2248, %v2246
      %v2269 = vpack.c.b16 %v2251, %v2249
      %v2270 = vpack.c.b16 %v2252, %v2250
      %v2271 = vpack.c.b16 %v2255, %v2253
      %v2272 = vpack.c.b16 %v2256, %v2254
      %2289 = vmatprep.subr.bf16.mxu0 %v2258
      %2290 = vmatpush1.bf16.msra.mxu0 %v2257
      %2291 = vmatprep.subr.bf16.mxu0 %v2260
      %2292 = vmatpush1.bf16.msra.mxu0 %v2259
      %2293 = vmatprep.subr.bf16.mxu0 %v2262
      %2294 = vmatpush1.bf16.msra.mxu0 %v2261
      %2295 = vmatprep.subr.bf16.mxu0 %v2264
      %2296 = vmatpush1.bf16.msra.mxu0 %v2263
      %2297 = vmatprep.subr.bf16.mxu0 %v2266
      %2298 = vmatpush1.bf16.msra.mxu0 %v2265
      %2299 = vmatprep.subr.bf16.mxu0 %v2268
      %2300 = vmatpush1.bf16.msra.mxu0 %v2267
      %2301 = vmatprep.subr.bf16.mxu0 %v2270
      %2302 = vmatpush1.bf16.msra.mxu0 %v2269
      %2303 = vmatprep.subr.bf16.mxu0 %v2272
      %2304 = vmatpush1.bf16.msra.mxu0 %v2271
      %2305 = vmatprep.subr.bf16.mxu0 0
      %2306 = vmatpush1.bf16.msra.mxu0 0
      %2307 = vmatprep.subr.bf16.mxu0 0
      %2308 = vmatpush1.bf16.msra.mxu0 0
      %2309 = vmatprep.subr.bf16.mxu0 0
      %2310 = vmatpush1.bf16.msra.mxu0 0
      %2311 = vmatprep.subr.bf16.mxu0 0
      %2312 = vmatpush1.bf16.msra.mxu0 0
      %2313 = vmatprep.subr.bf16.mxu0 0
      %2314 = vmatpush1.bf16.msra.mxu0 0
      %2315 = vmatprep.subr.bf16.mxu0 0
      %2316 = vmatpush1.bf16.msra.mxu0 0
      %2317 = vmatprep.subr.bf16.mxu0 0
      %2318 = vmatpush1.bf16.msra.mxu0 0
      %2319 = vmatprep.subr.bf16.mxu0 0
      %2320 = vmatpush1.bf16.msra.mxu0 0
      %2321 = vmatprep.mubr.bf16.mxu0 0
      %2322 = vmatmul.mubr.bf16.gmra.mrb[0].mxu0 %v2191
      %v2323 = vpop.f32.mrb[0].mxu0
      %v2324 = vadd.f32 0.0, %v2323
      %v2325 = vpop.f32.mrb[0].mxu0
      %v2326 = vadd.f32 0.0, %v2325
      %v2327 = vpop.f32.mrb[0].mxu0
      %v2328 = vpop.f32.mrb[0].mxu0
      %2329 = vdwg.mxu0
      %v2346 = vunpack.c.l.b16 %v2173
      %v2347 = vunpack.c.h.b16 %v2173
      %v2348 = vunpack.c.l.b16 %v2174
      %v2349 = vunpack.c.h.b16 %v2174
      %v2350 = vunpack.c.l.b16 %v2175
      %v2351 = vunpack.c.h.b16 %v2175
      %v2352 = vunpack.c.l.b16 %v2176
      %v2353 = vunpack.c.h.b16 %v2176
      %v2354 = vunpack.c.l.b16 %v2177
      %v2355 = vunpack.c.h.b16 %v2177
      %v2356 = vunpack.c.l.b16 %v2178
      %v2357 = vunpack.c.h.b16 %v2178
      %v2358 = vunpack.c.l.b16 %v2179
      %v2359 = vunpack.c.h.b16 %v2179
      %v2360 = vunpack.c.l.b16 %v2180
      %v2361 = vunpack.c.h.b16 %v2180
      %v2362 = vunpack.c.l.b16 %v2181
      %v2363 = vunpack.c.h.b16 %v2181
      %v2364 = vunpack.c.l.b16 %v2182
      %v2365 = vunpack.c.h.b16 %v2182
      %v2366 = vunpack.c.l.b16 %v2183
      %v2367 = vunpack.c.h.b16 %v2183
      %v2368 = vunpack.c.l.b16 %v2184
      %v2369 = vunpack.c.h.b16 %v2184
      %v2370 = vunpack.c.l.b16 %v2185
      %v2371 = vunpack.c.h.b16 %v2185
      %v2372 = vunpack.c.l.b16 %v2186
      %v2373 = vunpack.c.h.b16 %v2186
      %v2374 = vunpack.c.l.b16 %v2187
      %v2375 = vunpack.c.h.b16 %v2187
      %v2376 = vunpack.c.l.b16 %v2188
      %v2377 = vunpack.c.h.b16 %v2188
      %v2378 = vpack.c.b16 %v2348, %v2346
      %v2379 = vpack.c.b16 %v2349, %v2347
      %v2380 = vpack.c.b16 %v2352, %v2350
      %v2381 = vpack.c.b16 %v2353, %v2351
      %v2382 = vpack.c.b16 %v2356, %v2354
      %v2383 = vpack.c.b16 %v2357, %v2355
      %v2384 = vpack.c.b16 %v2360, %v2358
      %v2385 = vpack.c.b16 %v2361, %v2359
      %v2386 = vpack.c.b16 %v2364, %v2362
      %v2387 = vpack.c.b16 %v2365, %v2363
      %v2388 = vpack.c.b16 %v2368, %v2366
      %v2389 = vpack.c.b16 %v2369, %v2367
      %v2390 = vpack.c.b16 %v2372, %v2370
      %v2391 = vpack.c.b16 %v2373, %v2371
      %v2392 = vpack.c.b16 %v2376, %v2374
      %v2393 = vpack.c.b16 %v2377, %v2375
      %2410 = vmatprep.subr.bf16.mxu0 %v2379
      %2411 = vmatpush1.bf16.msra.mxu0 %v2378
      %2412 = vmatprep.subr.bf16.mxu0 %v2381
      %2413 = vmatpush1.bf16.msra.mxu0 %v2380
      %2414 = vmatprep.subr.bf16.mxu0 %v2383
      %2415 = vmatpush1.bf16.msra.mxu0 %v2382
      %2416 = vmatprep.subr.bf16.mxu0 %v2385
      %2417 = vmatpush1.bf16.msra.mxu0 %v2384
      %2418 = vmatprep.subr.bf16.mxu0 %v2387
      %2419 = vmatpush1.bf16.msra.mxu0 %v2386
      %2420 = vmatprep.subr.bf16.mxu0 %v2389
      %2421 = vmatpush1.bf16.msra.mxu0 %v2388
      %2422 = vmatprep.subr.bf16.mxu0 %v2391
      %2423 = vmatpush1.bf16.msra.mxu0 %v2390
      %2424 = vmatprep.subr.bf16.mxu0 %v2393
      %2425 = vmatpush1.bf16.msra.mxu0 %v2392
      %2426 = vmatprep.subr.bf16.mxu0 0
      %2427 = vmatpush1.bf16.msra.mxu0 0
      %2428 = vmatprep.subr.bf16.mxu0 0
      %2429 = vmatpush1.bf16.msra.mxu0 0
      %2430 = vmatprep.subr.bf16.mxu0 0
      %2431 = vmatpush1.bf16.msra.mxu0 0
      %2432 = vmatprep.subr.bf16.mxu0 0
      %2433 = vmatpush1.bf16.msra.mxu0 0
      %2434 = vmatprep.subr.bf16.mxu0 0
      %2435 = vmatpush1.bf16.msra.mxu0 0
      %2436 = vmatprep.subr.bf16.mxu0 0
      %2437 = vmatpush1.bf16.msra.mxu0 0
      %2438 = vmatprep.subr.bf16.mxu0 0
      %2439 = vmatpush1.bf16.msra.mxu0 0
      %2440 = vmatprep.subr.bf16.mxu0 0
      %2441 = vmatpush1.bf16.msra.mxu0 0
      %2442 = vmatprep.mubr.bf16.mxu0 0
      %2443 = vmatmul.mubr.bf16.gmra.mrb[0].mxu0 %v2172
      %v2444 = vpop.f32.mrb[0].mxu0
      %v2445 = vadd.f32 %v2324, %v2444
      %v2446 = vpop.f32.mrb[0].mxu0
      %v2447 = vadd.f32 %v2326, %v2446
      %v2448 = vpop.f32.mrb[0].mxu0
      %v2449 = vpop.f32.mrb[0].mxu0
      %2450 = vdwg.mxu0
      %s2451 = scalar_lea.vmem %s717, 2
      %v2452 = vld [vmem:[%s2451] ss:$8 sm:$0x3]
      %v2453 = vpack.c.bf16 %v2452, %v2452
      %s2454 = scalar_lea.vmem %s696, 256
      %v2455 = vld [vmem:[%s2454] sm:$0xff]
      %v2456 = vld [vmem:[%s2454 + $0x8] sm:$0xff]
      %v2457 = vld [vmem:[%s2454 + $0x10] sm:$0xff]
      %v2458 = vld [vmem:[%s2454 + $0x18] sm:$0xff]
      %v2459 = vld [vmem:[%s2454 + $0x20] sm:$0xff]
      %v2460 = vld [vmem:[%s2454 + $0x28] sm:$0xff]
      %v2461 = vld [vmem:[%s2454 + $0x30] sm:$0xff]
      %v2462 = vld [vmem:[%s2454 + $0x38] sm:$0xff]
      %v2463 = vld [vmem:[%s2454 + $0x40] sm:$0xff]
      %v2464 = vld [vmem:[%s2454 + $0x48] sm:$0xff]
      %v2465 = vld [vmem:[%s2454 + $0x50] sm:$0xff]
      %v2466 = vld [vmem:[%s2454 + $0x58] sm:$0xff]
      %v2467 = vld [vmem:[%s2454 + $0x60] sm:$0xff]
      %v2468 = vld [vmem:[%s2454 + $0x68] sm:$0xff]
      %v2469 = vld [vmem:[%s2454 + $0x70] sm:$0xff]
      %v2470 = vld [vmem:[%s2454 + $0x78] sm:$0xff]
      %v2487 = vunpack.c.l.b16 %v2455
      %v2488 = vunpack.c.h.b16 %v2455
      %v2489 = vunpack.c.l.b16 %v2456
      %v2490 = vunpack.c.h.b16 %v2456
      %v2491 = vunpack.c.l.b16 %v2457
      %v2492 = vunpack.c.h.b16 %v2457
      %v2493 = vunpack.c.l.b16 %v2458
      %v2494 = vunpack.c.h.b16 %v2458
      %v2495 = vunpack.c.l.b16 %v2459
      %v2496 = vunpack.c.h.b16 %v2459
      %v2497 = vunpack.c.l.b16 %v2460
      %v2498 = vunpack.c.h.b16 %v2460
      %v2499 = vunpack.c.l.b16 %v2461
      %v2500 = vunpack.c.h.b16 %v2461
      %v2501 = vunpack.c.l.b16 %v2462
      %v2502 = vunpack.c.h.b16 %v2462
      %v2503 = vunpack.c.l.b16 %v2463
      %v2504 = vunpack.c.h.b16 %v2463
      %v2505 = vunpack.c.l.b16 %v2464
      %v2506 = vunpack.c.h.b16 %v2464
      %v2507 = vunpack.c.l.b16 %v2465
      %v2508 = vunpack.c.h.b16 %v2465
      %v2509 = vunpack.c.l.b16 %v2466
      %v2510 = vunpack.c.h.b16 %v2466
      %v2511 = vunpack.c.l.b16 %v2467
      %v2512 = vunpack.c.h.b16 %v2467
      %v2513 = vunpack.c.l.b16 %v2468
      %v2514 = vunpack.c.h.b16 %v2468
      %v2515 = vunpack.c.l.b16 %v2469
      %v2516 = vunpack.c.h.b16 %v2469
      %v2517 = vunpack.c.l.b16 %v2470
      %v2518 = vunpack.c.h.b16 %v2470
      %v2519 = vpack.c.b16 %v2489, %v2487
      %v2520 = vpack.c.b16 %v2490, %v2488
      %v2521 = vpack.c.b16 %v2493, %v2491
      %v2522 = vpack.c.b16 %v2494, %v2492
      %v2523 = vpack.c.b16 %v2497, %v2495
      %v2524 = vpack.c.b16 %v2498, %v2496
      %v2525 = vpack.c.b16 %v2501, %v2499
      %v2526 = vpack.c.b16 %v2502, %v2500
      %v2527 = vpack.c.b16 %v2505, %v2503
      %v2528 = vpack.c.b16 %v2506, %v2504
      %v2529 = vpack.c.b16 %v2509, %v2507
      %v2530 = vpack.c.b16 %v2510, %v2508
      %v2531 = vpack.c.b16 %v2513, %v2511
      %v2532 = vpack.c.b16 %v2514, %v2512
      %v2533 = vpack.c.b16 %v2517, %v2515
      %v2534 = vpack.c.b16 %v2518, %v2516
      %2551 = vmatprep.subr.bf16.mxu0 %v2520
      %2552 = vmatpush1.bf16.msra.mxu0 %v2519
      %2553 = vmatprep.subr.bf16.mxu0 %v2522
      %2554 = vmatpush1.bf16.msra.mxu0 %v2521
      %2555 = vmatprep.subr.bf16.mxu0 %v2524
      %2556 = vmatpush1.bf16.msra.mxu0 %v2523
      %2557 = vmatprep.subr.bf16.mxu0 %v2526
      %2558 = vmatpush1.bf16.msra.mxu0 %v2525
      %2559 = vmatprep.subr.bf16.mxu0 %v2528
      %2560 = vmatpush1.bf16.msra.mxu0 %v2527
      %2561 = vmatprep.subr.bf16.mxu0 %v2530
      %2562 = vmatpush1.bf16.msra.mxu0 %v2529
      %2563 = vmatprep.subr.bf16.mxu0 %v2532
      %2564 = vmatpush1.bf16.msra.mxu0 %v2531
      %2565 = vmatprep.subr.bf16.mxu0 %v2534
      %2566 = vmatpush1.bf16.msra.mxu0 %v2533
      %2567 = vmatprep.subr.bf16.mxu0 0
      %2568 = vmatpush1.bf16.msra.mxu0 0
      %2569 = vmatprep.subr.bf16.mxu0 0
      %2570 = vmatpush1.bf16.msra.mxu0 0
      %2571 = vmatprep.subr.bf16.mxu0 0
      %2572 = vmatpush1.bf16.msra.mxu0 0
      %2573 = vmatprep.subr.bf16.mxu0 0
      %2574 = vmatpush1.bf16.msra.mxu0 0
      %2575 = vmatprep.subr.bf16.mxu0 0
      %2576 = vmatpush1.bf16.msra.mxu0 0
      %2577 = vmatprep.subr.bf16.mxu0 0
      %2578 = vmatpush1.bf16.msra.mxu0 0
      %2579 = vmatprep.subr.bf16.mxu0 0
      %2580 = vmatpush1.bf16.msra.mxu0 0
      %2581 = vmatprep.subr.bf16.mxu0 0
      %2582 = vmatpush1.bf16.msra.mxu0 0
      %2583 = vmatprep.mubr.bf16.mxu0 0
      %2584 = vmatmul.mubr.bf16.gmra.mrb[0].mxu0 %v2453
      %v2585 = vpop.f32.mrb[0].mxu0
      %v2586 = vadd.f32 0.0, %v2585
      %v2587 = vpop.f32.mrb[0].mxu0
      %v2588 = vadd.f32 0.0, %v2587
      %v2589 = vpop.f32.mrb[0].mxu0
      %v2590 = vpop.f32.mrb[0].mxu0
      %2591 = vdwg.mxu0
      %v2592 = vadd.f32 %v2445, %v2586
      %v2593 = vadd.f32 %v2447, %v2588
      %s2594 = scalar_lea.vmem %s717, 3
      %v2595 = vld [vmem:[%s2594] ss:$8 sm:$0x3]
      %v2596 = vpack.c.bf16 %v2595, %v2595
      %s2597 = scalar_lea.vmem %s696, 384
      %v2598 = vld [vmem:[%s2597] sm:$0xff]
      %v2599 = vld [vmem:[%s2597 + $0x8] sm:$0xff]
      %v2600 = vld [vmem:[%s2597 + $0x10] sm:$0xff]
      %v2601 = vld [vmem:[%s2597 + $0x18] sm:$0xff]
      %v2602 = vld [vmem:[%s2597 + $0x20] sm:$0xff]
      %v2603 = vld [vmem:[%s2597 + $0x28] sm:$0xff]
      %v2604 = vld [vmem:[%s2597 + $0x30] sm:$0xff]
      %v2605 = vld [vmem:[%s2597 + $0x38] sm:$0xff]
      %v2606 = vld [vmem:[%s2597 + $0x40] sm:$0xff]
      %v2607 = vld [vmem:[%s2597 + $0x48] sm:$0xff]
      %v2608 = vld [vmem:[%s2597 + $0x50] sm:$0xff]
      %v2609 = vld [vmem:[%s2597 + $0x58] sm:$0xff]
      %v2610 = vld [vmem:[%s2597 + $0x60] sm:$0xff]
      %v2611 = vld [vmem:[%s2597 + $0x68] sm:$0xff]
      %v2612 = vld [vmem:[%s2597 + $0x70] sm:$0xff]
      %v2613 = vld [vmem:[%s2597 + $0x78] sm:$0xff]
      %v2630 = vunpack.c.l.b16 %v2598
      %v2631 = vunpack.c.h.b16 %v2598
      %v2632 = vunpack.c.l.b16 %v2599
      %v2633 = vunpack.c.h.b16 %v2599
      %v2634 = vunpack.c.l.b16 %v2600
      %v2635 = vunpack.c.h.b16 %v2600
      %v2636 = vunpack.c.l.b16 %v2601
      %v2637 = vunpack.c.h.b16 %v2601
      %v2638 = vunpack.c.l.b16 %v2602
      %v2639 = vunpack.c.h.b16 %v2602
      %v2640 = vunpack.c.l.b16 %v2603
      %v2641 = vunpack.c.h.b16 %v2603
      %v2642 = vunpack.c.l.b16 %v2604
      %v2643 = vunpack.c.h.b16 %v2604
      %v2644 = vunpack.c.l.b16 %v2605
      %v2645 = vunpack.c.h.b16 %v2605
      %v2646 = vunpack.c.l.b16 %v2606
      %v2647 = vunpack.c.h.b16 %v2606
      %v2648 = vunpack.c.l.b16 %v2607
      %v2649 = vunpack.c.h.b16 %v2607
      %v2650 = vunpack.c.l.b16 %v2608
      %v2651 = vunpack.c.h.b16 %v2608
      %v2652 = vunpack.c.l.b16 %v2609
      %v2653 = vunpack.c.h.b16 %v2609
      %v2654 = vunpack.c.l.b16 %v2610
      %v2655 = vunpack.c.h.b16 %v2610
      %v2656 = vunpack.c.l.b16 %v2611
      %v2657 = vunpack.c.h.b16 %v2611
      %v2658 = vunpack.c.l.b16 %v2612
      %v2659 = vunpack.c.h.b16 %v2612
      %v2660 = vunpack.c.l.b16 %v2613
      %v2661 = vunpack.c.h.b16 %v2613
      %v2662 = vpack.c.b16 %v2632, %v2630
      %v2663 = vpack.c.b16 %v2633, %v2631
      %v2664 = vpack.c.b16 %v2636, %v2634
      %v2665 = vpack.c.b16 %v2637, %v2635
      %v2666 = vpack.c.b16 %v2640, %v2638
      %v2667 = vpack.c.b16 %v2641, %v2639
      %v2668 = vpack.c.b16 %v2644, %v2642
      %v2669 = vpack.c.b16 %v2645, %v2643
      %v2670 = vpack.c.b16 %v2648, %v2646
      %v2671 = vpack.c.b16 %v2649, %v2647
      %v2672 = vpack.c.b16 %v2652, %v2650
      %v2673 = vpack.c.b16 %v2653, %v2651
      %v2674 = vpack.c.b16 %v2656, %v2654
      %v2675 = vpack.c.b16 %v2657, %v2655
      %v2676 = vpack.c.b16 %v2660, %v2658
      %v2677 = vpack.c.b16 %v2661, %v2659
      %2694 = vmatprep.subr.bf16.mxu0 %v2663
      %2695 = vmatpush1.bf16.msra.mxu0 %v2662
      %2696 = vmatprep.subr.bf16.mxu0 %v2665
      %2697 = vmatpush1.bf16.msra.mxu0 %v2664
      %2698 = vmatprep.subr.bf16.mxu0 %v2667
      %2699 = vmatpush1.bf16.msra.mxu0 %v2666
      %2700 = vmatprep.subr.bf16.mxu0 %v2669
      %2701 = vmatpush1.bf16.msra.mxu0 %v2668
      %2702 = vmatprep.subr.bf16.mxu0 %v2671
      %2703 = vmatpush1.bf16.msra.mxu0 %v2670
      %2704 = vmatprep.subr.bf16.mxu0 %v2673
      %2705 = vmatpush1.bf16.msra.mxu0 %v2672
      %2706 = vmatprep.subr.bf16.mxu0 %v2675
      %2707 = vmatpush1.bf16.msra.mxu0 %v2674
      %2708 = vmatprep.subr.bf16.mxu0 %v2677
      %2709 = vmatpush1.bf16.msra.mxu0 %v2676
      %2710 = vmatprep.subr.bf16.mxu0 0
      %2711 = vmatpush1.bf16.msra.mxu0 0
      %2712 = vmatprep.subr.bf16.mxu0 0
      %2713 = vmatpush1.bf16.msra.mxu0 0
      %2714 = vmatprep.subr.bf16.mxu0 0
      %2715 = vmatpush1.bf16.msra.mxu0 0
      %2716 = vmatprep.subr.bf16.mxu0 0
      %2717 = vmatpush1.bf16.msra.mxu0 0
      %2718 = vmatprep.subr.bf16.mxu0 0
      %2719 = vmatpush1.bf16.msra.mxu0 0
      %2720 = vmatprep.subr.bf16.mxu0 0
      %2721 = vmatpush1.bf16.msra.mxu0 0
      %2722 = vmatprep.subr.bf16.mxu0 0
      %2723 = vmatpush1.bf16.msra.mxu0 0
      %2724 = vmatprep.subr.bf16.mxu0 0
      %2725 = vmatpush1.bf16.msra.mxu0 0
      %2726 = vmatprep.mubr.bf16.mxu0 0
      %2727 = vmatmul.mubr.bf16.gmra.mrb[0].mxu0 %v2596
      %v2728 = vpop.f32.mrb[0].mxu0
      %v2729 = vadd.f32 0.0, %v2728
      %v2730 = vpop.f32.mrb[0].mxu0
      %v2731 = vadd.f32 0.0, %v2730
      %v2732 = vpop.f32.mrb[0].mxu0
      %v2733 = vpop.f32.mrb[0].mxu0
      %2734 = vdwg.mxu0
      %v2735 = vadd.f32 %v2592, %v2729
      %v2736 = vadd.f32 %v2593, %v2731
      %v2737 = vld [vmem:[%s700] sm:$0x3]
      %v2739 = vlaneseq
      %v2740 = vshrl.u32 %v2739, 7
      %v2741 = vsub.s32 0, %v2740
      %v2742 = vrot.slane %v2737, %v2741
      %v2743 = vlaneseq
      %v2744 = vshrl.u32 %v2743, 7
      %v2745 = vsub.s32 1, %v2744
      %v2746 = vrot.slane %v2737, %v2745
      %v2749 = vadd.f32 %v2735, %v2742
      %v2750 = vadd.f32 %v2736, %v2746
      %v2751 = vmax.f32 %v2749, 0.0
      %v2752 = vmax.f32 %v2750, 0.0
      %v2753 = vpack.c.bf16 %v2751, %v2751
      %v2754 = vpack.c.bf16 %v2752, %v2752
      %v2755 = vld [vmem:[%s705] sm:$0xf]
      %v2756 = vld [vmem:[%s705 + $0x4] sm:$0xf]
      %v2757 = vld [vmem:[%s705 + $0x8] sm:$0xf]
      %v2758 = vld [vmem:[%s705 + $0xc] sm:$0xf]
      %v2759 = vld [vmem:[%s705 + $0x10] sm:$0xf]
      %v2760 = vld [vmem:[%s705 + $0x14] sm:$0xf]
      %v2761 = vld [vmem:[%s705 + $0x18] sm:$0xf]
      %v2762 = vld [vmem:[%s705 + $0x1c] sm:$0xf]
      %v2763 = vld [vmem:[%s705 + $0x20] sm:$0xf]
      %v2764 = vld [vmem:[%s705 + $0x24] sm:$0xf]
      %v2765 = vld [vmem:[%s705 + $0x28] sm:$0xf]
      %v2766 = vld [vmem:[%s705 + $0x2c] sm:$0xf]
      %v2767 = vld [vmem:[%s705 + $0x30] sm:$0xf]
      %v2768 = vld [vmem:[%s705 + $0x34] sm:$0xf]
      %v2769 = vld [vmem:[%s705 + $0x38] sm:$0xf]
      %v2770 = vld [vmem:[%s705 + $0x3c] sm:$0xf]
      %v2771 = vld [vmem:[%s705 + $0x40] sm:$0xf]
      %v2772 = vld [vmem:[%s705 + $0x44] sm:$0xf]
      %v2773 = vld [vmem:[%s705 + $0x48] sm:$0xf]
      %v2774 = vld [vmem:[%s705 + $0x4c] sm:$0xf]
      %v2775 = vld [vmem:[%s705 + $0x50] sm:$0xf]
      %v2776 = vld [vmem:[%s705 + $0x54] sm:$0xf]
      %v2777 = vld [vmem:[%s705 + $0x58] sm:$0xf]
      %v2778 = vld [vmem:[%s705 + $0x5c] sm:$0xf]
      %v2779 = vld [vmem:[%s705 + $0x60] sm:$0xf]
      %v2780 = vld [vmem:[%s705 + $0x64] sm:$0xf]
      %v2781 = vld [vmem:[%s705 + $0x68] sm:$0xf]
      %v2782 = vld [vmem:[%s705 + $0x6c] sm:$0xf]
      %v2783 = vld [vmem:[%s705 + $0x70] sm:$0xf]
      %v2784 = vld [vmem:[%s705 + $0x74] sm:$0xf]
      %v2785 = vld [vmem:[%s705 + $0x78] sm:$0xf]
      %v2786 = vld [vmem:[%s705 + $0x7c] sm:$0xf]
      %v2787 = vld [vmem:[%s708] sm:$0x1]
      %v2789 = vlaneseq
      %v2790 = vshrl.u32 %v2789, 7
      %v2791 = vsub.s32 0, %v2790
      %v2792 = vrot.slane %v2787, %v2791
      %v2826 = vunpack.c.l.b16 %v2755
      %v2827 = vunpack.c.l.b16 %v2756
      %v2828 = vunpack.c.l.b16 %v2757
      %v2829 = vunpack.c.l.b16 %v2758
      %v2830 = vunpack.c.l.b16 %v2759
      %v2831 = vunpack.c.l.b16 %v2760
      %v2832 = vunpack.c.l.b16 %v2761
      %v2833 = vunpack.c.l.b16 %v2762
      %v2834 = vunpack.c.l.b16 %v2763
      %v2835 = vunpack.c.l.b16 %v2764
      %v2836 = vunpack.c.l.b16 %v2765
      %v2837 = vunpack.c.l.b16 %v2766
      %v2838 = vunpack.c.l.b16 %v2767
      %v2839 = vunpack.c.l.b16 %v2768
      %v2840 = vunpack.c.l.b16 %v2769
      %v2841 = vunpack.c.l.b16 %v2770
      %v2842 = vunpack.c.l.b16 %v2771
      %v2843 = vunpack.c.l.b16 %v2772
      %v2844 = vunpack.c.l.b16 %v2773
      %v2845 = vunpack.c.l.b16 %v2774
      %v2846 = vunpack.c.l.b16 %v2775
      %v2847 = vunpack.c.l.b16 %v2776
      %v2848 = vunpack.c.l.b16 %v2777
      %v2849 = vunpack.c.l.b16 %v2778
      %v2850 = vunpack.c.l.b16 %v2779
      %v2851 = vunpack.c.l.b16 %v2780
      %v2852 = vunpack.c.l.b16 %v2781
      %v2853 = vunpack.c.l.b16 %v2782
      %v2854 = vunpack.c.l.b16 %v2783
      %v2855 = vunpack.c.l.b16 %v2784
      %v2856 = vunpack.c.l.b16 %v2785
      %v2857 = vunpack.c.l.b16 %v2786
      %v2858 = vpack.c.b16 %v2827, %v2826
      %v2859 = vpack.c.b16 %v2829, %v2828
      %v2860 = vpack.c.b16 %v2831, %v2830
      %v2861 = vpack.c.b16 %v2833, %v2832
      %v2862 = vpack.c.b16 %v2835, %v2834
      %v2863 = vpack.c.b16 %v2837, %v2836
      %v2864 = vpack.c.b16 %v2839, %v2838
      %v2865 = vpack.c.b16 %v2841, %v2840
      %v2866 = vpack.c.b16 %v2843, %v2842
      %v2867 = vpack.c.b16 %v2845, %v2844
      %v2868 = vpack.c.b16 %v2847, %v2846
      %v2869 = vpack.c.b16 %v2849, %v2848
      %v2870 = vpack.c.b16 %v2851, %v2850
      %v2871 = vpack.c.b16 %v2853, %v2852
      %v2872 = vpack.c.b16 %v2855, %v2854
      %v2873 = vpack.c.b16 %v2857, %v2856
      %2890 = vmatprep.subr.bf16.mxu0 0
      %2891 = vmatpush1.bf16.msra.mxu0 %v2858
      %2892 = vmatprep.subr.bf16.mxu0 0
      %2893 = vmatpush1.bf16.msra.mxu0 %v2859
      %2894 = vmatprep.subr.bf16.mxu0 0
      %2895 = vmatpush1.bf16.msra.mxu0 %v2860
      %2896 = vmatprep.subr.bf16.mxu0 0
      %2897 = vmatpush1.bf16.msra.mxu0 %v2861
      %2898 = vmatprep.subr.bf16.mxu0 0
      %2899 = vmatpush1.bf16.msra.mxu0 %v2862
      %2900 = vmatprep.subr.bf16.mxu0 0
      %2901 = vmatpush1.bf16.msra.mxu0 %v2863
      %2902 = vmatprep.subr.bf16.mxu0 0
      %2903 = vmatpush1.bf16.msra.mxu0 %v2864
      %2904 = vmatprep.subr.bf16.mxu0 0
      %2905 = vmatpush1.bf16.msra.mxu0 %v2865
      %2906 = vmatprep.subr.bf16.mxu0 0
      %2907 = vmatpush1.bf16.msra.mxu0 %v2866
      %2908 = vmatprep.subr.bf16.mxu0 0
      %2909 = vmatpush1.bf16.msra.mxu0 %v2867
      %2910 = vmatprep.subr.bf16.mxu0 0
      %2911 = vmatpush1.bf16.msra.mxu0 %v2868
      %2912 = vmatprep.subr.bf16.mxu0 0
      %2913 = vmatpush1.bf16.msra.mxu0 %v2869
      %2914 = vmatprep.subr.bf16.mxu0 0
      %2915 = vmatpush1.bf16.msra.mxu0 %v2870
      %2916 = vmatprep.subr.bf16.mxu0 0
      %2917 = vmatpush1.bf16.msra.mxu0 %v2871
      %2918 = vmatprep.subr.bf16.mxu0 0
      %2919 = vmatpush1.bf16.msra.mxu0 %v2872
      %2920 = vmatprep.subr.bf16.mxu0 0
      %2921 = vmatpush1.bf16.msra.mxu0 %v2873
      %2922 = vmatprep.mubr.bf16.mxu0 %v2754
      %2923 = vmatmul.mubr.bf16.gmra.mrb[0].mxu0 %v2753
      %v2924 = vpop.f32.mrb[0].mxu0
      %v2925 = vadd.f32 %v2792, %v2924
      %v2926 = vpop.f32.mrb[0].mxu0
      %v2927 = vpop.f32.mrb[0].mxu0
      %v2928 = vpop.f32.mrb[0].mxu0
      %2929 = vdwg.mxu0
      %2930 = vst [vmem:[%s725] sm:$0x3] %v2925
      %s2931 = smul.u32 2, %s32
      %p2932 = scmp.lt.s32.totalorder %s31, 1
      %s2933 = scalar_select %p2932, %s31, 1
      %p2934 = scmp.lt.s32.totalorder %s2931, 1
      %s2935 = scalar_select %p2934, %s2931, 1
      %s2936 = smul.addr %s2933, 2
      %s2937 = sadd.s32 %s2935, %s2936
      %s2938 = smul.addr %s2937, 8
      %s2939 = scalar_lea.vmem %s14, %s2938
      %p2940 = scmp.lt.s32.totalorder %s31, 1
      %s2941 = scalar_select %p2940, %s31, 1
      %p2942 = scmp.lt.s32.totalorder %s32, 0
      %s2943 = scalar_select %p2942, %s32, 0
      %s2944 = sadd.s32 %s2943, %s2941
      %s2945 = smul.addr %s2944, 2
      %s2946 = scalar_lea.vmem %s15, %s2945
      // Predicated region
      $region77: #{fwd.1} parent=75 // pred_check
        %p2947 = pneg %p410
      $region78: #{fwd.1} parent=75 // pred_check_branch
        %2949 = sbr.rel (%p2947) target = $region80
      $region79: #{fwd.1} parent=75 // pred_region
        %s2950 = smul.u32 2, %s32
      $region80: #{fwd.1} parent=75 // pred_fallthru
        _
      // Predicated region
      $region81: #{fwd.1} parent=75 // pred_check
        %p2951 = pneg %p438
      $region82: #{fwd.1} parent=75 // pred_check_branch
        %2953 = sbr.rel (%p2951) target = $region84
      $region83: #{fwd.1} parent=75 // pred_region
        _
      $region84: #{fwd.1} parent=75 // pred_fallthru
        _
    $region76: #{fwd.1} parent=5 // pred_fallthru
      _
    %p2954 = scmp.le.s32.totalorder 2, %s22
    // Predicated region
    $region85: #{fwd.1} parent=5 // pred_check
      %p2955 = pneg %p2954
    $region86: #{fwd.1} parent=5 // pred_check_branch
      %2957 = sbr.rel (%p2955) target = $region88
    $region87: #{fwd.1} parent=5 // pred_region
      %s2958 = ssub.s32 %s22, 2
      // Predicated region
      $region89: #{fwd.1} parent=87 // pred_check
        %p2959 = pneg %p416
      $region90: #{fwd.1} parent=87 // pred_check_branch
        %2961 = sbr.rel (%p2959) target = $region92
      $region91: #{fwd.1} parent=87 // pred_region
        %s2962 = smul.u32 2, %s34
        %p2963 = scmp.lt.s32.totalorder %s33, 1
        %s2964 = scalar_select %p2963, %s33, 1
        %p2965 = scmp.lt.s32.totalorder %s2962, 1
        %s2966 = scalar_select %p2965, %s2962, 1
        %s2967 = smul.addr %s2964, 2
        %s2968 = sadd.s32 %s2966, %s2967
        %s2969 = smul.addr %s2968, 8
        %s2970 = scalar_lea.vmem %s14, %s2969
      $region92: #{fwd.1} parent=87 // pred_fallthru
        _
      // Predicated region
      $region93: #{fwd.1} parent=87 // pred_check
        %p2971 = pneg %p444
      $region94: #{fwd.1} parent=87 // pred_check_branch
        %2973 = sbr.rel (%p2971) target = $region96
      $region95: #{fwd.1} parent=87 // pred_region
        %p2974 = scmp.lt.s32.totalorder %s33, 1
        %s2975 = scalar_select %p2974, %s33, 1
        %p2976 = scmp.lt.s32.totalorder %s34, 0
        %s2977 = scalar_select %p2976, %s34, 0
        %s2978 = sadd.s32 %s2977, %s2975
        %s2979 = smul.addr %s2978, 2
        %s2980 = scalar_lea.vmem %s15, %s2979
      $region96: #{fwd.1} parent=87 // pred_fallthru
        _
    $region88: #{fwd.1} parent=5 // pred_fallthru
      _
  $region6: #{fwd.1} parent=0 // loop_footer
    %s26 = sadd.s32 1, %s22
  $region7: #{fwd.1} parent=0 // loop_footer_branch
    %21 = sbr.rel target = $region3
  $region8: #{fwd.1} parent=0 // loop_exit
    _

</llo_original>
